<compile_context>
chip_gen: v7x
topology: tpu7x:2x2x1
jax: 0.10.0
libtpu: 0.0.40
codegen_flags: <defaults>
</compile_context>

<pallas_src>
import functools

import jax
import jax.numpy as jnp
from jax.experimental import pallas as pl
from jax.experimental.pallas import tpu as pltpu


_MIB = 1024 * 1024
# Keep the k-indexed second operand of the adjacency stages fully VMEM-resident as
# long as it (double-buffered) stays under this budget; otherwise stream per k-tile.
_RESIDENT_OPERAND_BUDGET = 8 * _MIB


def _round_up(x, m):
    return ((x + m - 1) // m) * m


def _pad2(a, rows, cols):
    r, c = a.shape
    if r == rows and c == cols:
        return a
    return jnp.pad(a, ((0, rows - r), (0, cols - c)))


@functools.cache
def _vmem_limit_bytes():
    # Generation-aware scoped-VMEM limit: ~3/4 of physical, capped at 96 MiB.
    #   v5e/v6e (128 MiB physical) -> 96 MiB;  v7x (64 MiB physical) -> 48 MiB.
    try:
        cap = pltpu.get_tpu_info().vmem_capacity_bytes
    except Exception:  # non-TPU tracing / interpret mode fallback
        cap = 128 * _MIB
    return int(min(96 * _MIB, (cap * 3) // 4))


def _pick_tile(n_p, desired, prefer_two_tiles=False):
    """Largest 128-multiple tile <= `desired` that evenly divides `n_p`.

    With prefer_two_tiles, also try to keep >=2 tiles along the axis so a
    'parallel' grid axis can be sharded across both v7x TensorCores.
    """
    assert desired % 128 == 0 and desired >= 128, "tile sizes must be multiples of 128"
    assert n_p % 128 == 0
    t = min(desired, n_p)
    while n_p % t != 0:
        t -= 128
    if prefer_two_tiles and n_p // t < 2 and n_p >= 256:
        half = max(128, ((n_p // 2) // 128) * 128)
        t = _pick_tile(n_p, half)
    return t


# ----------------------------------------------------------------------------
# Stage A: thin row-tiled matmul  out = a @ w   (K and Nout fully resident)
# ----------------------------------------------------------------------------
def _rowwise_matmul_kernel(a_ref, w_ref, o_ref):
    o_ref[...] = jnp.dot(
        a_ref[...], w_ref[...], preferred_element_type=jnp.float32
    ).astype(o_ref.dtype)


def _rowwise_matmul(a, w, bm):
    m, k = a.shape
    _, n_out = w.shape
    return pl.pallas_call(
        _rowwise_matmul_kernel,
        out_shape=jax.ShapeDtypeStruct((m, n_out), jnp.bfloat16),
        grid_spec=pltpu.PrefetchScalarGridSpec(
            num_scalar_prefetch=0,
            grid=(m // bm,),
            in_specs=[
                pl.BlockSpec((bm, k), lambda i: (i, 0)),
                pl.BlockSpec((k, n_out), lambda i: (0, 0)),
            ],
            out_specs=pl.BlockSpec((bm, n_out), lambda i: (i, 0)),
        ),
        compiler_params=pltpu.CompilerParams(
            dimension_semantics=("parallel",),
            vmem_limit_bytes=_vmem_limit_bytes(),
        ),
    )(a, w)


# ----------------------------------------------------------------------------
# Stage B1: h1 = relu(adj @ b), gridded over (row tiles, K tiles of adj).
# The second operand is either fully VMEM-resident (constant index_map, in-kernel
# pl.ds strip slicing) or streamed per k-tile — decided by the caller.
# ----------------------------------------------------------------------------
def _adj_matmul_relu_kernel(adj_ref, b_ref, o_ref, acc_ref):
    k = pl.program_id(1)
    bk = adj_ref.shape[1]

    @pl.when(k == 0)
    def _():
        acc_ref[...] = jnp.zeros_like(acc_ref)

    if b_ref.shape[0] == bk:  # streamed per k-tile (or single k-tile)
        b_tile = b_ref[...]
    else:                     # fully resident: slice the k-strip in VMEM
        b_tile = b_ref[pl.ds(pl.multiple_of(k * bk, bk), bk), :]

    acc_ref[...] += jnp.dot(adj_ref[...], b_tile, preferred_element_type=jnp.float32)

    @pl.when(k == pl.num_programs(1) - 1)
    def _():
        o_ref[...] = jnp.maximum(acc_ref[...], 0.0).astype(o_ref.dtype)


def _adj_matmul_relu(adj, b, bm, bk):
    n = adj.shape[0]
    h = b.shape[1]
    resident = n * h * 2 * 2 <= _RESIDENT_OPERAND_BUDGET  # bf16, x2 for buffering
    if resident:
        b_spec = pl.BlockSpec((n, h), lambda i, k: (0, 0))
    else:
        b_spec = pl.BlockSpec((bk, h), lambda i, k: (k, 0))
    return pl.pallas_call(
        _adj_matmul_relu_kernel,
        out_shape=jax.ShapeDtypeStruct((n, h), jnp.bfloat16),
        grid_spec=pltpu.PrefetchScalarGridSpec(
            num_scalar_prefetch=0,
            grid=(n // bm, n // bk),
            in_specs=[pl.BlockSpec((bm, bk), lambda i, k: (i, k)), b_spec],
            out_specs=pl.BlockSpec((bm, h), lambda i, k: (i, 0)),
            scratch_shapes=[pltpu.VMEM((bm, h), jnp.float32)],
        ),
        compiler_params=pltpu.CompilerParams(
            dimension_semantics=("parallel", "arbitrary"),
            vmem_limit_bytes=_vmem_limit_bytes(),
        ),
    )(adj, b)


# ----------------------------------------------------------------------------
# Stage B2: [mu || logvar] = adj @ hw23 (single fused 2*H2-wide contraction),
# then z = eps * exp(logvar) + mu.  Emits z in f32 (return value) and bf16
# (decoder input) in one pass.
# ----------------------------------------------------------------------------
def _z_kernel(adj_ref, hw_ref, eps_ref, z32_ref, zbf_ref, acc_ref):
    k = pl.program_id(1)
    bk = adj_ref.shape[1]
    h2p = eps_ref.shape[1]

    @pl.when(k == 0)
    def _():
        acc_ref[...] = jnp.zeros_like(acc_ref)

    if hw_ref.shape[0] == bk:
        hw_tile = hw_ref[...]
    else:
        hw_tile = hw_ref[pl.ds(pl.multiple_of(k * bk, bk), bk), :]

    acc_ref[...] += jnp.dot(adj_ref[...], hw_tile, preferred_element_type=jnp.float32)

    @pl.when(k == pl.num_programs(1) - 1)
    def _():
        acc = acc_ref[...]
        mu = acc[:, :h2p]
        logvar = acc[:, h2p:]
        # Reparameterize exactly as the module: std = exp(logvar); z = eps*std + mu.
        z = eps_ref[...] * jnp.exp(logvar) + mu
        z32_ref[...] = z
        zbf_ref[...] = z.astype(zbf_ref.dtype)


def _z_stage(adj, hw23, eps, bm, bk):
    n = adj.shape[0]
    h2x2 = hw23.shape[1]
    h2p = h2x2 // 2
    resident = n * h2x2 * 2 * 2 <= _RESIDENT_OPERAND_BUDGET
    if resident:
        hw_spec = pl.BlockSpec((n, h2x2), lambda i, k: (0, 0))
    else:
        hw_spec = pl.BlockSpec((bk, h2x2), lambda i, k: (k, 0))
    return pl.pallas_call(
        _z_kernel,
        out_shape=(
            jax.ShapeDtypeStruct((n, h2p), jnp.float32),
            jax.ShapeDtypeStruct((n, h2p), jnp.bfloat16),
        ),
        grid_spec=pltpu.PrefetchScalarGridSpec(
            num_scalar_prefetch=0,
            grid=(n // bm, n // bk),
            in_specs=[
                pl.BlockSpec((bm, bk), lambda i, k: (i, k)),
                hw_spec,
                pl.BlockSpec((bm, h2p), lambda i, k: (i, 0)),
            ],
            out_specs=(
                pl.BlockSpec((bm, h2p), lambda i, k: (i, 0)),
                pl.BlockSpec((bm, h2p), lambda i, k: (i, 0)),
            ),
            scratch_shapes=[pltpu.VMEM((bm, h2x2), jnp.float32)],
        ),
        compiler_params=pltpu.CompilerParams(
            dimension_semantics=("parallel", "arbitrary"),
            vmem_limit_bytes=_vmem_limit_bytes(),
        ),
    )(adj, hw23, eps)


# ----------------------------------------------------------------------------
# Stage C: decoder  recon[i, j] = z_i @ z_j^T  (identity activation: logits)
# ----------------------------------------------------------------------------
def _decoder_kernel(zi_ref, zj_ref, o_ref):
    o_ref[...] = jax.lax.dot_general(
        zi_ref[...],
        zj_ref[...],
        dimension_numbers=(((1,), (1,)), ((), ())),  # contract over H2, no transpose
        preferred_element_type=jnp.float32,
    ).astype(o_ref.dtype)


def _decoder(z_bf16, bm, bn, out_dtype):
    n, h = z_bf16.shape
    return pl.pallas_call(
        _decoder_kernel,
        out_shape=jax.ShapeDtypeStruct((n, n), out_dtype),
        grid_spec=pltpu.PrefetchScalarGridSpec(
            num_scalar_prefetch=0,
            grid=(n // bm, n // bn),  # inner-most axis walks columns (lane-dense stores)
            in_specs=[
                pl.BlockSpec((bm, h), lambda i, j: (i, 0)),
                pl.BlockSpec((bn, h), lambda i, j: (j, 0)),
            ],
            out_specs=pl.BlockSpec((bm, bn), lambda i, j: (i, j)),
        ),
        compiler_params=pltpu.CompilerParams(
            dimension_semantics=("parallel", "parallel"),
            vmem_limit_bytes=_vmem_limit_bytes(),
        ),
    )(z_bf16, z_bf16)


# ----------------------------------------------------------------------------
# Full forward
# ----------------------------------------------------------------------------
@functools.partial(jax.jit, static_argnames=("bm", "bk", "bn", "out_dtype"))
def gcn_vae_forward(x, adj, w1, w2, w3, eps, *, bm=512, bk=512, bn=1024,
                    out_dtype=jnp.bfloat16):
    """Forward pass of GCNModelVAE: returns (recon_logits (N,N), z (N,H2)).

    bm/bk/bn: row / adjacency-contraction / decoder-column tile sizes (multiples
    of 128).  They are automatically clamped to divide the padded node count,
    and the parallel row/column axes keep >=2 tiles where possible (v7x dual-TC).
    out_dtype: decoder logits dtype; bf16 halves the N^2 writeback (pass
    jnp.float32 to match the PyTorch module's output dtype exactly).
    """
    n, f = x.shape
    h1_dim = w1.shape[1]
    h2_dim = w2.shape[1]

    f_p = _round_up(f, 128)
    h1_p = _round_up(h1_dim, 128)
    h2_p = _round_up(h2_dim, 128)
    n_p = _round_up(n, 128)

    bm = _pick_tile(n_p, bm, prefer_two_tiles=True)
    bk = _pick_tile(n_p, bk)
    bn = _pick_tile(n_p, bn, prefer_two_tiles=True)
    assert n_p % bm == 0 and n_p % bk == 0 and n_p % bn == 0

    # bf16 operands (f32 accumulation inside the kernels); zero padding keeps math exact.
    # NOTE: the adj cast+pad is an extra N^2 pass; pre-prepare adj outside for repeated calls.
    x_b = _pad2(x.astype(jnp.bfloat16), n_p, f_p)
    adj_b = _pad2(adj.astype(jnp.bfloat16), n_p, n_p)
    w1_b = _pad2(w1.astype(jnp.bfloat16), f_p, h1_p)
    w23_b = jnp.concatenate(
        [_pad2(w2.astype(jnp.bfloat16), h1_p, h2_p),
         _pad2(w3.astype(jnp.bfloat16), h1_p, h2_p)],
        axis=1)                                            # (H1p, 2*H2p) fused weights
    eps_p = _pad2(eps.astype(jnp.float32), n_p, h2_p)      # zero pad -> padded z stays 0

    xw1 = _rowwise_matmul(x_b, w1_b, bm)                   # (Np, H1p)    bf16
    h1 = _adj_matmul_relu(adj_b, xw1, bm, bk)              # (Np, H1p)    bf16
    hw23 = _rowwise_matmul(h1, w23_b, bm)                  # (Np, 2*H2p)  bf16  [W2 || W3]
    z32, zbf = _z_stage(adj_b, hw23, eps_p, bm, bk)        # (Np, H2p)    f32 / bf16
    recon = _decoder(zbf, bm, bn, out_dtype)               # (Np, Np)

    return recon[:n, :n], z32[:n, :h2_dim]


# ----------------------------------------------------------------------------
# Pure-JAX reference emulating the same bf16-operand / f32-accumulate precision.
# ----------------------------------------------------------------------------
def gcn_vae_forward_ref(x, adj, w1, w2, w3, eps, out_dtype=jnp.bfloat16):
    bf, f32 = jnp.bfloat16, jnp.float32
    adj_b = adj.astype(bf)
    xw1 = jnp.dot(x.astype(bf), w1.astype(bf), preferred_element_type=f32).astype(bf)
    h1 = jnp.maximum(jnp.dot(adj_b, xw1, preferred_element_type=f32), 0.0).astype(bf)
    hw2 = jnp.dot(h1, w2.astype(bf), preferred_element_type=f32).astype(bf)
    hw3 = jnp.dot(h1, w3.astype(bf), preferred_element_type=f32).astype(bf)
    mu = jnp.dot(adj_b, hw2, preferred_element_type=f32)
    logvar = jnp.dot(adj_b, hw3, preferred_element_type=f32)
    z = eps.astype(f32) * jnp.exp(logvar) + mu
    z_b = z.astype(bf)
    recon = jax.lax.dot_general(
        z_b, z_b, dimension_numbers=(((1,), (1,)), ((), ())),
        preferred_element_type=f32).astype(out_dtype)
    return recon, z


def glorot_init(key, shape):
    fan_in, fan_out = shape
    std = (2.0 / (fan_in + fan_out)) ** 0.5
    return std * jax.random.normal(key, shape, dtype=jnp.float32)


if __name__ == "__main__":
    # Small synthetic graph (spans multiple tiles after padding to 256).
    N, F, H1, H2 = 200, 64, 32, 16

    key = jax.random.PRNGKey(0)
    k_x, k_adj, k_w1, k_w2, k_w3, k_eps = jax.random.split(key, 6)

    x = jax.random.normal(k_x, (N, F), dtype=jnp.float32)

    # Symmetric normalized adjacency with self-loops (typical GAE input).
    a = (jax.random.uniform(k_adj, (N, N)) > 0.9).astype(jnp.float32)
    a = jnp.maximum(a, a.T)
    a = a + jnp.eye(N, dtype=jnp.float32)
    deg = jnp.sum(a, axis=1)
    d_inv_sqrt = 1.0 / jnp.sqrt(deg)
    adj = a * d_inv_sqrt[:, None] * d_inv_sqrt[None, :]

    w1 = glorot_init(k_w1, (F, H1))
    w2 = glorot_init(k_w2, (H1, H2))
    w3 = glorot_init(k_w3, (H1, H2))

    # Reparameterization noise (torch.randn_like equivalent, deterministic here).
    eps = jax.random.normal(k_eps, (N, H2), dtype=jnp.float32)

    recon_ref, z_ref = gcn_vae_forward_ref(x, adj, w1, w2, w3, eps)
    recon_ref = recon_ref.astype(jnp.float32)

    # 1) Adaptive default tiles (clamped to the 256-padded graph).
    recon, z = gcn_vae_forward(x, adj, w1, w2, w3, eps)
    recon = jax.block_until_ready(recon)
    z = jax.block_until_ready(z)
    assert recon.shape == (N, N) and z.shape == (N, H2)
    assert jnp.allclose(recon.astype(jnp.float32), recon_ref, atol=2e-2, rtol=2e-2)
    assert jnp.allclose(z, z_ref, atol=1e-2, rtol=1e-2)

    # 2) Small explicit tiles: exercises the multi-k accumulation path of the
    #    adjacency stages and the multi-column decoder grid.
    recon2, z2 = gcn_vae_forward(x, adj, w1, w2, w3, eps, bm=128, bk=128, bn=128)
    recon2 = jax.block_until_ready(recon2)
    z2 = jax.block_until_ready(z2)
    assert jnp.allclose(recon2.astype(jnp.float32), recon_ref, atol=2e-2, rtol=2e-2)
    assert jnp.allclose(z2, z_ref, atol=1e-2, rtol=1e-2)

    print("KERNEL_OK")
</pallas_src>

<mosaic_0001>
module attributes {stable_mosaic.version = 11 : i64} {
  func.func @_rowwise_matmul_kernel(%arg0: i32, %arg1: memref<128x128xbf16, #tpu.memory_space<vmem>>, %arg2: memref<128x128xbf16, #tpu.memory_space<vmem>>, %arg3: memref<128x128xbf16, #tpu.memory_space<vmem>>) attributes {dimension_semantics = [#tpu.dimension_semantics<parallel>], iteration_bounds = array<i64: 2>, scalar_prefetch = 0 : i64, scratch_operands = 0 : i64, tpu.core_type = #tpu.core_type<tc>, window_params = [{transform_indices = @transform_0, window_bounds = array<i64: 128, 128>}, {pipeline_mode = #tpu.pipeline_mode<synchronous>, transform_indices = @transform_1, window_bounds = array<i64: 128, 128>}, {transform_indices = @transform_2, window_bounds = array<i64: 128, 128>}]} {
    %c0 = arith.constant 0 : index
    %c0_0 = arith.constant 0 : index
    %0 = vector.load %arg1[%c0, %c0_0] : memref<128x128xbf16, #tpu.memory_space<vmem>>, vector<128x128xbf16>
    %c0_1 = arith.constant 0 : index
    %c0_2 = arith.constant 0 : index
    %1 = vector.load %arg2[%c0_1, %c0_2] : memref<128x128xbf16, #tpu.memory_space<vmem>>, vector<128x128xbf16>
    %cst = arith.constant dense<0.000000e+00> : vector<128x128xf32>
    %2 = tpu.matmul %0, %1, %cst {dimension_numbers = #tpu.dot_dimension_numbers<[1], [0], [0], [1], [0, 0, 1, 1], [], []>} : vector<128x128xbf16>, vector<128x128xbf16>, vector<128x128xf32> -> vector<128x128xf32>
    %3 = arith.truncf %2 : vector<128x128xf32> to vector<128x128xbf16>
    %c0_3 = arith.constant 0 : index
    %c0_4 = arith.constant 0 : index
    %4 = vector.load %arg3[%c0_3, %c0_4] : memref<128x128xbf16, #tpu.memory_space<vmem>>, vector<128x128xbf16>
    tpu.vector_store %arg3[%c0_3, %c0_4], %3 {strides = array<i32>} : memref<128x128xbf16, #tpu.memory_space<vmem>>, vector<128x128xbf16>,
    return
  }
  func.func @transform_0(%arg0: i32) -> (i32, i32) {
    %c0_i32 = arith.constant 0 : i32
    %c0_i32_0 = arith.constant 0 : i32
    return %arg0, %c0_i32 : i32, i32
  }
  func.func @transform_1(%arg0: i32) -> (i32, i32) {
    %c0_i32 = arith.constant 0 : i32
    %c0_i32_0 = arith.constant 0 : i32
    %c0_i32_1 = arith.constant 0 : i32
    return %c0_i32, %c0_i32_0 : i32, i32
  }
  func.func @transform_2(%arg0: i32) -> (i32, i32) {
    %c0_i32 = arith.constant 0 : i32
    %c0_i32_0 = arith.constant 0 : i32
    return %arg0, %c0_i32 : i32, i32
  }
}

module attributes {stable_mosaic.version = 11 : i64} {
  func.func @_adj_matmul_relu_kernel(%arg0: i32, %arg1: i32, %arg2: memref<128x256xbf16, #tpu.memory_space<vmem>>, %arg3: memref<256x128xbf16, #tpu.memory_space<vmem>>, %arg4: memref<128x128xbf16, #tpu.memory_space<vmem>>, %arg5: memref<128x128xf32, #tpu.memory_space<vmem>>) attributes {dimension_semantics = [#tpu.dimension_semantics<parallel>, #tpu.dimension_semantics<arbitrary>], iteration_bounds = array<i64: 2, 1>, scalar_prefetch = 0 : i64, scratch_operands = 1 : i64, tpu.core_type = #tpu.core_type<tc>, window_params = [{transform_indices = @transform_0, window_bounds = array<i64: 128, 256>}, {pipeline_mode = #tpu.pipeline_mode<synchronous>, transform_indices = @transform_1, window_bounds = array<i64: 256, 128>}, {transform_indices = @transform_2, window_bounds = array<i64: 128, 128>}]} {
    %c0_i32 = arith.constant 0 : i32
    %0 = arith.cmpi eq, %arg1, %c0_i32 : i32
    %1 = arith.extui %0 : i1 to i32
    %c0_i32_0 = arith.constant 0 : i32
    %2 = arith.cmpi ne, %1, %c0_i32_0 : i32
    scf.if %2 {
      %cst_10 = arith.constant 0.000000e+00 : f32
      %12 = vector.broadcast %cst_10 : f32 to vector<128x128xf32>
      %c0_11 = arith.constant 0 : index
      %c0_12 = arith.constant 0 : index
      %13 = vector.load %arg5[%c0_11, %c0_12] : memref<128x128xf32, #tpu.memory_space<vmem>>, vector<128x128xf32>
      tpu.vector_store %arg5[%c0_11, %c0_12], %12 {strides = array<i32>} : memref<128x128xf32, #tpu.memory_space<vmem>>, vector<128x128xf32>,
    } else {
    }
    %c0 = arith.constant 0 : index
    %c0_1 = arith.constant 0 : index
    %3 = vector.load %arg3[%c0, %c0_1] : memref<256x128xbf16, #tpu.memory_space<vmem>>, vector<256x128xbf16>
    %c0_2 = arith.constant 0 : index
    %c0_3 = arith.constant 0 : index
    %4 = vector.load %arg5[%c0_2, %c0_3] : memref<128x128xf32, #tpu.memory_space<vmem>>, vector<128x128xf32>
    %c0_4 = arith.constant 0 : index
    %c0_5 = arith.constant 0 : index
    %5 = vector.load %arg2[%c0_4, %c0_5] : memref<128x256xbf16, #tpu.memory_space<vmem>>, vector<128x256xbf16>
    %cst = arith.constant dense<0.000000e+00> : vector<128x128xf32>
    %6 = tpu.matmul %5, %3, %cst {dimension_numbers = #tpu.dot_dimension_numbers<[1], [0], [0], [1], [0, 0, 1, 1], [], []>} : vector<128x256xbf16>, vector<256x128xbf16>, vector<128x128xf32> -> vector<128x128xf32>
    %7 = arith.addf %4, %6 : vector<128x128xf32>
    %c0_6 = arith.constant 0 : index
    %c0_7 = arith.constant 0 : index
    %8 = vector.load %arg5[%c0_6, %c0_7] : memref<128x128xf32, #tpu.memory_space<vmem>>, vector<128x128xf32>
    tpu.vector_store %arg5[%c0_6, %c0_7], %7 {strides = array<i32>} : memref<128x128xf32, #tpu.memory_space<vmem>>, vector<128x128xf32>,
    %c0_i32_8 = arith.constant 0 : i32
    %9 = arith.cmpi eq, %arg1, %c0_i32_8 : i32
    %10 = arith.extui %9 : i1 to i32
    %c0_i32_9 = arith.constant 0 : i32
    %11 = arith.cmpi ne, %10, %c0_i32_9 : i32
    scf.if %11 {
      %c0_10 = arith.constant 0 : index
      %c0_11 = arith.constant 0 : index
      %12 = vector.load %arg5[%c0_10, %c0_11] : memref<128x128xf32, #tpu.memory_space<vmem>>, vector<128x128xf32>
      %cst_12 = arith.constant 0.000000e+00 : f32
      %13 = vector.broadcast %cst_12 : f32 to vector<128x128xf32>
      %14 = arith.maximumf %12, %13 : vector<128x128xf32>
      %15 = arith.truncf %14 : vector<128x128xf32> to vector<128x128xbf16>
      %c0_13 = arith.constant 0 : index
      %c0_14 = arith.constant 0 : index
      %16 = vector.load %arg4[%c0_13, %c0_14] : memref<128x128xbf16, #tpu.memory_space<vmem>>, vector<128x128xbf16>
      tpu.vector_store %arg4[%c0_13, %c0_14], %15 {strides = array<i32>} : memref<128x128xbf16, #tpu.memory_space<vmem>>, vector<128x128xbf16>,
    } else {
    }
    return
  }
  func.func @transform_0(%arg0: i32, %arg1: i32) -> (i32, i32) {
    %c0_i32 = arith.constant 0 : i32
    return %arg0, %arg1 : i32, i32
  }
  func.func @transform_1(%arg0: i32, %arg1: i32) -> (i32, i32) {
    %c0_i32 = arith.constant 0 : i32
    %c0_i32_0 = arith.constant 0 : i32
    %c0_i32_1 = arith.constant 0 : i32
    return %c0_i32, %c0_i32_0 : i32, i32
  }
  func.func @transform_2(%arg0: i32, %arg1: i32) -> (i32, i32) {
    %c0_i32 = arith.constant 0 : i32
    %c0_i32_0 = arith.constant 0 : i32
    return %arg0, %c0_i32 : i32, i32
  }
}

module attributes {stable_mosaic.version = 11 : i64} {
  func.func @_rowwise_matmul_kernel(%arg0: i32, %arg1: memref<128x128xbf16, #tpu.memory_space<vmem>>, %arg2: memref<128x256xbf16, #tpu.memory_space<vmem>>, %arg3: memref<128x256xbf16, #tpu.memory_space<vmem>>) attributes {dimension_semantics = [#tpu.dimension_semantics<parallel>], iteration_bounds = array<i64: 2>, scalar_prefetch = 0 : i64, scratch_operands = 0 : i64, tpu.core_type = #tpu.core_type<tc>, window_params = [{transform_indices = @transform_0, window_bounds = array<i64: 128, 128>}, {pipeline_mode = #tpu.pipeline_mode<synchronous>, transform_indices = @transform_1, window_bounds = array<i64: 128, 256>}, {transform_indices = @transform_2, window_bounds = array<i64: 128, 256>}]} {
    %c0 = arith.constant 0 : index
    %c0_0 = arith.constant 0 : index
    %0 = vector.load %arg1[%c0, %c0_0] : memref<128x128xbf16, #tpu.memory_space<vmem>>, vector<128x128xbf16>
    %c0_1 = arith.constant 0 : index
    %c0_2 = arith.constant 0 : index
    %1 = vector.load %arg2[%c0_1, %c0_2] : memref<128x256xbf16, #tpu.memory_space<vmem>>, vector<128x256xbf16>
    %cst = arith.constant dense<0.000000e+00> : vector<128x256xf32>
    %2 = tpu.matmul %0, %1, %cst {dimension_numbers = #tpu.dot_dimension_numbers<[1], [0], [0], [1], [0, 0, 1, 1], [], []>} : vector<128x128xbf16>, vector<128x256xbf16>, vector<128x256xf32> -> vector<128x256xf32>
    %3 = arith.truncf %2 : vector<128x256xf32> to vector<128x256xbf16>
    %c0_3 = arith.constant 0 : index
    %c0_4 = arith.constant 0 : index
    %4 = vector.load %arg3[%c0_3, %c0_4] : memref<128x256xbf16, #tpu.memory_space<vmem>>, vector<128x256xbf16>
    tpu.vector_store %arg3[%c0_3, %c0_4], %3 {strides = array<i32>} : memref<128x256xbf16, #tpu.memory_space<vmem>>, vector<128x256xbf16>,
    return
  }
  func.func @transform_0(%arg0: i32) -> (i32, i32) {
    %c0_i32 = arith.constant 0 : i32
    %c0_i32_0 = arith.constant 0 : i32
    return %arg0, %c0_i32 : i32, i32
  }
  func.func @transform_1(%arg0: i32) -> (i32, i32) {
    %c0_i32 = arith.constant 0 : i32
    %c0_i32_0 = arith.constant 0 : i32
    %c0_i32_1 = arith.constant 0 : i32
    return %c0_i32, %c0_i32_0 : i32, i32
  }
  func.func @transform_2(%arg0: i32) -> (i32, i32) {
    %c0_i32 = arith.constant 0 : i32
    %c0_i32_0 = arith.constant 0 : i32
    return %arg0, %c0_i32 : i32, i32
  }
}

module attributes {stable_mosaic.version = 11 : i64} {
  func.func @_z_kernel(%arg0: i32, %arg1: i32, %arg2: memref<128x256xbf16, #tpu.memory_space<vmem>>, %arg3: memref<256x256xbf16, #tpu.memory_space<vmem>>, %arg4: memref<128x128xf32, #tpu.memory_space<vmem>>, %arg5: memref<128x128xf32, #tpu.memory_space<vmem>>, %arg6: memref<128x128xbf16, #tpu.memory_space<vmem>>, %arg7: memref<128x256xf32, #tpu.memory_space<vmem>>) attributes {dimension_semantics = [#tpu.dimension_semantics<parallel>, #tpu.dimension_semantics<arbitrary>], iteration_bounds = array<i64: 2, 1>, scalar_prefetch = 0 : i64, scratch_operands = 1 : i64, tpu.core_type = #tpu.core_type<tc>, window_params = [{transform_indices = @transform_0, window_bounds = array<i64: 128, 256>}, {pipeline_mode = #tpu.pipeline_mode<synchronous>, transform_indices = @transform_1, window_bounds = array<i64: 256, 256>}, {transform_indices = @transform_2, window_bounds = array<i64: 128, 128>}, {transform_indices = @transform_3, window_bounds = array<i64: 128, 128>}, {transform_indices = @transform_4, window_bounds = array<i64: 128, 128>}]} {
    %c0_i32 = arith.constant 0 : i32
    %0 = arith.cmpi eq, %arg1, %c0_i32 : i32
    %1 = arith.extui %0 : i1 to i32
    %c0_i32_0 = arith.constant 0 : i32
    %2 = arith.cmpi ne, %1, %c0_i32_0 : i32
    scf.if %2 {
      %cst_10 = arith.constant 0.000000e+00 : f32
      %12 = vector.broadcast %cst_10 : f32 to vector<128x256xf32>
      %c0_11 = arith.constant 0 : index
      %c0_12 = arith.constant 0 : index
      %13 = vector.load %arg7[%c0_11, %c0_12] : memref<128x256xf32, #tpu.memory_space<vmem>>, vector<128x256xf32>
      tpu.vector_store %arg7[%c0_11, %c0_12], %12 {strides = array<i32>} : memref<128x256xf32, #tpu.memory_space<vmem>>, vector<128x256xf32>,
    } else {
    }
    %c0 = arith.constant 0 : index
    %c0_1 = arith.constant 0 : index
    %3 = vector.load %arg3[%c0, %c0_1] : memref<256x256xbf16, #tpu.memory_space<vmem>>, vector<256x256xbf16>
    %c0_2 = arith.constant 0 : index
    %c0_3 = arith.constant 0 : index
    %4 = vector.load %arg7[%c0_2, %c0_3] : memref<128x256xf32, #tpu.memory_space<vmem>>, vector<128x256xf32>
    %c0_4 = arith.constant 0 : index
    %c0_5 = arith.constant 0 : index
    %5 = vector.load %arg2[%c0_4, %c0_5] : memref<128x256xbf16, #tpu.memory_space<vmem>>, vector<128x256xbf16>
    %cst = arith.constant dense<0.000000e+00> : vector<128x256xf32>
    %6 = tpu.matmul %5, %3, %cst {dimension_numbers = #tpu.dot_dimension_numbers<[1], [0], [0], [1], [0, 0, 1, 1], [], []>} : vector<128x256xbf16>, vector<256x256xbf16>, vector<128x256xf32> -> vector<128x256xf32>
    %7 = arith.addf %4, %6 : vector<128x256xf32>
    %c0_6 = arith.constant 0 : index
    %c0_7 = arith.constant 0 : index
    %8 = vector.load %arg7[%c0_6, %c0_7] : memref<128x256xf32, #tpu.memory_space<vmem>>, vector<128x256xf32>
    tpu.vector_store %arg7[%c0_6, %c0_7], %7 {strides = array<i32>} : memref<128x256xf32, #tpu.memory_space<vmem>>, vector<128x256xf32>,
    %c0_i32_8 = arith.constant 0 : i32
    %9 = arith.cmpi eq, %arg1, %c0_i32_8 : i32
    %10 = arith.extui %9 : i1 to i32
    %c0_i32_9 = arith.constant 0 : i32
    %11 = arith.cmpi ne, %10, %c0_i32_9 : i32
    scf.if %11 {
      %c0_10 = arith.constant 0 : index
      %c0_11 = arith.constant 0 : index
      %12 = vector.load %arg7[%c0_10, %c0_11] : memref<128x256xf32, #tpu.memory_space<vmem>>, vector<128x256xf32>
      %13 = vector.extract_strided_slice %12 {offsets = [0, 0], sizes = [128, 128], strides = [1, 1]} : vector<128x256xf32> to vector<128x128xf32>
      %14 = vector.extract_strided_slice %12 {offsets = [0, 128], sizes = [128, 128], strides = [1, 1]} : vector<128x256xf32> to vector<128x128xf32>
      %c0_12 = arith.constant 0 : index
      %c0_13 = arith.constant 0 : index
      %15 = vector.load %arg4[%c0_12, %c0_13] : memref<128x128xf32, #tpu.memory_space<vmem>>, vector<128x128xf32>
      %16 = math.exp %14 : vector<128x128xf32>
      %17 = arith.mulf %15, %16 : vector<128x128xf32>
      %18 = arith.addf %17, %13 : vector<128x128xf32>
      %c0_14 = arith.constant 0 : index
      %c0_15 = arith.constant 0 : index
      %19 = vector.load %arg5[%c0_14, %c0_15] : memref<128x128xf32, #tpu.memory_space<vmem>>, vector<128x128xf32>
      tpu.vector_store %arg5[%c0_14, %c0_15], %18 {strides = array<i32>} : memref<128x128xf32, #tpu.memory_space<vmem>>, vector<128x128xf32>,
      %20 = arith.truncf %18 : vector<128x128xf32> to vector<128x128xbf16>
      %c0_16 = arith.constant 0 : index
      %c0_17 = arith.constant 0 : index
      %21 = vector.load %arg6[%c0_16, %c0_17] : memref<128x128xbf16, #tpu.memory_space<vmem>>, vector<128x128xbf16>
      tpu.vector_store %arg6[%c0_16, %c0_17], %20 {strides = array<i32>} : memref<128x128xbf16, #tpu.memory_space<vmem>>, vector<128x128xbf16>,
    } else {
    }
    return
  }
  func.func @transform_0(%arg0: i32, %arg1: i32) -> (i32, i32) {
    %c0_i32 = arith.constant 0 : i32
    return %arg0, %arg1 : i32, i32
  }
  func.func @transform_1(%arg0: i32, %arg1: i32) -> (i32, i32) {
    %c0_i32 = arith.constant 0 : i32
    %c0_i32_0 = arith.constant 0 : i32
    %c0_i32_1 = arith.constant 0 : i32
    return %c0_i32, %c0_i32_0 : i32, i32
  }
  func.func @transform_2(%arg0: i32, %arg1: i32) -> (i32, i32) {
    %c0_i32 = arith.constant 0 : i32
    %c0_i32_0 = arith.constant 0 : i32
    return %arg0, %c0_i32 : i32, i32
  }
  func.func @transform_3(%arg0: i32, %arg1: i32) -> (i32, i32) {
    %c0_i32 = arith.constant 0 : i32
    %c0_i32_0 = arith.constant 0 : i32
    return %arg0, %c0_i32 : i32, i32
  }
  func.func @transform_4(%arg0: i32, %arg1: i32) -> (i32, i32) {
    %c0_i32 = arith.constant 0 : i32
    %c0_i32_0 = arith.constant 0 : i32
    return %arg0, %c0_i32 : i32, i32
  }
}

module attributes {stable_mosaic.version = 11 : i64} {
  func.func @_decoder_kernel(%arg0: i32, %arg1: i32, %arg2: memref<128x128xbf16, #tpu.memory_space<vmem>>, %arg3: memref<128x128xbf16, #tpu.memory_space<vmem>>, %arg4: memref<128x128xbf16, #tpu.memory_space<vmem>>) attributes {dimension_semantics = [#tpu.dimension_semantics<parallel>, #tpu.dimension_semantics<parallel>], iteration_bounds = array<i64: 2, 2>, scalar_prefetch = 0 : i64, scratch_operands = 0 : i64, tpu.core_type = #tpu.core_type<tc>, window_params = [{transform_indices = @transform_0, window_bounds = array<i64: 128, 128>}, {transform_indices = @transform_1, window_bounds = array<i64: 128, 128>}, {transform_indices = @transform_2, window_bounds = array<i64: 128, 128>}]} {
    %c0 = arith.constant 0 : index
    %c0_0 = arith.constant 0 : index
    %0 = vector.load %arg2[%c0, %c0_0] : memref<128x128xbf16, #tpu.memory_space<vmem>>, vector<128x128xbf16>
    %c0_1 = arith.constant 0 : index
    %c0_2 = arith.constant 0 : index
    %1 = vector.load %arg3[%c0_1, %c0_2] : memref<128x128xbf16, #tpu.memory_space<vmem>>, vector<128x128xbf16>
    %cst = arith.constant dense<0.000000e+00> : vector<128x128xf32>
    %2 = tpu.matmul %0, %1, %cst {dimension_numbers = #tpu.dot_dimension_numbers<[1], [1], [0], [0], [0, 0, 1, 0], [], []>} : vector<128x128xbf16>, vector<128x128xbf16>, vector<128x128xf32> -> vector<128x128xf32>
    %3 = arith.truncf %2 : vector<128x128xf32> to vector<128x128xbf16>
    %c0_3 = arith.constant 0 : index
    %c0_4 = arith.constant 0 : index
    %4 = vector.load %arg4[%c0_3, %c0_4] : memref<128x128xbf16, #tpu.memory_space<vmem>>, vector<128x128xbf16>
    tpu.vector_store %arg4[%c0_3, %c0_4], %3 {strides = array<i32>} : memref<128x128xbf16, #tpu.memory_space<vmem>>, vector<128x128xbf16>,
    return
  }
  func.func @transform_0(%arg0: i32, %arg1: i32) -> (i32, i32) {
    %c0_i32 = arith.constant 0 : i32
    %c0_i32_0 = arith.constant 0 : i32
    return %arg0, %c0_i32 : i32, i32
  }
  func.func @transform_1(%arg0: i32, %arg1: i32) -> (i32, i32) {
    %c0_i32 = arith.constant 0 : i32
    %c0_i32_0 = arith.constant 0 : i32
    return %arg1, %c0_i32 : i32, i32
  }
  func.func @transform_2(%arg0: i32, %arg1: i32) -> (i32, i32) {
    %c0_i32 = arith.constant 0 : i32
    return %arg0, %arg1 : i32, i32
  }
}

</mosaic_0001>

<llo_original>
// kernel: gcn_vae_forward.5
$region0: #{gcn_vae_forward.5}
  #allocation0 [shape = 'u32[]', space=smem, size = 0x4, offset = 0x4, fixed_abs, tag = 'smem constant byte address 0x4 - core index']
  #allocation1 [shape = 'u32[144,128]{1,0:T(1,128)}', space=vmem, size = 0x12000, scoped, tag = 'internal scratch']
  %s0 = inlined_call_operand.hbm [shape: bf16[256,128], index: 0, kind: input, shape index: {}]
  %s1 = inlined_call_operand.hbm [shape: bf16[128,128], index: 1, kind: input, shape index: {}]
  %s2 = inlined_call_operand.hbm [shape: bf16[256,128], index: 2, kind: output, shape index: {}]
  %s3 = sld [smem:[#allocation0]]
  $region49: #{gcn_vae_forward.5} parent=0
    _
  %s5 = ssub.s32 1, %s3
  %s6 = scalar_select 0, %s5, %s3
  $region1: #{gcn_vae_forward.5} parent=0
    #allocation2 [shape = 'u8[65536]{0}', space=vmem, size = 0x10000, scoped, tag = 'input window, operand 0']
    #allocation3 [shape = 's32[2]{0}', space=sflag, size = 0x8, scoped, tag = 'scoped memory for gcn_vae_forward.5']
    #allocation4 [shape = 's32[2]{0}', space=sflag, size = 0x8, scoped, tag = 'scoped memory for gcn_vae_forward.5']
    #allocation5 [shape = 'u8[32768]{0}', space=vmem, size = 0x8000, scoped, tag = 'input window, operand 1, single buffered']
    #allocation6 [shape = 's32[1]{0}', space=sflag, size = 0x4, scoped, tag = 'scoped memory for gcn_vae_forward.5']
    #allocation7 [shape = 'u8[65536]{0}', space=vmem, size = 0x10000, scoped, tag = 'output window, operand 0']
    %7 = vsyncpa [#allocation3], 0
    %s8 = scalar_lea.sflag [#allocation3], 1
    %9 = vsyncpa %s8, 0
    %10 = vsyncpa [#allocation6], 0
    %11 = vsyncpa [#allocation4], 0
    %s12 = scalar_lea.sflag [#allocation4], 1
    %13 = vsyncpa %s12, 0
    loop: start=0, step=1, limit=4
    $region2: #{gcn_vae_forward.5} parent=1 // loop_pre_header
      _
    $region3: #{gcn_vae_forward.5} parent=1 // loop_header
      %s15 = sphi 0, %s19
      %p16 = scmp.ge.s32.totalorder %s15, 4
      %s25 = sphi 0, %s27
      %s28 = sphi 0, %s25
      %s29 = sphi 0, %s28
      %s45 = sphi 0, %s29
      %s49 = sphi 0, %s49
      %s51 = sphi 0, %s49
      %s52 = sphi 0, %s51
      %s66 = sphi 0, %s52
      %s72 = sphi 0, %s74
      %s75 = sphi 0, %s72
      %s76 = sphi 0, %s75
      %s92 = sphi 0, %s76
    $region4: #{gcn_vae_forward.5} parent=1 // loop_header_branch
      %18 = sbr.rel (%p16) target = $region8
    $region5: #{gcn_vae_forward.5} parent=1 // loop_body
      %s20 = ssub.s32 %s15, 1
      %s21 = ssub.s32 %s15, 2
      %s22 = sadd.s32 %s15, 1
      %s23 = ssub.s32 %s15, %s22
      %p24 = scmp.eq.s32.totalorder %s23, 0
      %s26 = sadd.s32 %s25, 1
      %s27 = scalar_select %p24, %s25, %s26
      %p30 = pneg %p24
      %p31 = scmp.eq.s32.totalorder %s15, 1
      %p32 = por %p30, %p31
      %p33 = scmp.ne.s32.totalorder %s25, %s28
      %p34 = scmp.eq.s32.totalorder %s15, 0
      %p35 = por %p33, %p34
      %p36 = scmp.ne.s32.totalorder %s25, %s28
      %p37 = scmp.eq.s32.totalorder %s20, 1
      %p38 = por %p36, %p37
      %p39 = scmp.ne.s32.totalorder %s28, %s29
      %p40 = scmp.eq.s32.totalorder %s20, 0
      %p41 = por %p39, %p40
      %p42 = scmp.ne.s32.totalorder %s28, %s29
      %p43 = scmp.eq.s32.totalorder %s21, 1
      %p44 = por %p42, %p43
      %p46 = scmp.ne.s32.totalorder %s29, %s45
      %p47 = scmp.eq.s32.totalorder %s21, 0
      %p48 = por %p46, %p47
      %s50 = sadd.s32 %s49, 1
      %p53 = scmp.eq.s32.totalorder %s15, 1
      %p54 = scmp.ne.s32.totalorder %s49, %s51
      %p55 = scmp.eq.s32.totalorder %s15, 0
      %p56 = por %p54, %p55
      %p57 = scmp.ne.s32.totalorder %s49, %s51
      %p58 = scmp.eq.s32.totalorder %s20, 1
      %p59 = por %p57, %p58
      %p60 = scmp.ne.s32.totalorder %s51, %s52
      %p61 = scmp.eq.s32.totalorder %s20, 0
      %p62 = por %p60, %p61
      %p63 = scmp.ne.s32.totalorder %s51, %s52
      %p64 = scmp.eq.s32.totalorder %s21, 1
      %p65 = por %p63, %p64
      %p67 = scmp.ne.s32.totalorder %s52, %s66
      %p68 = scmp.eq.s32.totalorder %s21, 0
      %p69 = por %p67, %p68
      %s70 = ssub.s32 %s15, %s22
      %p71 = scmp.eq.s32.totalorder %s70, 0
      %s73 = sadd.s32 %s72, 1
      %s74 = scalar_select %p71, %s72, %s73
      %p77 = pneg %p71
      %p78 = scmp.eq.s32.totalorder %s15, 1
      %p79 = por %p77, %p78
      %p80 = scmp.ne.s32.totalorder %s72, %s75
      %p81 = scmp.eq.s32.totalorder %s15, 0
      %p82 = por %p80, %p81
      %p83 = scmp.ne.s32.totalorder %s72, %s75
      %p84 = scmp.eq.s32.totalorder %s20, 1
      %p85 = por %p83, %p84
      %p86 = scmp.ne.s32.totalorder %s75, %s76
      %p87 = scmp.eq.s32.totalorder %s20, 0
      %p88 = por %p86, %p87
      %p89 = scmp.ne.s32.totalorder %s75, %s76
      %p90 = scmp.eq.s32.totalorder %s21, 1
      %p91 = por %p89, %p90
      %p93 = scmp.ne.s32.totalorder %s76, %s92
      %p94 = scmp.eq.s32.totalorder %s21, 0
      %p95 = por %p93, %p94
      %p96 = scmp.le.s32.totalorder 1, %s15
      %p97 = scmp.lt.s32.totalorder %s15, 3
      %p98 = pnand %p96, %p97
      %p99 = pneg %p98
      // Predicated region
      $region9: #{gcn_vae_forward.5} parent=5 // pred_check
        _
      $region10: #{gcn_vae_forward.5} parent=5 // pred_check_branch
        %101 = sbr.rel (%p98) target = $region12
      $region11: #{gcn_vae_forward.5} parent=5 // pred_region
        %s102 = ssub.s32 %s15, 1
        // Predicated region
        $region13: #{gcn_vae_forward.5} parent=11 // pred_check
          %p103 = pneg %p62
        $region14: #{gcn_vae_forward.5} parent=11 // pred_check_branch
          %105 = sbr.rel (%p103) target = $region16
        $region15: #{gcn_vae_forward.5} parent=11 // pred_region
          %s107 = ssub.s32 1024, 1024
          %108 = vsyncadd [#allocation6], %s107
          %s109 = sshll.u32 [#allocation5], 4
          %s110 = int_to_ptr.vmem [resolvable:$true] %s109
          %115 = dma.hbm_to_vmem [thread:$0]  %s1, 1024, %s110, [#allocation6], 64, 64, 4
        $region16: #{gcn_vae_forward.5} parent=11 // pred_fallthru
          _
      $region12: #{gcn_vae_forward.5} parent=5 // pred_fallthru
        _
      %p116 = scmp.lt.s32.totalorder %s15, 2
      // Predicated region
      $region17: #{gcn_vae_forward.5} parent=5 // pred_check
        %p117 = pneg %p116
      $region18: #{gcn_vae_forward.5} parent=5 // pred_check_branch
        %119 = sbr.rel (%p117) target = $region20
      $region19: #{gcn_vae_forward.5} parent=5 // pred_region
        // Predicated region
        $region21: #{gcn_vae_forward.5} parent=19 // pred_check
          %p120 = pneg %p35
        $region22: #{gcn_vae_forward.5} parent=19 // pred_check_branch
          %122 = sbr.rel (%p120) target = $region24
        $region23: #{gcn_vae_forward.5} parent=19 // pred_region
          %s123 = sand.u32 %s25, 1
          %s124 = scalar_lea.sflag [#allocation3], %s123
          %s125 = sand.u32 %s25, 1
          %s126 = smul.addr %s125, 64
          %s127 = scalar_lea.vmem [#allocation2], %s126
          %s128 = smul.u32 16, %s15
          %s130 = ssub.s32 1024, 1024
          %131 = vsyncadd %s124, %s130
          %s132 = smul.addr %s128, 64
          %s133 = scalar_lea.hbm %s0, %s132
          %s134 = sshll.u32 %s127, 4
          %s135 = int_to_ptr.vmem [resolvable:$true] %s134
          %140 = dma.hbm_to_vmem [thread:$0]  %s133, 1024, %s135, %s124, 64, 64, 4
        $region24: #{gcn_vae_forward.5} parent=19 // pred_fallthru
          _
      $region20: #{gcn_vae_forward.5} parent=5 // pred_fallthru
        _
      %p141 = scmp.le.s32.totalorder 1, %s15
      %p142 = scmp.lt.s32.totalorder %s15, 3
      %p143 = pnand %p141, %p142
      %p144 = pneg %p143
      // Predicated region
      $region25: #{gcn_vae_forward.5} parent=5 // pred_check
        _
      $region26: #{gcn_vae_forward.5} parent=5 // pred_check_branch
        %146 = sbr.rel (%p143) target = $region28
      $region27: #{gcn_vae_forward.5} parent=5 // pred_region
        %s147 = ssub.s32 %s15, 1
        %s148 = sand.u32 %s28, 1
        %s149 = scalar_lea.sflag [#allocation3], %s148
        %s150 = sand.u32 %s28, 1
        %s151 = smul.addr %s150, 64
        %s152 = scalar_lea.vmem [#allocation2], %s151
        // Predicated region
        $region29: #{gcn_vae_forward.5} parent=27 // pred_check
          %p153 = pneg %p41
        $region30: #{gcn_vae_forward.5} parent=27 // pred_check_branch
          %155 = sbr.rel (%p153) target = $region32
        $region31: #{gcn_vae_forward.5} parent=27 // pred_region
          %156 = dma.done %s149, 1024
        $region32: #{gcn_vae_forward.5} parent=27 // pred_fallthru
          _
        // Predicated region
        $region33: #{gcn_vae_forward.5} parent=27 // pred_check
          %p157 = pneg %p62
        $region34: #{gcn_vae_forward.5} parent=27 // pred_check_branch
          %159 = sbr.rel (%p157) target = $region36
        $region35: #{gcn_vae_forward.5} parent=27 // pred_region
          %160 = dma.done [#allocation6], 1024
        $region36: #{gcn_vae_forward.5} parent=27 // pred_fallthru
          _
        %s161 = sand.u32 %s28, 1
        %s162 = scalar_lea.sflag [#allocation3], %s161
        %s163 = sand.u32 %s28, 1
        %s164 = smul.addr %s163, 64
        %s165 = scalar_lea.vmem [#allocation2], %s164
        %p166 = pneg %p41
        %p167 = pneg %p38
        %p168 = pneg %p62
        %p169 = pneg %p59
        %p170 = pneg %p88
        %p171 = pneg %p85
        %s172 = sand.u32 %s75, 1
        %s173 = scalar_lea.sflag [#allocation4], %s172
        %s174 = sand.u32 %s75, 1
        %s175 = smul.addr %s174, 64
        %s176 = scalar_lea.vmem [#allocation7], %s175
        %s177 = smul.u32 16, %s20
        %s178 = smul.u32 16, %s20
        %v180 = vld [vmem:[%s152] sm:$0xf]
        %v181 = vld [vmem:[%s152 + $0x4] sm:$0xf]
        %v182 = vld [vmem:[%s152 + $0x8] sm:$0xf]
        %v183 = vld [vmem:[%s152 + $0xc] sm:$0xf]
        %v184 = vld [vmem:[%s152 + $0x10] sm:$0xf]
        %v185 = vld [vmem:[%s152 + $0x14] sm:$0xf]
        %v186 = vld [vmem:[%s152 + $0x18] sm:$0xf]
        %v187 = vld [vmem:[%s152 + $0x1c] sm:$0xf]
        %v188 = vld [vmem:[%s152 + $0x20] sm:$0xf]
        %v189 = vld [vmem:[%s152 + $0x24] sm:$0xf]
        %v190 = vld [vmem:[%s152 + $0x28] sm:$0xf]
        %v191 = vld [vmem:[%s152 + $0x2c] sm:$0xf]
        %v192 = vld [vmem:[%s152 + $0x30] sm:$0xf]
        %v193 = vld [vmem:[%s152 + $0x34] sm:$0xf]
        %v194 = vld [vmem:[%s152 + $0x38] sm:$0xf]
        %v195 = vld [vmem:[%s152 + $0x3c] sm:$0xf]
        %v196 = vld [vmem:[#allocation5] sm:$0xf]
        %v197 = vld [vmem:[#allocation5 + $0x4] sm:$0xf]
        %v198 = vld [vmem:[#allocation5 + $0x8] sm:$0xf]
        %v199 = vld [vmem:[#allocation5 + $0xc] sm:$0xf]
        %v200 = vld [vmem:[#allocation5 + $0x10] sm:$0xf]
        %v201 = vld [vmem:[#allocation5 + $0x14] sm:$0xf]
        %v202 = vld [vmem:[#allocation5 + $0x18] sm:$0xf]
        %v203 = vld [vmem:[#allocation5 + $0x1c] sm:$0xf]
        %v204 = vld [vmem:[#allocation5 + $0x20] sm:$0xf]
        %v205 = vld [vmem:[#allocation5 + $0x24] sm:$0xf]
        %v206 = vld [vmem:[#allocation5 + $0x28] sm:$0xf]
        %v207 = vld [vmem:[#allocation5 + $0x2c] sm:$0xf]
        %v208 = vld [vmem:[#allocation5 + $0x30] sm:$0xf]
        %v209 = vld [vmem:[#allocation5 + $0x34] sm:$0xf]
        %v210 = vld [vmem:[#allocation5 + $0x38] sm:$0xf]
        %v211 = vld [vmem:[#allocation5 + $0x3c] sm:$0xf]
        %v228 = vunpack.c.l.b16 %v180
        %v229 = vunpack.c.l.b16 %v181
        %v230 = vunpack.c.l.b16 %v182
        %v231 = vunpack.c.l.b16 %v183
        %v232 = vunpack.c.l.b16 %v184
        %v233 = vunpack.c.l.b16 %v185
        %v234 = vunpack.c.l.b16 %v186
        %v235 = vunpack.c.l.b16 %v187
        %v236 = vunpack.c.l.b16 %v188
        %v237 = vunpack.c.l.b16 %v189
        %v238 = vunpack.c.l.b16 %v190
        %v239 = vunpack.c.l.b16 %v191
        %v240 = vunpack.c.l.b16 %v192
        %v241 = vunpack.c.l.b16 %v193
        %v242 = vunpack.c.l.b16 %v194
        %v243 = vunpack.c.l.b16 %v195
        %v244 = vpack.c.b16 %v229, %v228
        %v245 = vpack.c.b16 %v231, %v230
        %v246 = vpack.c.b16 %v233, %v232
        %v247 = vpack.c.b16 %v235, %v234
        %v248 = vpack.c.b16 %v237, %v236
        %v249 = vpack.c.b16 %v239, %v238
        %v250 = vpack.c.b16 %v241, %v240
        %v251 = vpack.c.b16 %v243, %v242
        %v276 = vunpack.c.l.b16 %v196
        %v277 = vunpack.c.l.b16 %v197
        %v278 = vunpack.c.l.b16 %v198
        %v279 = vunpack.c.l.b16 %v199
        %v280 = vunpack.c.l.b16 %v200
        %v281 = vunpack.c.l.b16 %v201
        %v282 = vunpack.c.l.b16 %v202
        %v283 = vunpack.c.l.b16 %v203
        %v284 = vunpack.c.l.b16 %v204
        %v285 = vunpack.c.l.b16 %v205
        %v286 = vunpack.c.l.b16 %v206
        %v287 = vunpack.c.l.b16 %v207
        %v288 = vunpack.c.l.b16 %v208
        %v289 = vunpack.c.l.b16 %v209
        %v290 = vunpack.c.l.b16 %v210
        %v291 = vunpack.c.l.b16 %v211
        %v292 = vpack.c.b16 %v277, %v276
        %v293 = vpack.c.b16 %v279, %v278
        %v294 = vpack.c.b16 %v281, %v280
        %v295 = vpack.c.b16 %v283, %v282
        %v296 = vpack.c.b16 %v285, %v284
        %v297 = vpack.c.b16 %v287, %v286
        %v298 = vpack.c.b16 %v289, %v288
        %v299 = vpack.c.b16 %v291, %v290
        %308 = vmatprep.subr.bf16.mxu0 0
        %309 = vmatpush1.bf16.msra.mxu0 %v292
        %310 = vmatprep.subr.bf16.mxu0 0
        %311 = vmatpush1.bf16.msra.mxu0 %v293
        %312 = vmatprep.subr.bf16.mxu0 0
        %313 = vmatpush1.bf16.msra.mxu0 %v294
        %314 = vmatprep.subr.bf16.mxu0 0
        %315 = vmatpush1.bf16.msra.mxu0 %v295
        %316 = vmatprep.subr.bf16.mxu0 0
        %317 = vmatpush1.bf16.msra.mxu0 %v296
        %318 = vmatprep.subr.bf16.mxu0 0
        %319 = vmatpush1.bf16.msra.mxu0 %v297
        %320 = vmatprep.subr.bf16.mxu0 0
        %321 = vmatpush1.bf16.msra.mxu0 %v298
        %322 = vmatprep.subr.bf16.mxu0 0
        %323 = vmatpush1.bf16.msra.mxu0 %v299
        %324 = vmatprep.subr.bf16.mxu0 0
        %325 = vmatpush1.bf16.msra.mxu0 0
        %326 = vmatprep.subr.bf16.mxu0 0
        %327 = vmatpush1.bf16.msra.mxu0 0
        %328 = vmatprep.subr.bf16.mxu0 0
        %329 = vmatpush1.bf16.msra.mxu0 0
        %330 = vmatprep.subr.bf16.mxu0 0
        %331 = vmatpush1.bf16.msra.mxu0 0
        %332 = vmatprep.subr.bf16.mxu0 0
        %333 = vmatpush1.bf16.msra.mxu0 0
        %334 = vmatprep.subr.bf16.mxu0 0
        %335 = vmatpush1.bf16.msra.mxu0 0
        %336 = vmatprep.subr.bf16.mxu0 0
        %337 = vmatpush1.bf16.msra.mxu0 0
        %338 = vmatprep.subr.bf16.mxu0 0
        %339 = vmatpush1.bf16.msra.mxu0 0
        %340 = vmatprep.mubr.bf16.mxu0 0
        %341 = vmatmul.mubr.bf16.gmra.mrb[0].mxu0 %v244
        %v342 = vpop.f32.mrb[0].mxu0
        %v343 = vadd.f32 0.0, %v342
        %v344 = vpop.f32.mrb[0].mxu0
        %v345 = vpop.f32.mrb[0].mxu0
        %v346 = vadd.f32 0.0, %v345
        %v347 = vpop.f32.mrb[0].mxu0
        %348 = vmatprep.mubr.bf16.mxu0 0
        %349 = vmatmul.mubr.bf16.gmra.mrb[0].mxu0 %v245
        %v350 = vpop.f32.mrb[0].mxu0
        %v351 = vadd.f32 0.0, %v350
        %v352 = vpop.f32.mrb[0].mxu0
        %v353 = vpop.f32.mrb[0].mxu0
        %v354 = vadd.f32 0.0, %v353
        %v355 = vpop.f32.mrb[0].mxu0
        %356 = vmatprep.mubr.bf16.mxu0 0
        %357 = vmatmul.mubr.bf16.gmra.mrb[0].mxu0 %v246
        %v358 = vpop.f32.mrb[0].mxu0
        %v359 = vadd.f32 0.0, %v358
        %v360 = vpop.f32.mrb[0].mxu0
        %v361 = vpop.f32.mrb[0].mxu0
        %v362 = vadd.f32 0.0, %v361
        %v363 = vpop.f32.mrb[0].mxu0
        %364 = vmatprep.mubr.bf16.mxu0 0
        %365 = vmatmul.mubr.bf16.gmra.mrb[0].mxu0 %v247
        %v366 = vpop.f32.mrb[0].mxu0
        %v367 = vadd.f32 0.0, %v366
        %v368 = vpop.f32.mrb[0].mxu0
        %v369 = vpop.f32.mrb[0].mxu0
        %v370 = vadd.f32 0.0, %v369
        %v371 = vpop.f32.mrb[0].mxu0
        %372 = vmatprep.mubr.bf16.mxu0 0
        %373 = vmatmul.mubr.bf16.gmra.mrb[0].mxu0 %v248
        %v374 = vpop.f32.mrb[0].mxu0
        %v375 = vadd.f32 0.0, %v374
        %v376 = vpop.f32.mrb[0].mxu0
        %v377 = vpop.f32.mrb[0].mxu0
        %v378 = vadd.f32 0.0, %v377
        %v379 = vpop.f32.mrb[0].mxu0
        %380 = vmatprep.mubr.bf16.mxu0 0
        %381 = vmatmul.mubr.bf16.gmra.mrb[0].mxu0 %v249
        %v382 = vpop.f32.mrb[0].mxu0
        %v383 = vadd.f32 0.0, %v382
        %v384 = vpop.f32.mrb[0].mxu0
        %v385 = vpop.f32.mrb[0].mxu0
        %v386 = vadd.f32 0.0, %v385
        %v387 = vpop.f32.mrb[0].mxu0
        %388 = vmatprep.mubr.bf16.mxu0 0
        %389 = vmatmul.mubr.bf16.gmra.mrb[0].mxu0 %v250
        %v390 = vpop.f32.mrb[0].mxu0
        %v391 = vadd.f32 0.0, %v390
        %v392 = vpop.f32.mrb[0].mxu0
        %v393 = vpop.f32.mrb[0].mxu0
        %v394 = vadd.f32 0.0, %v393
        %v395 = vpop.f32.mrb[0].mxu0
        %396 = vmatprep.mubr.bf16.mxu0 0
        %397 = vmatmul.mubr.bf16.gmra.mrb[0].mxu0 %v251
        %v398 = vpop.f32.mrb[0].mxu0
        %v399 = vadd.f32 0.0, %v398
        %v400 = vpop.f32.mrb[0].mxu0
        %v401 = vpop.f32.mrb[0].mxu0
        %v402 = vadd.f32 0.0, %v401
        %v403 = vpop.f32.mrb[0].mxu0
        %404 = vdwg.mxu0
        %v405 = vpack.c.bf16 %v346, %v343
        %v406 = vpack.c.bf16 %v354, %v351
        %v407 = vpack.c.bf16 %v362, %v359
        %v408 = vpack.c.bf16 %v370, %v367
        %v409 = vpack.c.bf16 %v378, %v375
        %v410 = vpack.c.bf16 %v386, %v383
        %v411 = vpack.c.bf16 %v394, %v391
        %v412 = vpack.c.bf16 %v402, %v399
        %v421 = vunpack.c.l.b16 %v405
        %v422 = vunpack.c.h.b16 %v405
        %v423 = vunpack.c.l.b16 %v406
        %v424 = vunpack.c.h.b16 %v406
        %v425 = vunpack.c.l.b16 %v407
        %v426 = vunpack.c.h.b16 %v407
        %v427 = vunpack.c.l.b16 %v408
        %v428 = vunpack.c.h.b16 %v408
        %v429 = vunpack.c.l.b16 %v409
        %v430 = vunpack.c.h.b16 %v409
        %v431 = vunpack.c.l.b16 %v410
        %v432 = vunpack.c.h.b16 %v410
        %v433 = vunpack.c.l.b16 %v411
        %v434 = vunpack.c.h.b16 %v411
        %v435 = vunpack.c.l.b16 %v412
        %v436 = vunpack.c.h.b16 %v412
        %v437 = vpack.c.b16 %v421, %v421
        %v438 = vpack.c.b16 %v422, %v422
        %v439 = vpack.c.b16 %v423, %v423
        %v440 = vpack.c.b16 %v424, %v424
        %v441 = vpack.c.b16 %v425, %v425
        %v442 = vpack.c.b16 %v426, %v426
        %v443 = vpack.c.b16 %v427, %v427
        %v444 = vpack.c.b16 %v428, %v428
        %v445 = vpack.c.b16 %v429, %v429
        %v446 = vpack.c.b16 %v430, %v430
        %v447 = vpack.c.b16 %v431, %v431
        %v448 = vpack.c.b16 %v432, %v432
        %v449 = vpack.c.b16 %v433, %v433
        %v450 = vpack.c.b16 %v434, %v434
        %v451 = vpack.c.b16 %v435, %v435
        %v452 = vpack.c.b16 %v436, %v436
        %469 = vst [vmem:[%s176] sm:$0xf] %v437
        %470 = vst [vmem:[%s176 + $0x4] sm:$0xf] %v438
        %471 = vst [vmem:[%s176 + $0x8] sm:$0xf] %v439
        %472 = vst [vmem:[%s176 + $0xc] sm:$0xf] %v440
        %473 = vst [vmem:[%s176 + $0x10] sm:$0xf] %v441
        %474 = vst [vmem:[%s176 + $0x14] sm:$0xf] %v442
        %475 = vst [vmem:[%s176 + $0x18] sm:$0xf] %v443
        %476 = vst [vmem:[%s176 + $0x1c] sm:$0xf] %v444
        %477 = vst [vmem:[%s176 + $0x20] sm:$0xf] %v445
        %478 = vst [vmem:[%s176 + $0x24] sm:$0xf] %v446
        %479 = vst [vmem:[%s176 + $0x28] sm:$0xf] %v447
        %480 = vst [vmem:[%s176 + $0x2c] sm:$0xf] %v448
        %481 = vst [vmem:[%s176 + $0x30] sm:$0xf] %v449
        %482 = vst [vmem:[%s176 + $0x34] sm:$0xf] %v450
        %483 = vst [vmem:[%s176 + $0x38] sm:$0xf] %v451
        %484 = vst [vmem:[%s176 + $0x3c] sm:$0xf] %v452
        %s485 = sand.u32 %s75, 1
        %s486 = scalar_lea.sflag [#allocation4], %s485
        %s487 = sand.u32 %s75, 1
        %s488 = smul.addr %s487, 64
        %s489 = scalar_lea.vmem [#allocation7], %s488
        // Predicated region
        $region37: #{gcn_vae_forward.5} parent=27 // pred_check
          %p490 = pneg %p85
        $region38: #{gcn_vae_forward.5} parent=27 // pred_check_branch
          %492 = sbr.rel (%p490) target = $region40
        $region39: #{gcn_vae_forward.5} parent=27 // pred_region
          %s493 = smul.u32 16, %s20
          %s495 = ssub.s32 1024, 1024
          %496 = vsyncadd %s486, %s495
          %s497 = smul.addr %s493, 64
          %s498 = scalar_lea.hbm %s2, %s497
          %s499 = sshll.u32 %s489, 4
          %s500 = int_to_ptr.vmem [resolvable:$true] %s499
          %505 = dma.vmem_to_hbm [thread:$0]  %s500, 1024, %s498, %s486, 64, 64, 4
        $region40: #{gcn_vae_forward.5} parent=27 // pred_fallthru
          _
      $region28: #{gcn_vae_forward.5} parent=5 // pred_fallthru
        _
      %p506 = scmp.le.s32.totalorder 2, %s15
      // Predicated region
      $region41: #{gcn_vae_forward.5} parent=5 // pred_check
        %p507 = pneg %p506
      $region42: #{gcn_vae_forward.5} parent=5 // pred_check_branch
        %509 = sbr.rel (%p507) target = $region44
      $region43: #{gcn_vae_forward.5} parent=5 // pred_region
        %s510 = ssub.s32 %s15, 2
        // Predicated region
        $region45: #{gcn_vae_forward.5} parent=43 // pred_check
          %p511 = pneg %p91
        $region46: #{gcn_vae_forward.5} parent=43 // pred_check_branch
          %513 = sbr.rel (%p511) target = $region48
        $region47: #{gcn_vae_forward.5} parent=43 // pred_region
          %s514 = sand.u32 %s76, 1
          %s515 = scalar_lea.sflag [#allocation4], %s514
          %s516 = sand.u32 %s76, 1
          %s517 = smul.addr %s516, 64
          %s518 = scalar_lea.vmem [#allocation7], %s517
          %519 = dma.done %s515, 1024
        $region48: #{gcn_vae_forward.5} parent=43 // pred_fallthru
          _
      $region44: #{gcn_vae_forward.5} parent=5 // pred_fallthru
        _
    $region6: #{gcn_vae_forward.5} parent=1 // loop_footer
      %s19 = sadd.s32 1, %s15
    $region7: #{gcn_vae_forward.5} parent=1 // loop_footer_branch
      %14 = sbr.rel target = $region3
    $region8: #{gcn_vae_forward.5} parent=1 // loop_exit
      _
    %520 = vsyncpa [#allocation3], 1
    %s521 = scalar_lea.sflag [#allocation3], 1
    %522 = vsyncpa %s521, 1
    %523 = vsyncpa [#allocation6], 1
    %524 = vsyncpa [#allocation4], 1
    %s525 = scalar_lea.sflag [#allocation4], 1
    %526 = vsyncpa %s525, 1

// kernel: gcn_vae_forward.7
$region0: #{gcn_vae_forward.7}
  #allocation0 [shape = 'u32[]', space=smem, size = 0x4, offset = 0x4, fixed_abs, tag = 'smem constant byte address 0x4 - core index']
  #allocation1 [shape = 'u32[144,128]{1,0:T(1,128)}', space=vmem, size = 0x12000, scoped, tag = 'internal scratch']
  %s0 = inlined_call_operand.hbm [shape: bf16[256,128], index: 0, kind: input, shape index: {}]
  %s1 = inlined_call_operand.hbm [shape: bf16[128,256], index: 1, kind: input, shape index: {}]
  %s2 = inlined_call_operand.hbm [shape: bf16[256,256], index: 2, kind: output, shape index: {}]
  %s3 = sld [smem:[#allocation0]]
  $region49: #{gcn_vae_forward.7} parent=0
    _
  %s5 = ssub.s32 1, %s3
  %s6 = scalar_select 0, %s5, %s3
  $region1: #{gcn_vae_forward.7} parent=0
    #allocation2 [shape = 'u8[65536]{0}', space=vmem, size = 0x10000, scoped, tag = 'input window, operand 0']
    #allocation3 [shape = 's32[2]{0}', space=sflag, size = 0x8, scoped, tag = 'scoped memory for gcn_vae_forward.7']
    #allocation4 [shape = 's32[2]{0}', space=sflag, size = 0x8, scoped, tag = 'scoped memory for gcn_vae_forward.7']
    #allocation5 [shape = 'u8[65536]{0}', space=vmem, size = 0x10000, scoped, tag = 'input window, operand 1, single buffered']
    #allocation6 [shape = 's32[1]{0}', space=sflag, size = 0x4, scoped, tag = 'scoped memory for gcn_vae_forward.7']
    #allocation7 [shape = 'u8[131072]{0}', space=vmem, size = 0x20000, scoped, tag = 'output window, operand 0']
    %7 = vsyncpa [#allocation3], 0
    %s8 = scalar_lea.sflag [#allocation3], 1
    %9 = vsyncpa %s8, 0
    %10 = vsyncpa [#allocation6], 0
    %11 = vsyncpa [#allocation4], 0
    %s12 = scalar_lea.sflag [#allocation4], 1
    %13 = vsyncpa %s12, 0
    loop: start=0, step=1, limit=4
    $region2: #{gcn_vae_forward.7} parent=1 // loop_pre_header
      _
    $region3: #{gcn_vae_forward.7} parent=1 // loop_header
      %s15 = sphi 0, %s19
      %p16 = scmp.ge.s32.totalorder %s15, 4
      %s25 = sphi 0, %s27
      %s28 = sphi 0, %s25
      %s29 = sphi 0, %s28
      %s45 = sphi 0, %s29
      %s49 = sphi 0, %s49
      %s51 = sphi 0, %s49
      %s52 = sphi 0, %s51
      %s66 = sphi 0, %s52
      %s72 = sphi 0, %s74
      %s75 = sphi 0, %s72
      %s76 = sphi 0, %s75
      %s92 = sphi 0, %s76
    $region4: #{gcn_vae_forward.7} parent=1 // loop_header_branch
      %18 = sbr.rel (%p16) target = $region8
    $region5: #{gcn_vae_forward.7} parent=1 // loop_body
      %s20 = ssub.s32 %s15, 1
      %s21 = ssub.s32 %s15, 2
      %s22 = sadd.s32 %s15, 1
      %s23 = ssub.s32 %s15, %s22
      %p24 = scmp.eq.s32.totalorder %s23, 0
      %s26 = sadd.s32 %s25, 1
      %s27 = scalar_select %p24, %s25, %s26
      %p30 = pneg %p24
      %p31 = scmp.eq.s32.totalorder %s15, 1
      %p32 = por %p30, %p31
      %p33 = scmp.ne.s32.totalorder %s25, %s28
      %p34 = scmp.eq.s32.totalorder %s15, 0
      %p35 = por %p33, %p34
      %p36 = scmp.ne.s32.totalorder %s25, %s28
      %p37 = scmp.eq.s32.totalorder %s20, 1
      %p38 = por %p36, %p37
      %p39 = scmp.ne.s32.totalorder %s28, %s29
      %p40 = scmp.eq.s32.totalorder %s20, 0
      %p41 = por %p39, %p40
      %p42 = scmp.ne.s32.totalorder %s28, %s29
      %p43 = scmp.eq.s32.totalorder %s21, 1
      %p44 = por %p42, %p43
      %p46 = scmp.ne.s32.totalorder %s29, %s45
      %p47 = scmp.eq.s32.totalorder %s21, 0
      %p48 = por %p46, %p47
      %s50 = sadd.s32 %s49, 1
      %p53 = scmp.eq.s32.totalorder %s15, 1
      %p54 = scmp.ne.s32.totalorder %s49, %s51
      %p55 = scmp.eq.s32.totalorder %s15, 0
      %p56 = por %p54, %p55
      %p57 = scmp.ne.s32.totalorder %s49, %s51
      %p58 = scmp.eq.s32.totalorder %s20, 1
      %p59 = por %p57, %p58
      %p60 = scmp.ne.s32.totalorder %s51, %s52
      %p61 = scmp.eq.s32.totalorder %s20, 0
      %p62 = por %p60, %p61
      %p63 = scmp.ne.s32.totalorder %s51, %s52
      %p64 = scmp.eq.s32.totalorder %s21, 1
      %p65 = por %p63, %p64
      %p67 = scmp.ne.s32.totalorder %s52, %s66
      %p68 = scmp.eq.s32.totalorder %s21, 0
      %p69 = por %p67, %p68
      %s70 = ssub.s32 %s15, %s22
      %p71 = scmp.eq.s32.totalorder %s70, 0
      %s73 = sadd.s32 %s72, 1
      %s74 = scalar_select %p71, %s72, %s73
      %p77 = pneg %p71
      %p78 = scmp.eq.s32.totalorder %s15, 1
      %p79 = por %p77, %p78
      %p80 = scmp.ne.s32.totalorder %s72, %s75
      %p81 = scmp.eq.s32.totalorder %s15, 0
      %p82 = por %p80, %p81
      %p83 = scmp.ne.s32.totalorder %s72, %s75
      %p84 = scmp.eq.s32.totalorder %s20, 1
      %p85 = por %p83, %p84
      %p86 = scmp.ne.s32.totalorder %s75, %s76
      %p87 = scmp.eq.s32.totalorder %s20, 0
      %p88 = por %p86, %p87
      %p89 = scmp.ne.s32.totalorder %s75, %s76
      %p90 = scmp.eq.s32.totalorder %s21, 1
      %p91 = por %p89, %p90
      %p93 = scmp.ne.s32.totalorder %s76, %s92
      %p94 = scmp.eq.s32.totalorder %s21, 0
      %p95 = por %p93, %p94
      %p96 = scmp.le.s32.totalorder 1, %s15
      %p97 = scmp.lt.s32.totalorder %s15, 3
      %p98 = pnand %p96, %p97
      %p99 = pneg %p98
      // Predicated region
      $region9: #{gcn_vae_forward.7} parent=5 // pred_check
        _
      $region10: #{gcn_vae_forward.7} parent=5 // pred_check_branch
        %101 = sbr.rel (%p98) target = $region12
      $region11: #{gcn_vae_forward.7} parent=5 // pred_region
        %s102 = ssub.s32 %s15, 1
        // Predicated region
        $region13: #{gcn_vae_forward.7} parent=11 // pred_check
          %p103 = pneg %p62
        $region14: #{gcn_vae_forward.7} parent=11 // pred_check_branch
          %105 = sbr.rel (%p103) target = $region16
        $region15: #{gcn_vae_forward.7} parent=11 // pred_region
          %s107 = ssub.s32 2048, 2048
          %108 = vsyncadd [#allocation6], %s107
          %s109 = sshll.u32 [#allocation5], 4
          %s110 = int_to_ptr.vmem [resolvable:$true] %s109
          %115 = dma.hbm_to_vmem [thread:$0]  %s1, 2048, %s110, [#allocation6], 128, 128, 8
        $region16: #{gcn_vae_forward.7} parent=11 // pred_fallthru
          _
      $region12: #{gcn_vae_forward.7} parent=5 // pred_fallthru
        _
      %p116 = scmp.lt.s32.totalorder %s15, 2
      // Predicated region
      $region17: #{gcn_vae_forward.7} parent=5 // pred_check
        %p117 = pneg %p116
      $region18: #{gcn_vae_forward.7} parent=5 // pred_check_branch
        %119 = sbr.rel (%p117) target = $region20
      $region19: #{gcn_vae_forward.7} parent=5 // pred_region
        // Predicated region
        $region21: #{gcn_vae_forward.7} parent=19 // pred_check
          %p120 = pneg %p35
        $region22: #{gcn_vae_forward.7} parent=19 // pred_check_branch
          %122 = sbr.rel (%p120) target = $region24
        $region23: #{gcn_vae_forward.7} parent=19 // pred_region
          %s123 = sand.u32 %s25, 1
          %s124 = scalar_lea.sflag [#allocation3], %s123
          %s125 = sand.u32 %s25, 1
          %s126 = smul.addr %s125, 64
          %s127 = scalar_lea.vmem [#allocation2], %s126
          %s128 = smul.u32 16, %s15
          %s130 = ssub.s32 1024, 1024
          %131 = vsyncadd %s124, %s130
          %s132 = smul.addr %s128, 64
          %s133 = scalar_lea.hbm %s0, %s132
          %s134 = sshll.u32 %s127, 4
          %s135 = int_to_ptr.vmem [resolvable:$true] %s134
          %140 = dma.hbm_to_vmem [thread:$0]  %s133, 1024, %s135, %s124, 64, 64, 4
        $region24: #{gcn_vae_forward.7} parent=19 // pred_fallthru
          _
      $region20: #{gcn_vae_forward.7} parent=5 // pred_fallthru
        _
      %p141 = scmp.le.s32.totalorder 1, %s15
      %p142 = scmp.lt.s32.totalorder %s15, 3
      %p143 = pnand %p141, %p142
      %p144 = pneg %p143
      // Predicated region
      $region25: #{gcn_vae_forward.7} parent=5 // pred_check
        _
      $region26: #{gcn_vae_forward.7} parent=5 // pred_check_branch
        %146 = sbr.rel (%p143) target = $region28
      $region27: #{gcn_vae_forward.7} parent=5 // pred_region
        %s147 = ssub.s32 %s15, 1
        %s148 = sand.u32 %s28, 1
        %s149 = scalar_lea.sflag [#allocation3], %s148
        %s150 = sand.u32 %s28, 1
        %s151 = smul.addr %s150, 64
        %s152 = scalar_lea.vmem [#allocation2], %s151
        // Predicated region
        $region29: #{gcn_vae_forward.7} parent=27 // pred_check
          %p153 = pneg %p41
        $region30: #{gcn_vae_forward.7} parent=27 // pred_check_branch
          %155 = sbr.rel (%p153) target = $region32
        $region31: #{gcn_vae_forward.7} parent=27 // pred_region
          %156 = dma.done %s149, 1024
        $region32: #{gcn_vae_forward.7} parent=27 // pred_fallthru
          _
        // Predicated region
        $region33: #{gcn_vae_forward.7} parent=27 // pred_check
          %p157 = pneg %p62
        $region34: #{gcn_vae_forward.7} parent=27 // pred_check_branch
          %159 = sbr.rel (%p157) target = $region36
        $region35: #{gcn_vae_forward.7} parent=27 // pred_region
          %160 = dma.done [#allocation6], 2048
        $region36: #{gcn_vae_forward.7} parent=27 // pred_fallthru
          _
        %s161 = sand.u32 %s28, 1
        %s162 = scalar_lea.sflag [#allocation3], %s161
        %s163 = sand.u32 %s28, 1
        %s164 = smul.addr %s163, 64
        %s165 = scalar_lea.vmem [#allocation2], %s164
        %p166 = pneg %p41
        %p167 = pneg %p38
        %p168 = pneg %p62
        %p169 = pneg %p59
        %p170 = pneg %p88
        %p171 = pneg %p85
        %s172 = sand.u32 %s75, 1
        %s173 = scalar_lea.sflag [#allocation4], %s172
        %s174 = sand.u32 %s75, 1
        %s175 = smul.addr %s174, 128
        %s176 = scalar_lea.vmem [#allocation7], %s175
        %s177 = smul.u32 16, %s20
        %s178 = smul.u32 16, %s20
        %v180 = vld [vmem:[%s152] sm:$0xf]
        %v181 = vld [vmem:[%s152 + $0x4] sm:$0xf]
        %v182 = vld [vmem:[%s152 + $0x8] sm:$0xf]
        %v183 = vld [vmem:[%s152 + $0xc] sm:$0xf]
        %v184 = vld [vmem:[%s152 + $0x10] sm:$0xf]
        %v185 = vld [vmem:[%s152 + $0x14] sm:$0xf]
        %v186 = vld [vmem:[%s152 + $0x18] sm:$0xf]
        %v187 = vld [vmem:[%s152 + $0x1c] sm:$0xf]
        %v188 = vld [vmem:[%s152 + $0x20] sm:$0xf]
        %v189 = vld [vmem:[%s152 + $0x24] sm:$0xf]
        %v190 = vld [vmem:[%s152 + $0x28] sm:$0xf]
        %v191 = vld [vmem:[%s152 + $0x2c] sm:$0xf]
        %v192 = vld [vmem:[%s152 + $0x30] sm:$0xf]
        %v193 = vld [vmem:[%s152 + $0x34] sm:$0xf]
        %v194 = vld [vmem:[%s152 + $0x38] sm:$0xf]
        %v195 = vld [vmem:[%s152 + $0x3c] sm:$0xf]
        %v196 = vld [vmem:[#allocation5] sm:$0xff]
        %v197 = vld [vmem:[#allocation5 + $0x8] sm:$0xff]
        %v198 = vld [vmem:[#allocation5 + $0x10] sm:$0xff]
        %v199 = vld [vmem:[#allocation5 + $0x18] sm:$0xff]
        %v200 = vld [vmem:[#allocation5 + $0x20] sm:$0xff]
        %v201 = vld [vmem:[#allocation5 + $0x28] sm:$0xff]
        %v202 = vld [vmem:[#allocation5 + $0x30] sm:$0xff]
        %v203 = vld [vmem:[#allocation5 + $0x38] sm:$0xff]
        %v204 = vld [vmem:[#allocation5 + $0x40] sm:$0xff]
        %v205 = vld [vmem:[#allocation5 + $0x48] sm:$0xff]
        %v206 = vld [vmem:[#allocation5 + $0x50] sm:$0xff]
        %v207 = vld [vmem:[#allocation5 + $0x58] sm:$0xff]
        %v208 = vld [vmem:[#allocation5 + $0x60] sm:$0xff]
        %v209 = vld [vmem:[#allocation5 + $0x68] sm:$0xff]
        %v210 = vld [vmem:[#allocation5 + $0x70] sm:$0xff]
        %v211 = vld [vmem:[#allocation5 + $0x78] sm:$0xff]
        %v228 = vunpack.c.l.b16 %v180
        %v229 = vunpack.c.l.b16 %v181
        %v230 = vunpack.c.l.b16 %v182
        %v231 = vunpack.c.l.b16 %v183
        %v232 = vunpack.c.l.b16 %v184
        %v233 = vunpack.c.l.b16 %v185
        %v234 = vunpack.c.l.b16 %v186
        %v235 = vunpack.c.l.b16 %v187
        %v236 = vunpack.c.l.b16 %v188
        %v237 = vunpack.c.l.b16 %v189
        %v238 = vunpack.c.l.b16 %v190
        %v239 = vunpack.c.l.b16 %v191
        %v240 = vunpack.c.l.b16 %v192
        %v241 = vunpack.c.l.b16 %v193
        %v242 = vunpack.c.l.b16 %v194
        %v243 = vunpack.c.l.b16 %v195
        %v244 = vpack.c.b16 %v229, %v228
        %v245 = vpack.c.b16 %v231, %v230
        %v246 = vpack.c.b16 %v233, %v232
        %v247 = vpack.c.b16 %v235, %v234
        %v248 = vpack.c.b16 %v237, %v236
        %v249 = vpack.c.b16 %v239, %v238
        %v250 = vpack.c.b16 %v241, %v240
        %v251 = vpack.c.b16 %v243, %v242
        %v276 = vunpack.c.l.b16 %v196
        %v277 = vunpack.c.h.b16 %v196
        %v278 = vunpack.c.l.b16 %v197
        %v279 = vunpack.c.h.b16 %v197
        %v280 = vunpack.c.l.b16 %v198
        %v281 = vunpack.c.h.b16 %v198
        %v282 = vunpack.c.l.b16 %v199
        %v283 = vunpack.c.h.b16 %v199
        %v284 = vunpack.c.l.b16 %v200
        %v285 = vunpack.c.h.b16 %v200
        %v286 = vunpack.c.l.b16 %v201
        %v287 = vunpack.c.h.b16 %v201
        %v288 = vunpack.c.l.b16 %v202
        %v289 = vunpack.c.h.b16 %v202
        %v290 = vunpack.c.l.b16 %v203
        %v291 = vunpack.c.h.b16 %v203
        %v292 = vunpack.c.l.b16 %v204
        %v293 = vunpack.c.h.b16 %v204
        %v294 = vunpack.c.l.b16 %v205
        %v295 = vunpack.c.h.b16 %v205
        %v296 = vunpack.c.l.b16 %v206
        %v297 = vunpack.c.h.b16 %v206
        %v298 = vunpack.c.l.b16 %v207
        %v299 = vunpack.c.h.b16 %v207
        %v300 = vunpack.c.l.b16 %v208
        %v301 = vunpack.c.h.b16 %v208
        %v302 = vunpack.c.l.b16 %v209
        %v303 = vunpack.c.h.b16 %v209
        %v304 = vunpack.c.l.b16 %v210
        %v305 = vunpack.c.h.b16 %v210
        %v306 = vunpack.c.l.b16 %v211
        %v307 = vunpack.c.h.b16 %v211
        %v308 = vpack.c.b16 %v278, %v276
        %v309 = vpack.c.b16 %v279, %v277
        %v310 = vpack.c.b16 %v282, %v280
        %v311 = vpack.c.b16 %v283, %v281
        %v312 = vpack.c.b16 %v286, %v284
        %v313 = vpack.c.b16 %v287, %v285
        %v314 = vpack.c.b16 %v290, %v288
        %v315 = vpack.c.b16 %v291, %v289
        %v316 = vpack.c.b16 %v294, %v292
        %v317 = vpack.c.b16 %v295, %v293
        %v318 = vpack.c.b16 %v298, %v296
        %v319 = vpack.c.b16 %v299, %v297
        %v320 = vpack.c.b16 %v302, %v300
        %v321 = vpack.c.b16 %v303, %v301
        %v322 = vpack.c.b16 %v306, %v304
        %v323 = vpack.c.b16 %v307, %v305
        %340 = vmatprep.subr.bf16.mxu0 %v309
        %341 = vmatpush1.bf16.msra.mxu0 %v308
        %342 = vmatprep.subr.bf16.mxu0 %v311
        %343 = vmatpush1.bf16.msra.mxu0 %v310
        %344 = vmatprep.subr.bf16.mxu0 %v313
        %345 = vmatpush1.bf16.msra.mxu0 %v312
        %346 = vmatprep.subr.bf16.mxu0 %v315
        %347 = vmatpush1.bf16.msra.mxu0 %v314
        %348 = vmatprep.subr.bf16.mxu0 %v317
        %349 = vmatpush1.bf16.msra.mxu0 %v316
        %350 = vmatprep.subr.bf16.mxu0 %v319
        %351 = vmatpush1.bf16.msra.mxu0 %v318
        %352 = vmatprep.subr.bf16.mxu0 %v321
        %353 = vmatpush1.bf16.msra.mxu0 %v320
        %354 = vmatprep.subr.bf16.mxu0 %v323
        %355 = vmatpush1.bf16.msra.mxu0 %v322
        %356 = vmatprep.subr.bf16.mxu0 0
        %357 = vmatpush1.bf16.msra.mxu0 0
        %358 = vmatprep.subr.bf16.mxu0 0
        %359 = vmatpush1.bf16.msra.mxu0 0
        %360 = vmatprep.subr.bf16.mxu0 0
        %361 = vmatpush1.bf16.msra.mxu0 0
        %362 = vmatprep.subr.bf16.mxu0 0
        %363 = vmatpush1.bf16.msra.mxu0 0
        %364 = vmatprep.subr.bf16.mxu0 0
        %365 = vmatpush1.bf16.msra.mxu0 0
        %366 = vmatprep.subr.bf16.mxu0 0
        %367 = vmatpush1.bf16.msra.mxu0 0
        %368 = vmatprep.subr.bf16.mxu0 0
        %369 = vmatpush1.bf16.msra.mxu0 0
        %370 = vmatprep.subr.bf16.mxu0 0
        %371 = vmatpush1.bf16.msra.mxu0 0
        %372 = vmatprep.mubr.bf16.mxu0 0
        %373 = vmatmul.mubr.bf16.gmra.mrb[0].mxu0 %v244
        %v374 = vpop.f32.mrb[0].mxu0
        %v375 = vadd.f32 0.0, %v374
        %v376 = vpop.f32.mrb[0].mxu0
        %v377 = vadd.f32 0.0, %v376
        %v378 = vpop.f32.mrb[0].mxu0
        %v379 = vadd.f32 0.0, %v378
        %v380 = vpop.f32.mrb[0].mxu0
        %v381 = vadd.f32 0.0, %v380
        %382 = vmatprep.mubr.bf16.mxu0 0
        %383 = vmatmul.mubr.bf16.gmra.mrb[0].mxu0 %v245
        %v384 = vpop.f32.mrb[0].mxu0
        %v385 = vadd.f32 0.0, %v384
        %v386 = vpop.f32.mrb[0].mxu0
        %v387 = vadd.f32 0.0, %v386
        %v388 = vpop.f32.mrb[0].mxu0
        %v389 = vadd.f32 0.0, %v388
        %v390 = vpop.f32.mrb[0].mxu0
        %v391 = vadd.f32 0.0, %v390
        %392 = vmatprep.mubr.bf16.mxu0 0
        %393 = vmatmul.mubr.bf16.gmra.mrb[0].mxu0 %v246
        %v394 = vpop.f32.mrb[0].mxu0
        %v395 = vadd.f32 0.0, %v394
        %v396 = vpop.f32.mrb[0].mxu0
        %v397 = vadd.f32 0.0, %v396
        %v398 = vpop.f32.mrb[0].mxu0
        %v399 = vadd.f32 0.0, %v398
        %v400 = vpop.f32.mrb[0].mxu0
        %v401 = vadd.f32 0.0, %v400
        %402 = vmatprep.mubr.bf16.mxu0 0
        %403 = vmatmul.mubr.bf16.gmra.mrb[0].mxu0 %v247
        %v404 = vpop.f32.mrb[0].mxu0
        %v405 = vadd.f32 0.0, %v404
        %v406 = vpop.f32.mrb[0].mxu0
        %v407 = vadd.f32 0.0, %v406
        %v408 = vpop.f32.mrb[0].mxu0
        %v409 = vadd.f32 0.0, %v408
        %v410 = vpop.f32.mrb[0].mxu0
        %v411 = vadd.f32 0.0, %v410
        %412 = vmatprep.mubr.bf16.mxu0 0
        %413 = vmatmul.mubr.bf16.gmra.mrb[0].mxu0 %v248
        %v414 = vpop.f32.mrb[0].mxu0
        %v415 = vadd.f32 0.0, %v414
        %v416 = vpop.f32.mrb[0].mxu0
        %v417 = vadd.f32 0.0, %v416
        %v418 = vpop.f32.mrb[0].mxu0
        %v419 = vadd.f32 0.0, %v418
        %v420 = vpop.f32.mrb[0].mxu0
        %v421 = vadd.f32 0.0, %v420
        %422 = vmatprep.mubr.bf16.mxu0 0
        %423 = vmatmul.mubr.bf16.gmra.mrb[0].mxu0 %v249
        %v424 = vpop.f32.mrb[0].mxu0
        %v425 = vadd.f32 0.0, %v424
        %v426 = vpop.f32.mrb[0].mxu0
        %v427 = vadd.f32 0.0, %v426
        %v428 = vpop.f32.mrb[0].mxu0
        %v429 = vadd.f32 0.0, %v428
        %v430 = vpop.f32.mrb[0].mxu0
        %v431 = vadd.f32 0.0, %v430
        %432 = vmatprep.mubr.bf16.mxu0 0
        %433 = vmatmul.mubr.bf16.gmra.mrb[0].mxu0 %v250
        %v434 = vpop.f32.mrb[0].mxu0
        %v435 = vadd.f32 0.0, %v434
        %v436 = vpop.f32.mrb[0].mxu0
        %v437 = vadd.f32 0.0, %v436
        %v438 = vpop.f32.mrb[0].mxu0
        %v439 = vadd.f32 0.0, %v438
        %v440 = vpop.f32.mrb[0].mxu0
        %v441 = vadd.f32 0.0, %v440
        %442 = vmatprep.mubr.bf16.mxu0 0
        %443 = vmatmul.mubr.bf16.gmra.mrb[0].mxu0 %v251
        %v444 = vpop.f32.mrb[0].mxu0
        %v445 = vadd.f32 0.0, %v444
        %v446 = vpop.f32.mrb[0].mxu0
        %v447 = vadd.f32 0.0, %v446
        %v448 = vpop.f32.mrb[0].mxu0
        %v449 = vadd.f32 0.0, %v448
        %v450 = vpop.f32.mrb[0].mxu0
        %v451 = vadd.f32 0.0, %v450
        %452 = vdwg.mxu0
        %v453 = vpack.c.bf16 %v379, %v375
        %v454 = vpack.c.bf16 %v381, %v377
        %v455 = vpack.c.bf16 %v389, %v385
        %v456 = vpack.c.bf16 %v391, %v387
        %v457 = vpack.c.bf16 %v399, %v395
        %v458 = vpack.c.bf16 %v401, %v397
        %v459 = vpack.c.bf16 %v409, %v405
        %v460 = vpack.c.bf16 %v411, %v407
        %v461 = vpack.c.bf16 %v419, %v415
        %v462 = vpack.c.bf16 %v421, %v417
        %v463 = vpack.c.bf16 %v429, %v425
        %v464 = vpack.c.bf16 %v431, %v427
        %v465 = vpack.c.bf16 %v439, %v435
        %v466 = vpack.c.bf16 %v441, %v437
        %v467 = vpack.c.bf16 %v449, %v445
        %v468 = vpack.c.bf16 %v451, %v447
        %v485 = vunpack.c.l.b16 %v453
        %v486 = vunpack.c.l.b16 %v454
        %v487 = vunpack.c.h.b16 %v453
        %v488 = vunpack.c.h.b16 %v454
        %v489 = vunpack.c.l.b16 %v455
        %v490 = vunpack.c.l.b16 %v456
        %v491 = vunpack.c.h.b16 %v455
        %v492 = vunpack.c.h.b16 %v456
        %v493 = vunpack.c.l.b16 %v457
        %v494 = vunpack.c.l.b16 %v458
        %v495 = vunpack.c.h.b16 %v457
        %v496 = vunpack.c.h.b16 %v458
        %v497 = vunpack.c.l.b16 %v459
        %v498 = vunpack.c.l.b16 %v460
        %v499 = vunpack.c.h.b16 %v459
        %v500 = vunpack.c.h.b16 %v460
        %v501 = vunpack.c.l.b16 %v461
        %v502 = vunpack.c.l.b16 %v462
        %v503 = vunpack.c.h.b16 %v461
        %v504 = vunpack.c.h.b16 %v462
        %v505 = vunpack.c.l.b16 %v463
        %v506 = vunpack.c.l.b16 %v464
        %v507 = vunpack.c.h.b16 %v463
        %v508 = vunpack.c.h.b16 %v464
        %v509 = vunpack.c.l.b16 %v465
        %v510 = vunpack.c.l.b16 %v466
        %v511 = vunpack.c.h.b16 %v465
        %v512 = vunpack.c.h.b16 %v466
        %v513 = vunpack.c.l.b16 %v467
        %v514 = vunpack.c.l.b16 %v468
        %v515 = vunpack.c.h.b16 %v467
        %v516 = vunpack.c.h.b16 %v468
        %v517 = vpack.c.b16 %v486, %v485
        %v518 = vpack.c.b16 %v488, %v487
        %v519 = vpack.c.b16 %v490, %v489
        %v520 = vpack.c.b16 %v492, %v491
        %v521 = vpack.c.b16 %v494, %v493
        %v522 = vpack.c.b16 %v496, %v495
        %v523 = vpack.c.b16 %v498, %v497
        %v524 = vpack.c.b16 %v500, %v499
        %v525 = vpack.c.b16 %v502, %v501
        %v526 = vpack.c.b16 %v504, %v503
        %v527 = vpack.c.b16 %v506, %v505
        %v528 = vpack.c.b16 %v508, %v507
        %v529 = vpack.c.b16 %v510, %v509
        %v530 = vpack.c.b16 %v512, %v511
        %v531 = vpack.c.b16 %v514, %v513
        %v532 = vpack.c.b16 %v516, %v515
        %549 = vst [vmem:[%s176] sm:$0xff] %v517
        %550 = vst [vmem:[%s176 + $0x8] sm:$0xff] %v518
        %551 = vst [vmem:[%s176 + $0x10] sm:$0xff] %v519
        %552 = vst [vmem:[%s176 + $0x18] sm:$0xff] %v520
        %553 = vst [vmem:[%s176 + $0x20] sm:$0xff] %v521
        %554 = vst [vmem:[%s176 + $0x28] sm:$0xff] %v522
        %555 = vst [vmem:[%s176 + $0x30] sm:$0xff] %v523
        %556 = vst [vmem:[%s176 + $0x38] sm:$0xff] %v524
        %557 = vst [vmem:[%s176 + $0x40] sm:$0xff] %v525
        %558 = vst [vmem:[%s176 + $0x48] sm:$0xff] %v526
        %559 = vst [vmem:[%s176 + $0x50] sm:$0xff] %v527
        %560 = vst [vmem:[%s176 + $0x58] sm:$0xff] %v528
        %561 = vst [vmem:[%s176 + $0x60] sm:$0xff] %v529
        %562 = vst [vmem:[%s176 + $0x68] sm:$0xff] %v530
        %563 = vst [vmem:[%s176 + $0x70] sm:$0xff] %v531
        %564 = vst [vmem:[%s176 + $0x78] sm:$0xff] %v532
        %s565 = sand.u32 %s75, 1
        %s566 = scalar_lea.sflag [#allocation4], %s565
        %s567 = sand.u32 %s75, 1
        %s568 = smul.addr %s567, 128
        %s569 = scalar_lea.vmem [#allocation7], %s568
        // Predicated region
        $region37: #{gcn_vae_forward.7} parent=27 // pred_check
          %p570 = pneg %p85
        $region38: #{gcn_vae_forward.7} parent=27 // pred_check_branch
          %572 = sbr.rel (%p570) target = $region40
        $region39: #{gcn_vae_forward.7} parent=27 // pred_region
          %s573 = smul.u32 16, %s20
          %s575 = ssub.s32 2048, 2048
          %576 = vsyncadd %s566, %s575
          %s577 = smul.addr %s573, 2
          %s578 = smul.addr %s577, 64
          %s579 = scalar_lea.hbm %s2, %s578
          %s580 = sshll.u32 %s569, 4
          %s581 = int_to_ptr.vmem [resolvable:$true] %s580
          %586 = dma.vmem_to_hbm [thread:$0]  %s581, 2048, %s579, %s566, 128, 128, 8
        $region40: #{gcn_vae_forward.7} parent=27 // pred_fallthru
          _
      $region28: #{gcn_vae_forward.7} parent=5 // pred_fallthru
        _
      %p587 = scmp.le.s32.totalorder 2, %s15
      // Predicated region
      $region41: #{gcn_vae_forward.7} parent=5 // pred_check
        %p588 = pneg %p587
      $region42: #{gcn_vae_forward.7} parent=5 // pred_check_branch
        %590 = sbr.rel (%p588) target = $region44
      $region43: #{gcn_vae_forward.7} parent=5 // pred_region
        %s591 = ssub.s32 %s15, 2
        // Predicated region
        $region45: #{gcn_vae_forward.7} parent=43 // pred_check
          %p592 = pneg %p91
        $region46: #{gcn_vae_forward.7} parent=43 // pred_check_branch
          %594 = sbr.rel (%p592) target = $region48
        $region47: #{gcn_vae_forward.7} parent=43 // pred_region
          %s595 = sand.u32 %s76, 1
          %s596 = scalar_lea.sflag [#allocation4], %s595
          %s597 = sand.u32 %s76, 1
          %s598 = smul.addr %s597, 128
          %s599 = scalar_lea.vmem [#allocation7], %s598
          %600 = dma.done %s596, 2048
        $region48: #{gcn_vae_forward.7} parent=43 // pred_fallthru
          _
      $region44: #{gcn_vae_forward.7} parent=5 // pred_fallthru
        _
    $region6: #{gcn_vae_forward.7} parent=1 // loop_footer
      %s19 = sadd.s32 1, %s15
    $region7: #{gcn_vae_forward.7} parent=1 // loop_footer_branch
      %14 = sbr.rel target = $region3
    $region8: #{gcn_vae_forward.7} parent=1 // loop_exit
      _
    %601 = vsyncpa [#allocation3], 1
    %s602 = scalar_lea.sflag [#allocation3], 1
    %603 = vsyncpa %s602, 1
    %604 = vsyncpa [#allocation6], 1
    %605 = vsyncpa [#allocation4], 1
    %s606 = scalar_lea.sflag [#allocation4], 1
    %607 = vsyncpa %s606, 1

// kernel: gcn_vae_forward.6
$region0: #{gcn_vae_forward.6}
  #allocation0 [shape = 'u32[]', space=smem, size = 0x4, offset = 0x4, fixed_abs, tag = 'smem constant byte address 0x4 - core index']
  #allocation1 [shape = 'u32[144,128]{1,0:T(1,128)}', space=vmem, size = 0x12000, scoped, tag = 'internal scratch']
  #allocation2 [shape = 'f32[128,128]{1,0:T(8,128)}', space=vmem, size = 0x10000, scoped, tag = 'scratch operand']
  %s0 = inlined_call_operand.hbm [shape: bf16[256,256], index: 0, kind: input, shape index: {}]
  %s1 = inlined_call_operand.hbm [shape: bf16[256,128], index: 1, kind: input, shape index: {}]
  %s2 = inlined_call_operand.hbm [shape: bf16[256,128], index: 2, kind: output, shape index: {}]
  %s3 = sld [smem:[#allocation0]]
  $region57: #{gcn_vae_forward.6} parent=0
    _
  %s5 = ssub.s32 1, %s3
  %s6 = scalar_select 0, %s5, %s3
  $region1: #{gcn_vae_forward.6} parent=0
    #allocation3 [shape = 'u8[131072]{0}', space=vmem, size = 0x20000, scoped, tag = 'input window, operand 0']
    #allocation4 [shape = 's32[2]{0}', space=sflag, size = 0x8, scoped, tag = 'scoped memory for gcn_vae_forward.6']
    #allocation5 [shape = 's32[2]{0}', space=sflag, size = 0x8, scoped, tag = 'scoped memory for gcn_vae_forward.6']
    #allocation6 [shape = 'u8[65536]{0}', space=vmem, size = 0x10000, scoped, tag = 'input window, operand 1, single buffered']
    #allocation7 [shape = 's32[1]{0}', space=sflag, size = 0x4, scoped, tag = 'scoped memory for gcn_vae_forward.6']
    #allocation8 [shape = 'u8[65536]{0}', space=vmem, size = 0x10000, scoped, tag = 'output window, operand 0']
    %7 = vsyncpa [#allocation4], 0
    %s8 = scalar_lea.sflag [#allocation4], 1
    %9 = vsyncpa %s8, 0
    %10 = vsyncpa [#allocation7], 0
    %11 = vsyncpa [#allocation5], 0
    %s12 = scalar_lea.sflag [#allocation5], 1
    %13 = vsyncpa %s12, 0
    loop: start=0, step=1, limit=4
    $region2: #{gcn_vae_forward.6} parent=1 // loop_pre_header
      _
    $region3: #{gcn_vae_forward.6} parent=1 // loop_header
      %s15 = sphi 0, %s19
      %p16 = scmp.ge.s32.totalorder %s15, 4
      %s22 = sphi 0, %s34
      %s23 = sphi 0, %s30
      %s24 = sphi 0, %s22
      %s25 = sphi 0, %s23
      %s26 = sphi 0, %s24
      %s27 = sphi 0, %s25
      %s39 = sphi 0, %s41
      %s42 = sphi 0, %s39
      %s43 = sphi 0, %s42
      %s59 = sphi 0, %s43
      %s63 = sphi 0, %s63
      %s65 = sphi 0, %s63
      %s66 = sphi 0, %s65
      %s80 = sphi 0, %s66
      %s86 = sphi 0, %s88
      %s89 = sphi 0, %s86
      %s90 = sphi 0, %s89
      %s106 = sphi 0, %s90
    $region4: #{gcn_vae_forward.6} parent=1 // loop_header_branch
      %18 = sbr.rel (%p16) target = $region8
    $region5: #{gcn_vae_forward.6} parent=1 // loop_body
      %s20 = ssub.s32 %s15, 1
      %s21 = ssub.s32 %s15, 2
      %s28 = sadd.s32 1, %s23
      %p29 = scmp.ge.s32.totalorder %s28, 1
      %s30 = scalar_select %p29, 0, %s28
      %s31 = sadd.s32 1, %s22
      %s32 = scalar_select %p29, %s31, %s22
      %p33 = scmp.ge.s32.totalorder %s32, 2
      %s34 = scalar_select %p33, 0, %s32
      %s35 = ssub.s32 %s22, %s34
      %s36 = ssub.s32 %s23, %s30
      %s37 = sor.u32 %s35, %s36
      %p38 = scmp.eq.s32.totalorder %s37, 0
      %s40 = sadd.s32 %s39, 1
      %s41 = scalar_select %p38, %s39, %s40
      %p44 = pneg %p38
      %p45 = scmp.eq.s32.totalorder %s15, 1
      %p46 = por %p44, %p45
      %p47 = scmp.ne.s32.totalorder %s39, %s42
      %p48 = scmp.eq.s32.totalorder %s15, 0
      %p49 = por %p47, %p48
      %p50 = scmp.ne.s32.totalorder %s39, %s42
      %p51 = scmp.eq.s32.totalorder %s20, 1
      %p52 = por %p50, %p51
      %p53 = scmp.ne.s32.totalorder %s42, %s43
      %p54 = scmp.eq.s32.totalorder %s20, 0
      %p55 = por %p53, %p54
      %p56 = scmp.ne.s32.totalorder %s42, %s43
      %p57 = scmp.eq.s32.totalorder %s21, 1
      %p58 = por %p56, %p57
      %p60 = scmp.ne.s32.totalorder %s43, %s59
      %p61 = scmp.eq.s32.totalorder %s21, 0
      %p62 = por %p60, %p61
      %s64 = sadd.s32 %s63, 1
      %p67 = scmp.eq.s32.totalorder %s15, 1
      %p68 = scmp.ne.s32.totalorder %s63, %s65
      %p69 = scmp.eq.s32.totalorder %s15, 0
      %p70 = por %p68, %p69
      %p71 = scmp.ne.s32.totalorder %s63, %s65
      %p72 = scmp.eq.s32.totalorder %s20, 1
      %p73 = por %p71, %p72
      %p74 = scmp.ne.s32.totalorder %s65, %s66
      %p75 = scmp.eq.s32.totalorder %s20, 0
      %p76 = por %p74, %p75
      %p77 = scmp.ne.s32.totalorder %s65, %s66
      %p78 = scmp.eq.s32.totalorder %s21, 1
      %p79 = por %p77, %p78
      %p81 = scmp.ne.s32.totalorder %s66, %s80
      %p82 = scmp.eq.s32.totalorder %s21, 0
      %p83 = por %p81, %p82
      %s84 = ssub.s32 %s22, %s34
      %p85 = scmp.eq.s32.totalorder %s84, 0
      %s87 = sadd.s32 %s86, 1
      %s88 = scalar_select %p85, %s86, %s87
      %p91 = pneg %p85
      %p92 = scmp.eq.s32.totalorder %s15, 1
      %p93 = por %p91, %p92
      %p94 = scmp.ne.s32.totalorder %s86, %s89
      %p95 = scmp.eq.s32.totalorder %s15, 0
      %p96 = por %p94, %p95
      %p97 = scmp.ne.s32.totalorder %s86, %s89
      %p98 = scmp.eq.s32.totalorder %s20, 1
      %p99 = por %p97, %p98
      %p100 = scmp.ne.s32.totalorder %s89, %s90
      %p101 = scmp.eq.s32.totalorder %s20, 0
      %p102 = por %p100, %p101
      %p103 = scmp.ne.s32.totalorder %s89, %s90
      %p104 = scmp.eq.s32.totalorder %s21, 1
      %p105 = por %p103, %p104
      %p107 = scmp.ne.s32.totalorder %s90, %s106
      %p108 = scmp.eq.s32.totalorder %s21, 0
      %p109 = por %p107, %p108
      %p110 = scmp.le.s32.totalorder 1, %s15
      %p111 = scmp.lt.s32.totalorder %s15, 3
      %p112 = pnand %p110, %p111
      %p113 = pneg %p112
      // Predicated region
      $region9: #{gcn_vae_forward.6} parent=5 // pred_check
        _
      $region10: #{gcn_vae_forward.6} parent=5 // pred_check_branch
        %115 = sbr.rel (%p112) target = $region12
      $region11: #{gcn_vae_forward.6} parent=5 // pred_region
        %s116 = ssub.s32 %s15, 1
        // Predicated region
        $region13: #{gcn_vae_forward.6} parent=11 // pred_check
          %p117 = pneg %p76
        $region14: #{gcn_vae_forward.6} parent=11 // pred_check_branch
          %119 = sbr.rel (%p117) target = $region16
        $region15: #{gcn_vae_forward.6} parent=11 // pred_region
          %s121 = ssub.s32 2048, 2048
          %122 = vsyncadd [#allocation7], %s121
          %s123 = sshll.u32 [#allocation6], 4
          %s124 = int_to_ptr.vmem [resolvable:$true] %s123
          %129 = dma.hbm_to_vmem [thread:$0]  %s1, 2048, %s124, [#allocation7], 64, 64, 4
        $region16: #{gcn_vae_forward.6} parent=11 // pred_fallthru
          _
      $region12: #{gcn_vae_forward.6} parent=5 // pred_fallthru
        _
      %p130 = scmp.lt.s32.totalorder %s15, 2
      // Predicated region
      $region17: #{gcn_vae_forward.6} parent=5 // pred_check
        %p131 = pneg %p130
      $region18: #{gcn_vae_forward.6} parent=5 // pred_check_branch
        %133 = sbr.rel (%p131) target = $region20
      $region19: #{gcn_vae_forward.6} parent=5 // pred_region
        // Predicated region
        $region21: #{gcn_vae_forward.6} parent=19 // pred_check
          %p134 = pneg %p49
        $region22: #{gcn_vae_forward.6} parent=19 // pred_check_branch
          %136 = sbr.rel (%p134) target = $region24
        $region23: #{gcn_vae_forward.6} parent=19 // pred_region
          %s137 = sand.u32 %s39, 1
          %s138 = scalar_lea.sflag [#allocation4], %s137
          %s139 = sand.u32 %s39, 1
          %s140 = smul.addr %s139, 128
          %s141 = scalar_lea.vmem [#allocation3], %s140
          %s142 = smul.u32 16, %s22
          %s143 = smul.u32 2, %s23
          %s145 = ssub.s32 2048, 2048
          %146 = vsyncadd %s138, %s145
          %s147 = smul.addr %s142, 2
          %s148 = sadd.s32 %s143, %s147
          %s149 = smul.addr %s148, 64
          %s150 = scalar_lea.hbm %s0, %s149
          %s151 = sshll.u32 %s141, 4
          %s152 = int_to_ptr.vmem [resolvable:$true] %s151
          %157 = dma.hbm_to_vmem [thread:$0]  %s150, 2048, %s152, %s138, 128, 128, 8
        $region24: #{gcn_vae_forward.6} parent=19 // pred_fallthru
          _
      $region20: #{gcn_vae_forward.6} parent=5 // pred_fallthru
        _
      %p158 = scmp.le.s32.totalorder 1, %s15
      %p159 = scmp.lt.s32.totalorder %s15, 3
      %p160 = pnand %p158, %p159
      %p161 = pneg %p160
      // Predicated region
      $region25: #{gcn_vae_forward.6} parent=5 // pred_check
        _
      $region26: #{gcn_vae_forward.6} parent=5 // pred_check_branch
        %163 = sbr.rel (%p160) target = $region28
      $region27: #{gcn_vae_forward.6} parent=5 // pred_region
        %s164 = ssub.s32 %s15, 1
        %s165 = sand.u32 %s42, 1
        %s166 = scalar_lea.sflag [#allocation4], %s165
        %s167 = sand.u32 %s42, 1
        %s168 = smul.addr %s167, 128
        %s169 = scalar_lea.vmem [#allocation3], %s168
        // Predicated region
        $region29: #{gcn_vae_forward.6} parent=27 // pred_check
          %p170 = pneg %p55
        $region30: #{gcn_vae_forward.6} parent=27 // pred_check_branch
          %172 = sbr.rel (%p170) target = $region32
        $region31: #{gcn_vae_forward.6} parent=27 // pred_region
          %173 = dma.done %s166, 2048
        $region32: #{gcn_vae_forward.6} parent=27 // pred_fallthru
          _
        // Predicated region
        $region33: #{gcn_vae_forward.6} parent=27 // pred_check
          %p174 = pneg %p76
        $region34: #{gcn_vae_forward.6} parent=27 // pred_check_branch
          %176 = sbr.rel (%p174) target = $region36
        $region35: #{gcn_vae_forward.6} parent=27 // pred_region
          %177 = dma.done [#allocation7], 2048
        $region36: #{gcn_vae_forward.6} parent=27 // pred_fallthru
          _
        %s178 = sand.u32 %s42, 1
        %s179 = scalar_lea.sflag [#allocation4], %s178
        %s180 = sand.u32 %s42, 1
        %s181 = smul.addr %s180, 128
        %s182 = scalar_lea.vmem [#allocation3], %s181
        %p183 = pneg %p55
        %p184 = pneg %p52
        %p185 = pneg %p76
        %p186 = pneg %p73
        %p187 = pneg %p102
        %p188 = pneg %p99
        %s189 = sand.u32 %s89, 1
        %s190 = scalar_lea.sflag [#allocation5], %s189
        %s191 = sand.u32 %s89, 1
        %s192 = smul.addr %s191, 64
        %s193 = scalar_lea.vmem [#allocation8], %s192
        %s194 = smul.u32 16, %s24
        %s195 = smul.u32 2, %s25
        %s196 = smul.u32 16, %s24
        %p198 = scmp.eq.s32.totalorder %s25, 0
        // Predicated region
        $region37: #{gcn_vae_forward.6} parent=27 // pred_check
          %p199 = pneg %p198
        $region38: #{gcn_vae_forward.6} parent=27 // pred_check_branch
          %201 = sbr.rel (%p199) target = $region40
        $region39: #{gcn_vae_forward.6} parent=27 // pred_region
          %202 = vst [vmem:[#allocation2] sm:$0xff] 0.0
          %203 = vst [vmem:[#allocation2 + $0x8] sm:$0xff] 0.0
          %204 = vst [vmem:[#allocation2 + $0x10] sm:$0xff] 0.0
          %205 = vst [vmem:[#allocation2 + $0x18] sm:$0xff] 0.0
          %206 = vst [vmem:[#allocation2 + $0x20] sm:$0xff] 0.0
          %207 = vst [vmem:[#allocation2 + $0x28] sm:$0xff] 0.0
          %208 = vst [vmem:[#allocation2 + $0x30] sm:$0xff] 0.0
          %209 = vst [vmem:[#allocation2 + $0x38] sm:$0xff] 0.0
          %210 = vst [vmem:[#allocation2 + $0x40] sm:$0xff] 0.0
          %211 = vst [vmem:[#allocation2 + $0x48] sm:$0xff] 0.0
          %212 = vst [vmem:[#allocation2 + $0x50] sm:$0xff] 0.0
          %213 = vst [vmem:[#allocation2 + $0x58] sm:$0xff] 0.0
          %214 = vst [vmem:[#allocation2 + $0x60] sm:$0xff] 0.0
          %215 = vst [vmem:[#allocation2 + $0x68] sm:$0xff] 0.0
          %216 = vst [vmem:[#allocation2 + $0x70] sm:$0xff] 0.0
          %217 = vst [vmem:[#allocation2 + $0x78] sm:$0xff] 0.0
        $region40: #{gcn_vae_forward.6} parent=27 // pred_fallthru
          _
        %v218 = vld [vmem:[#allocation6] sm:$0xf]
        %v219 = vld [vmem:[#allocation6 + $0x4] sm:$0xf]
        %v220 = vld [vmem:[#allocation6 + $0x8] sm:$0xf]
        %v221 = vld [vmem:[#allocation6 + $0xc] sm:$0xf]
        %v222 = vld [vmem:[#allocation6 + $0x10] sm:$0xf]
        %v223 = vld [vmem:[#allocation6 + $0x14] sm:$0xf]
        %v224 = vld [vmem:[#allocation6 + $0x18] sm:$0xf]
        %v225 = vld [vmem:[#allocation6 + $0x1c] sm:$0xf]
        %v226 = vld [vmem:[#allocation6 + $0x20] sm:$0xf]
        %v227 = vld [vmem:[#allocation6 + $0x24] sm:$0xf]
        %v228 = vld [vmem:[#allocation6 + $0x28] sm:$0xf]
        %v229 = vld [vmem:[#allocation6 + $0x2c] sm:$0xf]
        %v230 = vld [vmem:[#allocation6 + $0x30] sm:$0xf]
        %v231 = vld [vmem:[#allocation6 + $0x34] sm:$0xf]
        %v232 = vld [vmem:[#allocation6 + $0x38] sm:$0xf]
        %v233 = vld [vmem:[#allocation6 + $0x3c] sm:$0xf]
        %v234 = vld [vmem:[#allocation6 + $0x40] sm:$0xf]
        %v235 = vld [vmem:[#allocation6 + $0x44] sm:$0xf]
        %v236 = vld [vmem:[#allocation6 + $0x48] sm:$0xf]
        %v237 = vld [vmem:[#allocation6 + $0x4c] sm:$0xf]
        %v238 = vld [vmem:[#allocation6 + $0x50] sm:$0xf]
        %v239 = vld [vmem:[#allocation6 + $0x54] sm:$0xf]
        %v240 = vld [vmem:[#allocation6 + $0x58] sm:$0xf]
        %v241 = vld [vmem:[#allocation6 + $0x5c] sm:$0xf]
        %v242 = vld [vmem:[#allocation6 + $0x60] sm:$0xf]
        %v243 = vld [vmem:[#allocation6 + $0x64] sm:$0xf]
        %v244 = vld [vmem:[#allocation6 + $0x68] sm:$0xf]
        %v245 = vld [vmem:[#allocation6 + $0x6c] sm:$0xf]
        %v246 = vld [vmem:[#allocation6 + $0x70] sm:$0xf]
        %v247 = vld [vmem:[#allocation6 + $0x74] sm:$0xf]
        %v248 = vld [vmem:[#allocation6 + $0x78] sm:$0xf]
        %v249 = vld [vmem:[#allocation6 + $0x7c] sm:$0xf]
        %v250 = vld [vmem:[#allocation2] sm:$0xff]
        %v251 = vld [vmem:[#allocation2 + $0x8] sm:$0xff]
        %v252 = vld [vmem:[#allocation2 + $0x10] sm:$0xff]
        %v253 = vld [vmem:[#allocation2 + $0x18] sm:$0xff]
        %v254 = vld [vmem:[#allocation2 + $0x20] sm:$0xff]
        %v255 = vld [vmem:[#allocation2 + $0x28] sm:$0xff]
        %v256 = vld [vmem:[#allocation2 + $0x30] sm:$0xff]
        %v257 = vld [vmem:[#allocation2 + $0x38] sm:$0xff]
        %v258 = vld [vmem:[#allocation2 + $0x40] sm:$0xff]
        %v259 = vld [vmem:[#allocation2 + $0x48] sm:$0xff]
        %v260 = vld [vmem:[#allocation2 + $0x50] sm:$0xff]
        %v261 = vld [vmem:[#allocation2 + $0x58] sm:$0xff]
        %v262 = vld [vmem:[#allocation2 + $0x60] sm:$0xff]
        %v263 = vld [vmem:[#allocation2 + $0x68] sm:$0xff]
        %v264 = vld [vmem:[#allocation2 + $0x70] sm:$0xff]
        %v265 = vld [vmem:[#allocation2 + $0x78] sm:$0xff]
        %v266 = vld [vmem:[%s169] sm:$0xff]
        %v267 = vld [vmem:[%s169 + $0x8] sm:$0xff]
        %v268 = vld [vmem:[%s169 + $0x10] sm:$0xff]
        %v269 = vld [vmem:[%s169 + $0x18] sm:$0xff]
        %v270 = vld [vmem:[%s169 + $0x20] sm:$0xff]
        %v271 = vld [vmem:[%s169 + $0x28] sm:$0xff]
        %v272 = vld [vmem:[%s169 + $0x30] sm:$0xff]
        %v273 = vld [vmem:[%s169 + $0x38] sm:$0xff]
        %v274 = vld [vmem:[%s169 + $0x40] sm:$0xff]
        %v275 = vld [vmem:[%s169 + $0x48] sm:$0xff]
        %v276 = vld [vmem:[%s169 + $0x50] sm:$0xff]
        %v277 = vld [vmem:[%s169 + $0x58] sm:$0xff]
        %v278 = vld [vmem:[%s169 + $0x60] sm:$0xff]
        %v279 = vld [vmem:[%s169 + $0x68] sm:$0xff]
        %v280 = vld [vmem:[%s169 + $0x70] sm:$0xff]
        %v281 = vld [vmem:[%s169 + $0x78] sm:$0xff]
        %v298 = vunpack.c.l.b16 %v266
        %v299 = vunpack.c.h.b16 %v266
        %v300 = vunpack.c.l.b16 %v267
        %v301 = vunpack.c.h.b16 %v267
        %v302 = vunpack.c.l.b16 %v268
        %v303 = vunpack.c.h.b16 %v268
        %v304 = vunpack.c.l.b16 %v269
        %v305 = vunpack.c.h.b16 %v269
        %v306 = vunpack.c.l.b16 %v270
        %v307 = vunpack.c.h.b16 %v270
        %v308 = vunpack.c.l.b16 %v271
        %v309 = vunpack.c.h.b16 %v271
        %v310 = vunpack.c.l.b16 %v272
        %v311 = vunpack.c.h.b16 %v272
        %v312 = vunpack.c.l.b16 %v273
        %v313 = vunpack.c.h.b16 %v273
        %v314 = vunpack.c.l.b16 %v274
        %v315 = vunpack.c.h.b16 %v274
        %v316 = vunpack.c.l.b16 %v275
        %v317 = vunpack.c.h.b16 %v275
        %v318 = vunpack.c.l.b16 %v276
        %v319 = vunpack.c.h.b16 %v276
        %v320 = vunpack.c.l.b16 %v277
        %v321 = vunpack.c.h.b16 %v277
        %v322 = vunpack.c.l.b16 %v278
        %v323 = vunpack.c.h.b16 %v278
        %v324 = vunpack.c.l.b16 %v279
        %v325 = vunpack.c.h.b16 %v279
        %v326 = vunpack.c.l.b16 %v280
        %v327 = vunpack.c.h.b16 %v280
        %v328 = vunpack.c.l.b16 %v281
        %v329 = vunpack.c.h.b16 %v281
        %v330 = vpack.c.b16 %v300, %v298
        %v331 = vpack.c.b16 %v301, %v299
        %v332 = vpack.c.b16 %v304, %v302
        %v333 = vpack.c.b16 %v305, %v303
        %v334 = vpack.c.b16 %v308, %v306
        %v335 = vpack.c.b16 %v309, %v307
        %v336 = vpack.c.b16 %v312, %v310
        %v337 = vpack.c.b16 %v313, %v311
        %v338 = vpack.c.b16 %v316, %v314
        %v339 = vpack.c.b16 %v317, %v315
        %v340 = vpack.c.b16 %v320, %v318
        %v341 = vpack.c.b16 %v321, %v319
        %v342 = vpack.c.b16 %v324, %v322
        %v343 = vpack.c.b16 %v325, %v323
        %v344 = vpack.c.b16 %v328, %v326
        %v345 = vpack.c.b16 %v329, %v327
        %v394 = vunpack.c.l.b16 %v218
        %v395 = vunpack.c.l.b16 %v219
        %v396 = vunpack.c.l.b16 %v220
        %v397 = vunpack.c.l.b16 %v221
        %v398 = vunpack.c.l.b16 %v222
        %v399 = vunpack.c.l.b16 %v223
        %v400 = vunpack.c.l.b16 %v224
        %v401 = vunpack.c.l.b16 %v225
        %v402 = vunpack.c.l.b16 %v226
        %v403 = vunpack.c.l.b16 %v227
        %v404 = vunpack.c.l.b16 %v228
        %v405 = vunpack.c.l.b16 %v229
        %v406 = vunpack.c.l.b16 %v230
        %v407 = vunpack.c.l.b16 %v231
        %v408 = vunpack.c.l.b16 %v232
        %v409 = vunpack.c.l.b16 %v233
        %v410 = vunpack.c.l.b16 %v234
        %v411 = vunpack.c.l.b16 %v235
        %v412 = vunpack.c.l.b16 %v236
        %v413 = vunpack.c.l.b16 %v237
        %v414 = vunpack.c.l.b16 %v238
        %v415 = vunpack.c.l.b16 %v239
        %v416 = vunpack.c.l.b16 %v240
        %v417 = vunpack.c.l.b16 %v241
        %v418 = vunpack.c.l.b16 %v242
        %v419 = vunpack.c.l.b16 %v243
        %v420 = vunpack.c.l.b16 %v244
        %v421 = vunpack.c.l.b16 %v245
        %v422 = vunpack.c.l.b16 %v246
        %v423 = vunpack.c.l.b16 %v247
        %v424 = vunpack.c.l.b16 %v248
        %v425 = vunpack.c.l.b16 %v249
        %v426 = vpack.c.b16 %v395, %v394
        %v427 = vpack.c.b16 %v397, %v396
        %v428 = vpack.c.b16 %v399, %v398
        %v429 = vpack.c.b16 %v401, %v400
        %v430 = vpack.c.b16 %v403, %v402
        %v431 = vpack.c.b16 %v405, %v404
        %v432 = vpack.c.b16 %v407, %v406
        %v433 = vpack.c.b16 %v409, %v408
        %v434 = vpack.c.b16 %v411, %v410
        %v435 = vpack.c.b16 %v413, %v412
        %v436 = vpack.c.b16 %v415, %v414
        %v437 = vpack.c.b16 %v417, %v416
        %v438 = vpack.c.b16 %v419, %v418
        %v439 = vpack.c.b16 %v421, %v420
        %v440 = vpack.c.b16 %v423, %v422
        %v441 = vpack.c.b16 %v425, %v424
        %458 = vmatprep.subr.bf16.mxu0 0
        %459 = vmatpush1.bf16.msra.mxu0 %v426
        %460 = vmatprep.subr.bf16.mxu0 0
        %461 = vmatpush1.bf16.msra.mxu0 %v427
        %462 = vmatprep.subr.bf16.mxu0 0
        %463 = vmatpush1.bf16.msra.mxu0 %v428
        %464 = vmatprep.subr.bf16.mxu0 0
        %465 = vmatpush1.bf16.msra.mxu0 %v429
        %466 = vmatprep.subr.bf16.mxu0 0
        %467 = vmatpush1.bf16.msra.mxu0 %v430
        %468 = vmatprep.subr.bf16.mxu0 0
        %469 = vmatpush1.bf16.msra.mxu0 %v431
        %470 = vmatprep.subr.bf16.mxu0 0
        %471 = vmatpush1.bf16.msra.mxu0 %v432
        %472 = vmatprep.subr.bf16.mxu0 0
        %473 = vmatpush1.bf16.msra.mxu0 %v433
        %474 = vmatprep.subr.bf16.mxu0 0
        %475 = vmatpush1.bf16.msra.mxu0 %v434
        %476 = vmatprep.subr.bf16.mxu0 0
        %477 = vmatpush1.bf16.msra.mxu0 %v435
        %478 = vmatprep.subr.bf16.mxu0 0
        %479 = vmatpush1.bf16.msra.mxu0 %v436
        %480 = vmatprep.subr.bf16.mxu0 0
        %481 = vmatpush1.bf16.msra.mxu0 %v437
        %482 = vmatprep.subr.bf16.mxu0 0
        %483 = vmatpush1.bf16.msra.mxu0 %v438
        %484 = vmatprep.subr.bf16.mxu0 0
        %485 = vmatpush1.bf16.msra.mxu0 %v439
        %486 = vmatprep.subr.bf16.mxu0 0
        %487 = vmatpush1.bf16.msra.mxu0 %v440
        %488 = vmatprep.subr.bf16.mxu0 0
        %489 = vmatpush1.bf16.msra.mxu0 %v441
        %490 = vmatprep.mubr.bf16.mxu0 %v331
        %491 = vmatmul.mubr.bf16.gmra.mrb[0].mxu0 %v330
        %v492 = vpop.f32.mrb[0].mxu0
        %v493 = vadd.f32 0.0, %v492
        %v494 = vpop.f32.mrb[0].mxu0
        %v495 = vpop.f32.mrb[0].mxu0
        %v496 = vadd.f32 0.0, %v495
        %v497 = vpop.f32.mrb[0].mxu0
        %498 = vmatprep.mubr.bf16.mxu0 %v333
        %499 = vmatmul.mubr.bf16.gmra.mrb[0].mxu0 %v332
        %v500 = vpop.f32.mrb[0].mxu0
        %v501 = vadd.f32 0.0, %v500
        %v502 = vpop.f32.mrb[0].mxu0
        %v503 = vpop.f32.mrb[0].mxu0
        %v504 = vadd.f32 0.0, %v503
        %v505 = vpop.f32.mrb[0].mxu0
        %506 = vmatprep.mubr.bf16.mxu0 %v335
        %507 = vmatmul.mubr.bf16.gmra.mrb[0].mxu0 %v334
        %v508 = vpop.f32.mrb[0].mxu0
        %v509 = vadd.f32 0.0, %v508
        %v510 = vpop.f32.mrb[0].mxu0
        %v511 = vpop.f32.mrb[0].mxu0
        %v512 = vadd.f32 0.0, %v511
        %v513 = vpop.f32.mrb[0].mxu0
        %514 = vmatprep.mubr.bf16.mxu0 %v337
        %515 = vmatmul.mubr.bf16.gmra.mrb[0].mxu0 %v336
        %v516 = vpop.f32.mrb[0].mxu0
        %v517 = vadd.f32 0.0, %v516
        %v518 = vpop.f32.mrb[0].mxu0
        %v519 = vpop.f32.mrb[0].mxu0
        %v520 = vadd.f32 0.0, %v519
        %v521 = vpop.f32.mrb[0].mxu0
        %522 = vmatprep.mubr.bf16.mxu0 %v339
        %523 = vmatmul.mubr.bf16.gmra.mrb[0].mxu0 %v338
        %v524 = vpop.f32.mrb[0].mxu0
        %v525 = vadd.f32 0.0, %v524
        %v526 = vpop.f32.mrb[0].mxu0
        %v527 = vpop.f32.mrb[0].mxu0
        %v528 = vadd.f32 0.0, %v527
        %v529 = vpop.f32.mrb[0].mxu0
        %530 = vmatprep.mubr.bf16.mxu0 %v341
        %531 = vmatmul.mubr.bf16.gmra.mrb[0].mxu0 %v340
        %v532 = vpop.f32.mrb[0].mxu0
        %v533 = vadd.f32 0.0, %v532
        %v534 = vpop.f32.mrb[0].mxu0
        %v535 = vpop.f32.mrb[0].mxu0
        %v536 = vadd.f32 0.0, %v535
        %v537 = vpop.f32.mrb[0].mxu0
        %538 = vmatprep.mubr.bf16.mxu0 %v343
        %539 = vmatmul.mubr.bf16.gmra.mrb[0].mxu0 %v342
        %v540 = vpop.f32.mrb[0].mxu0
        %v541 = vadd.f32 0.0, %v540
        %v542 = vpop.f32.mrb[0].mxu0
        %v543 = vpop.f32.mrb[0].mxu0
        %v544 = vadd.f32 0.0, %v543
        %v545 = vpop.f32.mrb[0].mxu0
        %546 = vmatprep.mubr.bf16.mxu0 %v345
        %547 = vmatmul.mubr.bf16.gmra.mrb[0].mxu0 %v344
        %v548 = vpop.f32.mrb[0].mxu0
        %v549 = vadd.f32 0.0, %v548
        %v550 = vpop.f32.mrb[0].mxu0
        %v551 = vpop.f32.mrb[0].mxu0
        %v552 = vadd.f32 0.0, %v551
        %v553 = vpop.f32.mrb[0].mxu0
        %554 = vdwg.mxu0
        %v555 = vadd.f32 %v250, %v493
        %v556 = vadd.f32 %v251, %v496
        %v557 = vadd.f32 %v252, %v501
        %v558 = vadd.f32 %v253, %v504
        %v559 = vadd.f32 %v254, %v509
        %v560 = vadd.f32 %v255, %v512
        %v561 = vadd.f32 %v256, %v517
        %v562 = vadd.f32 %v257, %v520
        %v563 = vadd.f32 %v258, %v525
        %v564 = vadd.f32 %v259, %v528
        %v565 = vadd.f32 %v260, %v533
        %v566 = vadd.f32 %v261, %v536
        %v567 = vadd.f32 %v262, %v541
        %v568 = vadd.f32 %v263, %v544
        %v569 = vadd.f32 %v264, %v549
        %v570 = vadd.f32 %v265, %v552
        %571 = vst [vmem:[#allocation2] sm:$0xff] %v555
        %572 = vst [vmem:[#allocation2 + $0x8] sm:$0xff] %v556
        %573 = vst [vmem:[#allocation2 + $0x10] sm:$0xff] %v557
        %574 = vst [vmem:[#allocation2 + $0x18] sm:$0xff] %v558
        %575 = vst [vmem:[#allocation2 + $0x20] sm:$0xff] %v559
        %576 = vst [vmem:[#allocation2 + $0x28] sm:$0xff] %v560
        %577 = vst [vmem:[#allocation2 + $0x30] sm:$0xff] %v561
        %578 = vst [vmem:[#allocation2 + $0x38] sm:$0xff] %v562
        %579 = vst [vmem:[#allocation2 + $0x40] sm:$0xff] %v563
        %580 = vst [vmem:[#allocation2 + $0x48] sm:$0xff] %v564
        %581 = vst [vmem:[#allocation2 + $0x50] sm:$0xff] %v565
        %582 = vst [vmem:[#allocation2 + $0x58] sm:$0xff] %v566
        %583 = vst [vmem:[#allocation2 + $0x60] sm:$0xff] %v567
        %584 = vst [vmem:[#allocation2 + $0x68] sm:$0xff] %v568
        %585 = vst [vmem:[#allocation2 + $0x70] sm:$0xff] %v569
        %586 = vst [vmem:[#allocation2 + $0x78] sm:$0xff] %v570
        // Predicated region
        $region41: #{gcn_vae_forward.6} parent=27 // pred_check
          %p587 = pneg %p198
        $region42: #{gcn_vae_forward.6} parent=27 // pred_check_branch
          %589 = sbr.rel (%p587) target = $region44
        $region43: #{gcn_vae_forward.6} parent=27 // pred_region
          %v590 = vld [vmem:[#allocation2] sm:$0xff]
          %v591 = vld [vmem:[#allocation2 + $0x8] sm:$0xff]
          %v592 = vld [vmem:[#allocation2 + $0x10] sm:$0xff]
          %v593 = vld [vmem:[#allocation2 + $0x18] sm:$0xff]
          %v594 = vld [vmem:[#allocation2 + $0x20] sm:$0xff]
          %v595 = vld [vmem:[#allocation2 + $0x28] sm:$0xff]
          %v596 = vld [vmem:[#allocation2 + $0x30] sm:$0xff]
          %v597 = vld [vmem:[#allocation2 + $0x38] sm:$0xff]
          %v598 = vld [vmem:[#allocation2 + $0x40] sm:$0xff]
          %v599 = vld [vmem:[#allocation2 + $0x48] sm:$0xff]
          %v600 = vld [vmem:[#allocation2 + $0x50] sm:$0xff]
          %v601 = vld [vmem:[#allocation2 + $0x58] sm:$0xff]
          %v602 = vld [vmem:[#allocation2 + $0x60] sm:$0xff]
          %v603 = vld [vmem:[#allocation2 + $0x68] sm:$0xff]
          %v604 = vld [vmem:[#allocation2 + $0x70] sm:$0xff]
          %v605 = vld [vmem:[#allocation2 + $0x78] sm:$0xff]
          %v606 = vmax.f32 %v590, 0.0
          %v607 = vmax.f32 %v591, 0.0
          %v608 = vmax.f32 %v592, 0.0
          %v609 = vmax.f32 %v593, 0.0
          %v610 = vmax.f32 %v594, 0.0
          %v611 = vmax.f32 %v595, 0.0
          %v612 = vmax.f32 %v596, 0.0
          %v613 = vmax.f32 %v597, 0.0
          %v614 = vmax.f32 %v598, 0.0
          %v615 = vmax.f32 %v599, 0.0
          %v616 = vmax.f32 %v600, 0.0
          %v617 = vmax.f32 %v601, 0.0
          %v618 = vmax.f32 %v602, 0.0
          %v619 = vmax.f32 %v603, 0.0
          %v620 = vmax.f32 %v604, 0.0
          %v621 = vmax.f32 %v605, 0.0
          %v622 = vpack.c.bf16 %v607, %v606
          %v623 = vpack.c.bf16 %v609, %v608
          %v624 = vpack.c.bf16 %v611, %v610
          %v625 = vpack.c.bf16 %v613, %v612
          %v626 = vpack.c.bf16 %v615, %v614
          %v627 = vpack.c.bf16 %v617, %v616
          %v628 = vpack.c.bf16 %v619, %v618
          %v629 = vpack.c.bf16 %v621, %v620
          %v638 = vunpack.c.l.b16 %v622
          %v639 = vunpack.c.h.b16 %v622
          %v640 = vunpack.c.l.b16 %v623
          %v641 = vunpack.c.h.b16 %v623
          %v642 = vunpack.c.l.b16 %v624
          %v643 = vunpack.c.h.b16 %v624
          %v644 = vunpack.c.l.b16 %v625
          %v645 = vunpack.c.h.b16 %v625
          %v646 = vunpack.c.l.b16 %v626
          %v647 = vunpack.c.h.b16 %v626
          %v648 = vunpack.c.l.b16 %v627
          %v649 = vunpack.c.h.b16 %v627
          %v650 = vunpack.c.l.b16 %v628
          %v651 = vunpack.c.h.b16 %v628
          %v652 = vunpack.c.l.b16 %v629
          %v653 = vunpack.c.h.b16 %v629
          %v654 = vpack.c.b16 %v638, %v638
          %v655 = vpack.c.b16 %v639, %v639
          %v656 = vpack.c.b16 %v640, %v640
          %v657 = vpack.c.b16 %v641, %v641
          %v658 = vpack.c.b16 %v642, %v642
          %v659 = vpack.c.b16 %v643, %v643
          %v660 = vpack.c.b16 %v644, %v644
          %v661 = vpack.c.b16 %v645, %v645
          %v662 = vpack.c.b16 %v646, %v646
          %v663 = vpack.c.b16 %v647, %v647
          %v664 = vpack.c.b16 %v648, %v648
          %v665 = vpack.c.b16 %v649, %v649
          %v666 = vpack.c.b16 %v650, %v650
          %v667 = vpack.c.b16 %v651, %v651
          %v668 = vpack.c.b16 %v652, %v652
          %v669 = vpack.c.b16 %v653, %v653
          %686 = vst [vmem:[%s193] sm:$0xf] %v654
          %687 = vst [vmem:[%s193 + $0x4] sm:$0xf] %v655
          %688 = vst [vmem:[%s193 + $0x8] sm:$0xf] %v656
          %689 = vst [vmem:[%s193 + $0xc] sm:$0xf] %v657
          %690 = vst [vmem:[%s193 + $0x10] sm:$0xf] %v658
          %691 = vst [vmem:[%s193 + $0x14] sm:$0xf] %v659
          %692 = vst [vmem:[%s193 + $0x18] sm:$0xf] %v660
          %693 = vst [vmem:[%s193 + $0x1c] sm:$0xf] %v661
          %694 = vst [vmem:[%s193 + $0x20] sm:$0xf] %v662
          %695 = vst [vmem:[%s193 + $0x24] sm:$0xf] %v663
          %696 = vst [vmem:[%s193 + $0x28] sm:$0xf] %v664
          %697 = vst [vmem:[%s193 + $0x2c] sm:$0xf] %v665
          %698 = vst [vmem:[%s193 + $0x30] sm:$0xf] %v666
          %699 = vst [vmem:[%s193 + $0x34] sm:$0xf] %v667
          %700 = vst [vmem:[%s193 + $0x38] sm:$0xf] %v668
          %701 = vst [vmem:[%s193 + $0x3c] sm:$0xf] %v669
        $region44: #{gcn_vae_forward.6} parent=27 // pred_fallthru
          _
        %s702 = sand.u32 %s89, 1
        %s703 = scalar_lea.sflag [#allocation5], %s702
        %s704 = sand.u32 %s89, 1
        %s705 = smul.addr %s704, 64
        %s706 = scalar_lea.vmem [#allocation8], %s705
        // Predicated region
        $region45: #{gcn_vae_forward.6} parent=27 // pred_check
          %p707 = pneg %p99
        $region46: #{gcn_vae_forward.6} parent=27 // pred_check_branch
          %709 = sbr.rel (%p707) target = $region48
        $region47: #{gcn_vae_forward.6} parent=27 // pred_region
          %s710 = smul.u32 16, %s24
          %s712 = ssub.s32 1024, 1024
          %713 = vsyncadd %s703, %s712
          %s714 = smul.addr %s710, 64
          %s715 = scalar_lea.hbm %s2, %s714
          %s716 = sshll.u32 %s706, 4
          %s717 = int_to_ptr.vmem [resolvable:$true] %s716
          %722 = dma.vmem_to_hbm [thread:$0]  %s717, 1024, %s715, %s703, 64, 64, 4
        $region48: #{gcn_vae_forward.6} parent=27 // pred_fallthru
          _
      $region28: #{gcn_vae_forward.6} parent=5 // pred_fallthru
        _
      %p723 = scmp.le.s32.totalorder 2, %s15
      // Predicated region
      $region49: #{gcn_vae_forward.6} parent=5 // pred_check
        %p724 = pneg %p723
      $region50: #{gcn_vae_forward.6} parent=5 // pred_check_branch
        %726 = sbr.rel (%p724) target = $region52
      $region51: #{gcn_vae_forward.6} parent=5 // pred_region
        %s727 = ssub.s32 %s15, 2
        // Predicated region
        $region53: #{gcn_vae_forward.6} parent=51 // pred_check
          %p728 = pneg %p105
        $region54: #{gcn_vae_forward.6} parent=51 // pred_check_branch
          %730 = sbr.rel (%p728) target = $region56
        $region55: #{gcn_vae_forward.6} parent=51 // pred_region
          %s731 = sand.u32 %s90, 1
          %s732 = scalar_lea.sflag [#allocation5], %s731
          %s733 = sand.u32 %s90, 1
          %s734 = smul.addr %s733, 64
          %s735 = scalar_lea.vmem [#allocation8], %s734
          %736 = dma.done %s732, 1024
        $region56: #{gcn_vae_forward.6} parent=51 // pred_fallthru
          _
      $region52: #{gcn_vae_forward.6} parent=5 // pred_fallthru
        _
    $region6: #{gcn_vae_forward.6} parent=1 // loop_footer
      %s19 = sadd.s32 1, %s15
    $region7: #{gcn_vae_forward.6} parent=1 // loop_footer_branch
      %14 = sbr.rel target = $region3
    $region8: #{gcn_vae_forward.6} parent=1 // loop_exit
      _
    %737 = vsyncpa [#allocation4], 1
    %s738 = scalar_lea.sflag [#allocation4], 1
    %739 = vsyncpa %s738, 1
    %740 = vsyncpa [#allocation7], 1
    %741 = vsyncpa [#allocation5], 1
    %s742 = scalar_lea.sflag [#allocation5], 1
    %743 = vsyncpa %s742, 1

// kernel: gcn_vae_forward.8
$region0: #{gcn_vae_forward.8}
  #allocation0 [shape = 'u32[]', space=smem, size = 0x4, offset = 0x4, fixed_abs, tag = 'smem constant byte address 0x4 - core index']
  #allocation1 [shape = 'u32[144,128]{1,0:T(1,128)}', space=vmem, size = 0x12000, scoped, tag = 'internal scratch']
  #allocation2 [shape = 'f32[128,256]{1,0:T(8,128)}', space=vmem, size = 0x20000, scoped, tag = 'scratch operand']
  %s0 = inlined_call_operand.hbm [shape: bf16[256,256], index: 0, kind: input, shape index: {}]
  %s1 = inlined_call_operand.hbm [shape: bf16[256,256], index: 1, kind: input, shape index: {}]
  %s2 = inlined_call_operand.hbm [shape: f32[256,128], index: 2, kind: input, shape index: {}]
  %s3 = inlined_call_operand.hbm [shape: f32[256,128], index: 3, kind: output, shape index: {0}]
  %s4 = inlined_call_operand.hbm [shape: bf16[256,128], index: 4, kind: output, shape index: {1}]
  %5 = xla_tuple %s3, %s4
  %s6 = sld [smem:[#allocation0]]
  $region73: #{gcn_vae_forward.8} parent=0
    _
  %s8 = ssub.s32 1, %s6
  %s9 = scalar_select 0, %s8, %s6
  $region1: #{gcn_vae_forward.8} parent=0
    #allocation3 [shape = 'u8[131072]{0}', space=vmem, size = 0x20000, scoped, tag = 'input window, operand 0']
    #allocation4 [shape = 's32[2]{0}', space=sflag, size = 0x8, scoped, tag = 'scoped memory for gcn_vae_forward.8']
    #allocation5 [shape = 's32[2]{0}', space=sflag, size = 0x8, scoped, tag = 'scoped memory for gcn_vae_forward.8']
    #allocation6 [shape = 'u8[131072]{0}', space=vmem, size = 0x20000, scoped, tag = 'input window, operand 1, single buffered']
    #allocation7 [shape = 's32[1]{0}', space=sflag, size = 0x4, scoped, tag = 'scoped memory for gcn_vae_forward.8']
    #allocation8 [shape = 'u8[131072]{0}', space=vmem, size = 0x20000, scoped, tag = 'input window, operand 2']
    #allocation9 [shape = 'u8[131072]{0}', space=vmem, size = 0x20000, scoped, tag = 'output window, operand 0']
    #allocation10 [shape = 'u8[65536]{0}', space=vmem, size = 0x10000, scoped, tag = 'output window, operand 1']
    #allocation11 [shape = 's32[2]{0}', space=sflag, size = 0x8, scoped, tag = 'scoped memory for gcn_vae_forward.8']
    %10 = vsyncpa [#allocation4], 0
    %s11 = scalar_lea.sflag [#allocation4], 1
    %12 = vsyncpa %s11, 0
    %13 = vsyncpa [#allocation7], 0
    %14 = vsyncpa [#allocation5], 0
    %s15 = scalar_lea.sflag [#allocation5], 1
    %16 = vsyncpa %s15, 0
    %17 = vsyncpa [#allocation11], 0
    %s18 = scalar_lea.sflag [#allocation11], 1
    %19 = vsyncpa %s18, 0
    loop: start=0, step=1, limit=4
    $region2: #{gcn_vae_forward.8} parent=1 // loop_pre_header
      _
    $region3: #{gcn_vae_forward.8} parent=1 // loop_header
      %s21 = sphi 0, %s25
      %p22 = scmp.ge.s32.totalorder %s21, 4
      %s28 = sphi 0, %s40
      %s29 = sphi 0, %s36
      %s30 = sphi 0, %s28
      %s31 = sphi 0, %s29
      %s32 = sphi 0, %s30
      %s33 = sphi 0, %s31
      %s45 = sphi 0, %s47
      %s48 = sphi 0, %s45
      %s49 = sphi 0, %s48
      %s65 = sphi 0, %s49
      %s69 = sphi 0, %s69
      %s71 = sphi 0, %s69
      %s72 = sphi 0, %s71
      %s86 = sphi 0, %s72
      %s92 = sphi 0, %s94
      %s95 = sphi 0, %s92
      %s96 = sphi 0, %s95
      %s112 = sphi 0, %s96
      %s118 = sphi 0, %s120
      %s121 = sphi 0, %s118
      %s122 = sphi 0, %s121
      %s138 = sphi 0, %s122
      %s144 = sphi 0, %s146
      %s147 = sphi 0, %s144
      %s148 = sphi 0, %s147
      %s164 = sphi 0, %s148
    $region4: #{gcn_vae_forward.8} parent=1 // loop_header_branch
      %24 = sbr.rel (%p22) target = $region8
    $region5: #{gcn_vae_forward.8} parent=1 // loop_body
      %s26 = ssub.s32 %s21, 1
      %s27 = ssub.s32 %s21, 2
      %s34 = sadd.s32 1, %s29
      %p35 = scmp.ge.s32.totalorder %s34, 1
      %s36 = scalar_select %p35, 0, %s34
      %s37 = sadd.s32 1, %s28
      %s38 = scalar_select %p35, %s37, %s28
      %p39 = scmp.ge.s32.totalorder %s38, 2
      %s40 = scalar_select %p39, 0, %s38
      %s41 = ssub.s32 %s28, %s40
      %s42 = ssub.s32 %s29, %s36
      %s43 = sor.u32 %s41, %s42
      %p44 = scmp.eq.s32.totalorder %s43, 0
      %s46 = sadd.s32 %s45, 1
      %s47 = scalar_select %p44, %s45, %s46
      %p50 = pneg %p44
      %p51 = scmp.eq.s32.totalorder %s21, 1
      %p52 = por %p50, %p51
      %p53 = scmp.ne.s32.totalorder %s45, %s48
      %p54 = scmp.eq.s32.totalorder %s21, 0
      %p55 = por %p53, %p54
      %p56 = scmp.ne.s32.totalorder %s45, %s48
      %p57 = scmp.eq.s32.totalorder %s26, 1
      %p58 = por %p56, %p57
      %p59 = scmp.ne.s32.totalorder %s48, %s49
      %p60 = scmp.eq.s32.totalorder %s26, 0
      %p61 = por %p59, %p60
      %p62 = scmp.ne.s32.totalorder %s48, %s49
      %p63 = scmp.eq.s32.totalorder %s27, 1
      %p64 = por %p62, %p63
      %p66 = scmp.ne.s32.totalorder %s49, %s65
      %p67 = scmp.eq.s32.totalorder %s27, 0
      %p68 = por %p66, %p67
      %s70 = sadd.s32 %s69, 1
      %p73 = scmp.eq.s32.totalorder %s21, 1
      %p74 = scmp.ne.s32.totalorder %s69, %s71
      %p75 = scmp.eq.s32.totalorder %s21, 0
      %p76 = por %p74, %p75
      %p77 = scmp.ne.s32.totalorder %s69, %s71
      %p78 = scmp.eq.s32.totalorder %s26, 1
      %p79 = por %p77, %p78
      %p80 = scmp.ne.s32.totalorder %s71, %s72
      %p81 = scmp.eq.s32.totalorder %s26, 0
      %p82 = por %p80, %p81
      %p83 = scmp.ne.s32.totalorder %s71, %s72
      %p84 = scmp.eq.s32.totalorder %s27, 1
      %p85 = por %p83, %p84
      %p87 = scmp.ne.s32.totalorder %s72, %s86
      %p88 = scmp.eq.s32.totalorder %s27, 0
      %p89 = por %p87, %p88
      %s90 = ssub.s32 %s28, %s40
      %p91 = scmp.eq.s32.totalorder %s90, 0
      %s93 = sadd.s32 %s92, 1
      %s94 = scalar_select %p91, %s92, %s93
      %p97 = pneg %p91
      %p98 = scmp.eq.s32.totalorder %s21, 1
      %p99 = por %p97, %p98
      %p100 = scmp.ne.s32.totalorder %s92, %s95
      %p101 = scmp.eq.s32.totalorder %s21, 0
      %p102 = por %p100, %p101
      %p103 = scmp.ne.s32.totalorder %s92, %s95
      %p104 = scmp.eq.s32.totalorder %s26, 1
      %p105 = por %p103, %p104
      %p106 = scmp.ne.s32.totalorder %s95, %s96
      %p107 = scmp.eq.s32.totalorder %s26, 0
      %p108 = por %p106, %p107
      %p109 = scmp.ne.s32.totalorder %s95, %s96
      %p110 = scmp.eq.s32.totalorder %s27, 1
      %p111 = por %p109, %p110
      %p113 = scmp.ne.s32.totalorder %s96, %s112
      %p114 = scmp.eq.s32.totalorder %s27, 0
      %p115 = por %p113, %p114
      %s116 = ssub.s32 %s28, %s40
      %p117 = scmp.eq.s32.totalorder %s116, 0
      %s119 = sadd.s32 %s118, 1
      %s120 = scalar_select %p117, %s118, %s119
      %p123 = pneg %p117
      %p124 = scmp.eq.s32.totalorder %s21, 1
      %p125 = por %p123, %p124
      %p126 = scmp.ne.s32.totalorder %s118, %s121
      %p127 = scmp.eq.s32.totalorder %s21, 0
      %p128 = por %p126, %p127
      %p129 = scmp.ne.s32.totalorder %s118, %s121
      %p130 = scmp.eq.s32.totalorder %s26, 1
      %p131 = por %p129, %p130
      %p132 = scmp.ne.s32.totalorder %s121, %s122
      %p133 = scmp.eq.s32.totalorder %s26, 0
      %p134 = por %p132, %p133
      %p135 = scmp.ne.s32.totalorder %s121, %s122
      %p136 = scmp.eq.s32.totalorder %s27, 1
      %p137 = por %p135, %p136
      %p139 = scmp.ne.s32.totalorder %s122, %s138
      %p140 = scmp.eq.s32.totalorder %s27, 0
      %p141 = por %p139, %p140
      %s142 = ssub.s32 %s28, %s40
      %p143 = scmp.eq.s32.totalorder %s142, 0
      %s145 = sadd.s32 %s144, 1
      %s146 = scalar_select %p143, %s144, %s145
      %p149 = pneg %p143
      %p150 = scmp.eq.s32.totalorder %s21, 1
      %p151 = por %p149, %p150
      %p152 = scmp.ne.s32.totalorder %s144, %s147
      %p153 = scmp.eq.s32.totalorder %s21, 0
      %p154 = por %p152, %p153
      %p155 = scmp.ne.s32.totalorder %s144, %s147
      %p156 = scmp.eq.s32.totalorder %s26, 1
      %p157 = por %p155, %p156
      %p158 = scmp.ne.s32.totalorder %s147, %s148
      %p159 = scmp.eq.s32.totalorder %s26, 0
      %p160 = por %p158, %p159
      %p161 = scmp.ne.s32.totalorder %s147, %s148
      %p162 = scmp.eq.s32.totalorder %s27, 1
      %p163 = por %p161, %p162
      %p165 = scmp.ne.s32.totalorder %s148, %s164
      %p166 = scmp.eq.s32.totalorder %s27, 0
      %p167 = por %p165, %p166
      %p168 = scmp.le.s32.totalorder 1, %s21
      %p169 = scmp.lt.s32.totalorder %s21, 3
      %p170 = pnand %p168, %p169
      %p171 = pneg %p170
      // Predicated region
      $region9: #{gcn_vae_forward.8} parent=5 // pred_check
        _
      $region10: #{gcn_vae_forward.8} parent=5 // pred_check_branch
        %173 = sbr.rel (%p170) target = $region12
      $region11: #{gcn_vae_forward.8} parent=5 // pred_region
        %s174 = ssub.s32 %s21, 1
        // Predicated region
        $region13: #{gcn_vae_forward.8} parent=11 // pred_check
          %p175 = pneg %p82
        $region14: #{gcn_vae_forward.8} parent=11 // pred_check_branch
          %177 = sbr.rel (%p175) target = $region16
        $region15: #{gcn_vae_forward.8} parent=11 // pred_region
          %s179 = ssub.s32 4096, 4096
          %180 = vsyncadd [#allocation7], %s179
          %s181 = sshll.u32 [#allocation6], 4
          %s182 = int_to_ptr.vmem [resolvable:$true] %s181
          %187 = dma.hbm_to_vmem [thread:$0]  %s1, 4096, %s182, [#allocation7], 128, 128, 8
        $region16: #{gcn_vae_forward.8} parent=11 // pred_fallthru
          _
      $region12: #{gcn_vae_forward.8} parent=5 // pred_fallthru
        _
      %p188 = scmp.lt.s32.totalorder %s21, 2
      // Predicated region
      $region17: #{gcn_vae_forward.8} parent=5 // pred_check
        %p189 = pneg %p188
      $region18: #{gcn_vae_forward.8} parent=5 // pred_check_branch
        %191 = sbr.rel (%p189) target = $region20
      $region19: #{gcn_vae_forward.8} parent=5 // pred_region
        // Predicated region
        $region21: #{gcn_vae_forward.8} parent=19 // pred_check
          %p192 = pneg %p55
        $region22: #{gcn_vae_forward.8} parent=19 // pred_check_branch
          %194 = sbr.rel (%p192) target = $region24
        $region23: #{gcn_vae_forward.8} parent=19 // pred_region
          %s195 = sand.u32 %s21, 1
          %s196 = scalar_lea.sflag [#allocation4], %s195
          %s197 = sand.u32 %s45, 1
          %s198 = smul.addr %s197, 128
          %s199 = scalar_lea.vmem [#allocation3], %s198
          %s200 = smul.u32 16, %s28
          %s201 = smul.u32 2, %s29
          %s203 = ssub.s32 2048, 2048
          %204 = vsyncadd %s196, %s203
          %s205 = smul.addr %s200, 2
          %s206 = sadd.s32 %s201, %s205
          %s207 = smul.addr %s206, 64
          %s208 = scalar_lea.hbm %s0, %s207
          %s209 = sshll.u32 %s199, 4
          %s210 = int_to_ptr.vmem [resolvable:$true] %s209
          %215 = dma.hbm_to_vmem [thread:$0]  %s208, 2048, %s210, %s196, 128, 128, 8
        $region24: #{gcn_vae_forward.8} parent=19 // pred_fallthru
          _
        // Predicated region
        $region25: #{gcn_vae_forward.8} parent=19 // pred_check
          %p216 = pneg %p102
        $region26: #{gcn_vae_forward.8} parent=19 // pred_check_branch
          %218 = sbr.rel (%p216) target = $region28
        $region27: #{gcn_vae_forward.8} parent=19 // pred_region
          %s219 = sand.u32 %s21, 1
          %s220 = scalar_lea.sflag [#allocation4], %s219
          %s221 = sand.u32 %s92, 1
          %s222 = smul.addr %s221, 128
          %s223 = scalar_lea.vmem [#allocation8], %s222
          %s224 = smul.u32 16, %s28
          %s226 = ssub.s32 2048, 2048
          %227 = vsyncadd %s220, %s226
          %s228 = smul.addr %s224, 128
          %s229 = scalar_lea.hbm %s2, %s228
          %s230 = sshll.u32 %s223, 4
          %s231 = int_to_ptr.vmem [resolvable:$true] %s230
          %236 = dma.hbm_to_vmem [thread:$0]  %s229, 2048, %s231, %s220, 128, 128, 8
        $region28: #{gcn_vae_forward.8} parent=19 // pred_fallthru
          _
      $region20: #{gcn_vae_forward.8} parent=5 // pred_fallthru
        _
      %p237 = scmp.le.s32.totalorder 1, %s21
      %p238 = scmp.lt.s32.totalorder %s21, 3
      %p239 = pnand %p237, %p238
      %p240 = pneg %p239
      // Predicated region
      $region29: #{gcn_vae_forward.8} parent=5 // pred_check
        _
      $region30: #{gcn_vae_forward.8} parent=5 // pred_check_branch
        %242 = sbr.rel (%p239) target = $region32
      $region31: #{gcn_vae_forward.8} parent=5 // pred_region
        %s243 = ssub.s32 %s21, 1
        %s244 = sand.u32 %s26, 1
        %s245 = scalar_lea.sflag [#allocation4], %s244
        %s246 = sand.u32 %s48, 1
        %s247 = smul.addr %s246, 128
        %s248 = scalar_lea.vmem [#allocation3], %s247
        // Predicated region
        $region33: #{gcn_vae_forward.8} parent=31 // pred_check
          %p249 = pneg %p61
        $region34: #{gcn_vae_forward.8} parent=31 // pred_check_branch
          %251 = sbr.rel (%p249) target = $region36
        $region35: #{gcn_vae_forward.8} parent=31 // pred_region
          %252 = dma.done %s245, 2048
        $region36: #{gcn_vae_forward.8} parent=31 // pred_fallthru
          _
        // Predicated region
        $region37: #{gcn_vae_forward.8} parent=31 // pred_check
          %p253 = pneg %p82
        $region38: #{gcn_vae_forward.8} parent=31 // pred_check_branch
          %255 = sbr.rel (%p253) target = $region40
        $region39: #{gcn_vae_forward.8} parent=31 // pred_region
          %256 = dma.done [#allocation7], 4096
        $region40: #{gcn_vae_forward.8} parent=31 // pred_fallthru
          _
        %s257 = sand.u32 %s26, 1
        %s258 = scalar_lea.sflag [#allocation4], %s257
        %s259 = sand.u32 %s95, 1
        %s260 = smul.addr %s259, 128
        %s261 = scalar_lea.vmem [#allocation8], %s260
        // Predicated region
        $region41: #{gcn_vae_forward.8} parent=31 // pred_check
          %p262 = pneg %p108
        $region42: #{gcn_vae_forward.8} parent=31 // pred_check_branch
          %264 = sbr.rel (%p262) target = $region44
        $region43: #{gcn_vae_forward.8} parent=31 // pred_region
          %265 = dma.done %s258, 2048
        $region44: #{gcn_vae_forward.8} parent=31 // pred_fallthru
          _
        %s266 = sand.u32 %s26, 1
        %s267 = scalar_lea.sflag [#allocation4], %s266
        %s268 = sand.u32 %s48, 1
        %s269 = smul.addr %s268, 128
        %s270 = scalar_lea.vmem [#allocation3], %s269
        %p271 = pneg %p61
        %p272 = pneg %p58
        %p273 = pneg %p82
        %p274 = pneg %p79
        %s275 = sand.u32 %s26, 1
        %s276 = scalar_lea.sflag [#allocation4], %s275
        %s277 = sand.u32 %s95, 1
        %s278 = smul.addr %s277, 128
        %s279 = scalar_lea.vmem [#allocation8], %s278
        %p280 = pneg %p108
        %p281 = pneg %p105
        %p282 = pneg %p134
        %p283 = pneg %p131
        %s284 = sand.u32 %s121, 1
        %s285 = scalar_lea.sflag [#allocation5], %s284
        %s286 = sand.u32 %s121, 1
        %s287 = smul.addr %s286, 128
        %s288 = scalar_lea.vmem [#allocation9], %s287
        %p289 = pneg %p160
        %p290 = pneg %p157
        %s291 = sand.u32 %s147, 1
        %s292 = scalar_lea.sflag [#allocation11], %s291
        %s293 = sand.u32 %s147, 1
        %s294 = smul.addr %s293, 64
        %s295 = scalar_lea.vmem [#allocation10], %s294
        %s296 = smul.u32 16, %s30
        %s297 = smul.u32 2, %s31
        %s298 = smul.u32 16, %s30
        %s299 = smul.u32 16, %s30
        %s300 = smul.u32 16, %s30
        %p301 = scmp.eq.s32.totalorder %s31, 0
        // Predicated region
        $region45: #{gcn_vae_forward.8} parent=31 // pred_check
          %p302 = pneg %p301
        $region46: #{gcn_vae_forward.8} parent=31 // pred_check_branch
          %304 = sbr.rel (%p302) target = $region48
        $region47: #{gcn_vae_forward.8} parent=31 // pred_region
          %305 = vst [vmem:[#allocation2] sm:$0xff] 0.0
          %306 = vst [vmem:[#allocation2 + $0x8] sm:$0xff] 0.0
          %307 = vst [vmem:[#allocation2 + $0x10] sm:$0xff] 0.0
          %308 = vst [vmem:[#allocation2 + $0x18] sm:$0xff] 0.0
          %309 = vst [vmem:[#allocation2 + $0x20] sm:$0xff] 0.0
          %310 = vst [vmem:[#allocation2 + $0x28] sm:$0xff] 0.0
          %311 = vst [vmem:[#allocation2 + $0x30] sm:$0xff] 0.0
          %312 = vst [vmem:[#allocation2 + $0x38] sm:$0xff] 0.0
          %313 = vst [vmem:[#allocation2 + $0x40] sm:$0xff] 0.0
          %314 = vst [vmem:[#allocation2 + $0x48] sm:$0xff] 0.0
          %315 = vst [vmem:[#allocation2 + $0x50] sm:$0xff] 0.0
          %316 = vst [vmem:[#allocation2 + $0x58] sm:$0xff] 0.0
          %317 = vst [vmem:[#allocation2 + $0x60] sm:$0xff] 0.0
          %318 = vst [vmem:[#allocation2 + $0x68] sm:$0xff] 0.0
          %319 = vst [vmem:[#allocation2 + $0x70] sm:$0xff] 0.0
          %320 = vst [vmem:[#allocation2 + $0x78] sm:$0xff] 0.0
          %321 = vst [vmem:[#allocation2 + $0x80] sm:$0xff] 0.0
          %322 = vst [vmem:[#allocation2 + $0x88] sm:$0xff] 0.0
          %323 = vst [vmem:[#allocation2 + $0x90] sm:$0xff] 0.0
          %324 = vst [vmem:[#allocation2 + $0x98] sm:$0xff] 0.0
          %325 = vst [vmem:[#allocation2 + $0xa0] sm:$0xff] 0.0
          %326 = vst [vmem:[#allocation2 + $0xa8] sm:$0xff] 0.0
          %327 = vst [vmem:[#allocation2 + $0xb0] sm:$0xff] 0.0
          %328 = vst [vmem:[#allocation2 + $0xb8] sm:$0xff] 0.0
          %329 = vst [vmem:[#allocation2 + $0xc0] sm:$0xff] 0.0
          %330 = vst [vmem:[#allocation2 + $0xc8] sm:$0xff] 0.0
          %331 = vst [vmem:[#allocation2 + $0xd0] sm:$0xff] 0.0
          %332 = vst [vmem:[#allocation2 + $0xd8] sm:$0xff] 0.0
          %333 = vst [vmem:[#allocation2 + $0xe0] sm:$0xff] 0.0
          %334 = vst [vmem:[#allocation2 + $0xe8] sm:$0xff] 0.0
          %335 = vst [vmem:[#allocation2 + $0xf0] sm:$0xff] 0.0
          %336 = vst [vmem:[#allocation2 + $0xf8] sm:$0xff] 0.0
        $region48: #{gcn_vae_forward.8} parent=31 // pred_fallthru
          _
        %v337 = vld [vmem:[#allocation6] sm:$0xff]
        %v338 = vld [vmem:[#allocation6 + $0x8] sm:$0xff]
        %v339 = vld [vmem:[#allocation6 + $0x10] sm:$0xff]
        %v340 = vld [vmem:[#allocation6 + $0x18] sm:$0xff]
        %v341 = vld [vmem:[#allocation6 + $0x20] sm:$0xff]
        %v342 = vld [vmem:[#allocation6 + $0x28] sm:$0xff]
        %v343 = vld [vmem:[#allocation6 + $0x30] sm:$0xff]
        %v344 = vld [vmem:[#allocation6 + $0x38] sm:$0xff]
        %v345 = vld [vmem:[#allocation6 + $0x40] sm:$0xff]
        %v346 = vld [vmem:[#allocation6 + $0x48] sm:$0xff]
        %v347 = vld [vmem:[#allocation6 + $0x50] sm:$0xff]
        %v348 = vld [vmem:[#allocation6 + $0x58] sm:$0xff]
        %v349 = vld [vmem:[#allocation6 + $0x60] sm:$0xff]
        %v350 = vld [vmem:[#allocation6 + $0x68] sm:$0xff]
        %v351 = vld [vmem:[#allocation6 + $0x70] sm:$0xff]
        %v352 = vld [vmem:[#allocation6 + $0x78] sm:$0xff]
        %v353 = vld [vmem:[#allocation6 + $0x80] sm:$0xff]
        %v354 = vld [vmem:[#allocation6 + $0x88] sm:$0xff]
        %v355 = vld [vmem:[#allocation6 + $0x90] sm:$0xff]
        %v356 = vld [vmem:[#allocation6 + $0x98] sm:$0xff]
        %v357 = vld [vmem:[#allocation6 + $0xa0] sm:$0xff]
        %v358 = vld [vmem:[#allocation6 + $0xa8] sm:$0xff]
        %v359 = vld [vmem:[#allocation6 + $0xb0] sm:$0xff]
        %v360 = vld [vmem:[#allocation6 + $0xb8] sm:$0xff]
        %v361 = vld [vmem:[#allocation6 + $0xc0] sm:$0xff]
        %v362 = vld [vmem:[#allocation6 + $0xc8] sm:$0xff]
        %v363 = vld [vmem:[#allocation6 + $0xd0] sm:$0xff]
        %v364 = vld [vmem:[#allocation6 + $0xd8] sm:$0xff]
        %v365 = vld [vmem:[#allocation6 + $0xe0] sm:$0xff]
        %v366 = vld [vmem:[#allocation6 + $0xe8] sm:$0xff]
        %v367 = vld [vmem:[#allocation6 + $0xf0] sm:$0xff]
        %v368 = vld [vmem:[#allocation6 + $0xf8] sm:$0xff]
        %v369 = vld [vmem:[#allocation2] sm:$0xff]
        %v370 = vld [vmem:[#allocation2 + $0x8] sm:$0xff]
        %v371 = vld [vmem:[#allocation2 + $0x10] sm:$0xff]
        %v372 = vld [vmem:[#allocation2 + $0x18] sm:$0xff]
        %v373 = vld [vmem:[#allocation2 + $0x20] sm:$0xff]
        %v374 = vld [vmem:[#allocation2 + $0x28] sm:$0xff]
        %v375 = vld [vmem:[#allocation2 + $0x30] sm:$0xff]
        %v376 = vld [vmem:[#allocation2 + $0x38] sm:$0xff]
        %v377 = vld [vmem:[#allocation2 + $0x40] sm:$0xff]
        %v378 = vld [vmem:[#allocation2 + $0x48] sm:$0xff]
        %v379 = vld [vmem:[#allocation2 + $0x50] sm:$0xff]
        %v380 = vld [vmem:[#allocation2 + $0x58] sm:$0xff]
        %v381 = vld [vmem:[#allocation2 + $0x60] sm:$0xff]
        %v382 = vld [vmem:[#allocation2 + $0x68] sm:$0xff]
        %v383 = vld [vmem:[#allocation2 + $0x70] sm:$0xff]
        %v384 = vld [vmem:[#allocation2 + $0x78] sm:$0xff]
        %v385 = vld [vmem:[#allocation2 + $0x80] sm:$0xff]
        %v386 = vld [vmem:[#allocation2 + $0x88] sm:$0xff]
        %v387 = vld [vmem:[#allocation2 + $0x90] sm:$0xff]
        %v388 = vld [vmem:[#allocation2 + $0x98] sm:$0xff]
        %v389 = vld [vmem:[#allocation2 + $0xa0] sm:$0xff]
        %v390 = vld [vmem:[#allocation2 + $0xa8] sm:$0xff]
        %v391 = vld [vmem:[#allocation2 + $0xb0] sm:$0xff]
        %v392 = vld [vmem:[#allocation2 + $0xb8] sm:$0xff]
        %v393 = vld [vmem:[#allocation2 + $0xc0] sm:$0xff]
        %v394 = vld [vmem:[#allocation2 + $0xc8] sm:$0xff]
        %v395 = vld [vmem:[#allocation2 + $0xd0] sm:$0xff]
        %v396 = vld [vmem:[#allocation2 + $0xd8] sm:$0xff]
        %v397 = vld [vmem:[#allocation2 + $0xe0] sm:$0xff]
        %v398 = vld [vmem:[#allocation2 + $0xe8] sm:$0xff]
        %v399 = vld [vmem:[#allocation2 + $0xf0] sm:$0xff]
        %v400 = vld [vmem:[#allocation2 + $0xf8] sm:$0xff]
        %v401 = vld [vmem:[%s248] sm:$0xff]
        %v402 = vld [vmem:[%s248 + $0x8] sm:$0xff]
        %v403 = vld [vmem:[%s248 + $0x10] sm:$0xff]
        %v404 = vld [vmem:[%s248 + $0x18] sm:$0xff]
        %v405 = vld [vmem:[%s248 + $0x20] sm:$0xff]
        %v406 = vld [vmem:[%s248 + $0x28] sm:$0xff]
        %v407 = vld [vmem:[%s248 + $0x30] sm:$0xff]
        %v408 = vld [vmem:[%s248 + $0x38] sm:$0xff]
        %v409 = vld [vmem:[%s248 + $0x40] sm:$0xff]
        %v410 = vld [vmem:[%s248 + $0x48] sm:$0xff]
        %v411 = vld [vmem:[%s248 + $0x50] sm:$0xff]
        %v412 = vld [vmem:[%s248 + $0x58] sm:$0xff]
        %v413 = vld [vmem:[%s248 + $0x60] sm:$0xff]
        %v414 = vld [vmem:[%s248 + $0x68] sm:$0xff]
        %v415 = vld [vmem:[%s248 + $0x70] sm:$0xff]
        %v416 = vld [vmem:[%s248 + $0x78] sm:$0xff]
        %v433 = vunpack.c.l.b16 %v401
        %v434 = vunpack.c.h.b16 %v401
        %v435 = vunpack.c.l.b16 %v402
        %v436 = vunpack.c.h.b16 %v402
        %v437 = vunpack.c.l.b16 %v403
        %v438 = vunpack.c.h.b16 %v403
        %v439 = vunpack.c.l.b16 %v404
        %v440 = vunpack.c.h.b16 %v404
        %v441 = vunpack.c.l.b16 %v405
        %v442 = vunpack.c.h.b16 %v405
        %v443 = vunpack.c.l.b16 %v406
        %v444 = vunpack.c.h.b16 %v406
        %v445 = vunpack.c.l.b16 %v407
        %v446 = vunpack.c.h.b16 %v407
        %v447 = vunpack.c.l.b16 %v408
        %v448 = vunpack.c.h.b16 %v408
        %v449 = vunpack.c.l.b16 %v409
        %v450 = vunpack.c.h.b16 %v409
        %v451 = vunpack.c.l.b16 %v410
        %v452 = vunpack.c.h.b16 %v410
        %v453 = vunpack.c.l.b16 %v411
        %v454 = vunpack.c.h.b16 %v411
        %v455 = vunpack.c.l.b16 %v412
        %v456 = vunpack.c.h.b16 %v412
        %v457 = vunpack.c.l.b16 %v413
        %v458 = vunpack.c.h.b16 %v413
        %v459 = vunpack.c.l.b16 %v414
        %v460 = vunpack.c.h.b16 %v414
        %v461 = vunpack.c.l.b16 %v415
        %v462 = vunpack.c.h.b16 %v415
        %v463 = vunpack.c.l.b16 %v416
        %v464 = vunpack.c.h.b16 %v416
        %v465 = vpack.c.b16 %v435, %v433
        %v466 = vpack.c.b16 %v436, %v434
        %v467 = vpack.c.b16 %v439, %v437
        %v468 = vpack.c.b16 %v440, %v438
        %v469 = vpack.c.b16 %v443, %v441
        %v470 = vpack.c.b16 %v444, %v442
        %v471 = vpack.c.b16 %v447, %v445
        %v472 = vpack.c.b16 %v448, %v446
        %v473 = vpack.c.b16 %v451, %v449
        %v474 = vpack.c.b16 %v452, %v450
        %v475 = vpack.c.b16 %v455, %v453
        %v476 = vpack.c.b16 %v456, %v454
        %v477 = vpack.c.b16 %v459, %v457
        %v478 = vpack.c.b16 %v460, %v458
        %v479 = vpack.c.b16 %v463, %v461
        %v480 = vpack.c.b16 %v464, %v462
        %v529 = vunpack.c.l.b16 %v337
        %v530 = vunpack.c.h.b16 %v337
        %v531 = vunpack.c.l.b16 %v338
        %v532 = vunpack.c.h.b16 %v338
        %v533 = vunpack.c.l.b16 %v339
        %v534 = vunpack.c.h.b16 %v339
        %v535 = vunpack.c.l.b16 %v340
        %v536 = vunpack.c.h.b16 %v340
        %v537 = vunpack.c.l.b16 %v341
        %v538 = vunpack.c.h.b16 %v341
        %v539 = vunpack.c.l.b16 %v342
        %v540 = vunpack.c.h.b16 %v342
        %v541 = vunpack.c.l.b16 %v343
        %v542 = vunpack.c.h.b16 %v343
        %v543 = vunpack.c.l.b16 %v344
        %v544 = vunpack.c.h.b16 %v344
        %v545 = vunpack.c.l.b16 %v345
        %v546 = vunpack.c.h.b16 %v345
        %v547 = vunpack.c.l.b16 %v346
        %v548 = vunpack.c.h.b16 %v346
        %v549 = vunpack.c.l.b16 %v347
        %v550 = vunpack.c.h.b16 %v347
        %v551 = vunpack.c.l.b16 %v348
        %v552 = vunpack.c.h.b16 %v348
        %v553 = vunpack.c.l.b16 %v349
        %v554 = vunpack.c.h.b16 %v349
        %v555 = vunpack.c.l.b16 %v350
        %v556 = vunpack.c.h.b16 %v350
        %v557 = vunpack.c.l.b16 %v351
        %v558 = vunpack.c.h.b16 %v351
        %v559 = vunpack.c.l.b16 %v352
        %v560 = vunpack.c.h.b16 %v352
        %v561 = vunpack.c.l.b16 %v353
        %v562 = vunpack.c.h.b16 %v353
        %v563 = vunpack.c.l.b16 %v354
        %v564 = vunpack.c.h.b16 %v354
        %v565 = vunpack.c.l.b16 %v355
        %v566 = vunpack.c.h.b16 %v355
        %v567 = vunpack.c.l.b16 %v356
        %v568 = vunpack.c.h.b16 %v356
        %v569 = vunpack.c.l.b16 %v357
        %v570 = vunpack.c.h.b16 %v357
        %v571 = vunpack.c.l.b16 %v358
        %v572 = vunpack.c.h.b16 %v358
        %v573 = vunpack.c.l.b16 %v359
        %v574 = vunpack.c.h.b16 %v359
        %v575 = vunpack.c.l.b16 %v360
        %v576 = vunpack.c.h.b16 %v360
        %v577 = vunpack.c.l.b16 %v361
        %v578 = vunpack.c.h.b16 %v361
        %v579 = vunpack.c.l.b16 %v362
        %v580 = vunpack.c.h.b16 %v362
        %v581 = vunpack.c.l.b16 %v363
        %v582 = vunpack.c.h.b16 %v363
        %v583 = vunpack.c.l.b16 %v364
        %v584 = vunpack.c.h.b16 %v364
        %v585 = vunpack.c.l.b16 %v365
        %v586 = vunpack.c.h.b16 %v365
        %v587 = vunpack.c.l.b16 %v366
        %v588 = vunpack.c.h.b16 %v366
        %v589 = vunpack.c.l.b16 %v367
        %v590 = vunpack.c.h.b16 %v367
        %v591 = vunpack.c.l.b16 %v368
        %v592 = vunpack.c.h.b16 %v368
        %v593 = vpack.c.b16 %v531, %v529
        %v594 = vpack.c.b16 %v532, %v530
        %v595 = vpack.c.b16 %v535, %v533
        %v596 = vpack.c.b16 %v536, %v534
        %v597 = vpack.c.b16 %v539, %v537
        %v598 = vpack.c.b16 %v540, %v538
        %v599 = vpack.c.b16 %v543, %v541
        %v600 = vpack.c.b16 %v544, %v542
        %v601 = vpack.c.b16 %v547, %v545
        %v602 = vpack.c.b16 %v548, %v546
        %v603 = vpack.c.b16 %v551, %v549
        %v604 = vpack.c.b16 %v552, %v550
        %v605 = vpack.c.b16 %v555, %v553
        %v606 = vpack.c.b16 %v556, %v554
        %v607 = vpack.c.b16 %v559, %v557
        %v608 = vpack.c.b16 %v560, %v558
        %v609 = vpack.c.b16 %v563, %v561
        %v610 = vpack.c.b16 %v564, %v562
        %v611 = vpack.c.b16 %v567, %v565
        %v612 = vpack.c.b16 %v568, %v566
        %v613 = vpack.c.b16 %v571, %v569
        %v614 = vpack.c.b16 %v572, %v570
        %v615 = vpack.c.b16 %v575, %v573
        %v616 = vpack.c.b16 %v576, %v574
        %v617 = vpack.c.b16 %v579, %v577
        %v618 = vpack.c.b16 %v580, %v578
        %v619 = vpack.c.b16 %v583, %v581
        %v620 = vpack.c.b16 %v584, %v582
        %v621 = vpack.c.b16 %v587, %v585
        %v622 = vpack.c.b16 %v588, %v586
        %v623 = vpack.c.b16 %v591, %v589
        %v624 = vpack.c.b16 %v592, %v590
        %657 = vmatprep.subr.bf16.mxu0 %v594
        %658 = vmatpush1.bf16.msra.mxu0 %v593
        %659 = vmatprep.subr.bf16.mxu0 %v596
        %660 = vmatpush1.bf16.msra.mxu0 %v595
        %661 = vmatprep.subr.bf16.mxu0 %v598
        %662 = vmatpush1.bf16.msra.mxu0 %v597
        %663 = vmatprep.subr.bf16.mxu0 %v600
        %664 = vmatpush1.bf16.msra.mxu0 %v599
        %665 = vmatprep.subr.bf16.mxu0 %v602
        %666 = vmatpush1.bf16.msra.mxu0 %v601
        %667 = vmatprep.subr.bf16.mxu0 %v604
        %668 = vmatpush1.bf16.msra.mxu0 %v603
        %669 = vmatprep.subr.bf16.mxu0 %v606
        %670 = vmatpush1.bf16.msra.mxu0 %v605
        %671 = vmatprep.subr.bf16.mxu0 %v608
        %672 = vmatpush1.bf16.msra.mxu0 %v607
        %673 = vmatprep.subr.bf16.mxu0 %v610
        %674 = vmatpush1.bf16.msra.mxu0 %v609
        %675 = vmatprep.subr.bf16.mxu0 %v612
        %676 = vmatpush1.bf16.msra.mxu0 %v611
        %677 = vmatprep.subr.bf16.mxu0 %v614
        %678 = vmatpush1.bf16.msra.mxu0 %v613
        %679 = vmatprep.subr.bf16.mxu0 %v616
        %680 = vmatpush1.bf16.msra.mxu0 %v615
        %681 = vmatprep.subr.bf16.mxu0 %v618
        %682 = vmatpush1.bf16.msra.mxu0 %v617
        %683 = vmatprep.subr.bf16.mxu0 %v620
        %684 = vmatpush1.bf16.msra.mxu0 %v619
        %685 = vmatprep.subr.bf16.mxu0 %v622
        %686 = vmatpush1.bf16.msra.mxu0 %v621
        %687 = vmatprep.subr.bf16.mxu0 %v624
        %688 = vmatpush1.bf16.msra.mxu0 %v623
        %689 = vmatprep.mubr.bf16.mxu0 %v466
        %690 = vmatmul.mubr.bf16.gmra.mrb[0].mxu0 %v465
        %v691 = vpop.f32.mrb[0].mxu0
        %v692 = vadd.f32 0.0, %v691
        %v693 = vpop.f32.mrb[0].mxu0
        %v694 = vadd.f32 0.0, %v693
        %v695 = vpop.f32.mrb[0].mxu0
        %v696 = vadd.f32 0.0, %v695
        %v697 = vpop.f32.mrb[0].mxu0
        %v698 = vadd.f32 0.0, %v697
        %699 = vmatprep.mubr.bf16.mxu0 %v468
        %700 = vmatmul.mubr.bf16.gmra.mrb[0].mxu0 %v467
        %v701 = vpop.f32.mrb[0].mxu0
        %v702 = vadd.f32 0.0, %v701
        %v703 = vpop.f32.mrb[0].mxu0
        %v704 = vadd.f32 0.0, %v703
        %v705 = vpop.f32.mrb[0].mxu0
        %v706 = vadd.f32 0.0, %v705
        %v707 = vpop.f32.mrb[0].mxu0
        %v708 = vadd.f32 0.0, %v707
        %709 = vmatprep.mubr.bf16.mxu0 %v470
        %710 = vmatmul.mubr.bf16.gmra.mrb[0].mxu0 %v469
        %v711 = vpop.f32.mrb[0].mxu0
        %v712 = vadd.f32 0.0, %v711
        %v713 = vpop.f32.mrb[0].mxu0
        %v714 = vadd.f32 0.0, %v713
        %v715 = vpop.f32.mrb[0].mxu0
        %v716 = vadd.f32 0.0, %v715
        %v717 = vpop.f32.mrb[0].mxu0
        %v718 = vadd.f32 0.0, %v717
        %719 = vmatprep.mubr.bf16.mxu0 %v472
        %720 = vmatmul.mubr.bf16.gmra.mrb[0].mxu0 %v471
        %v721 = vpop.f32.mrb[0].mxu0
        %v722 = vadd.f32 0.0, %v721
        %v723 = vpop.f32.mrb[0].mxu0
        %v724 = vadd.f32 0.0, %v723
        %v725 = vpop.f32.mrb[0].mxu0
        %v726 = vadd.f32 0.0, %v725
        %v727 = vpop.f32.mrb[0].mxu0
        %v728 = vadd.f32 0.0, %v727
        %729 = vmatprep.mubr.bf16.mxu0 %v474
        %730 = vmatmul.mubr.bf16.gmra.mrb[0].mxu0 %v473
        %v731 = vpop.f32.mrb[0].mxu0
        %v732 = vadd.f32 0.0, %v731
        %v733 = vpop.f32.mrb[0].mxu0
        %v734 = vadd.f32 0.0, %v733
        %v735 = vpop.f32.mrb[0].mxu0
        %v736 = vadd.f32 0.0, %v735
        %v737 = vpop.f32.mrb[0].mxu0
        %v738 = vadd.f32 0.0, %v737
        %739 = vmatprep.mubr.bf16.mxu0 %v476
        %740 = vmatmul.mubr.bf16.gmra.mrb[0].mxu0 %v475
        %v741 = vpop.f32.mrb[0].mxu0
        %v742 = vadd.f32 0.0, %v741
        %v743 = vpop.f32.mrb[0].mxu0
        %v744 = vadd.f32 0.0, %v743
        %v745 = vpop.f32.mrb[0].mxu0
        %v746 = vadd.f32 0.0, %v745
        %v747 = vpop.f32.mrb[0].mxu0
        %v748 = vadd.f32 0.0, %v747
        %749 = vmatprep.mubr.bf16.mxu0 %v478
        %750 = vmatmul.mubr.bf16.gmra.mrb[0].mxu0 %v477
        %v751 = vpop.f32.mrb[0].mxu0
        %v752 = vadd.f32 0.0, %v751
        %v753 = vpop.f32.mrb[0].mxu0
        %v754 = vadd.f32 0.0, %v753
        %v755 = vpop.f32.mrb[0].mxu0
        %v756 = vadd.f32 0.0, %v755
        %v757 = vpop.f32.mrb[0].mxu0
        %v758 = vadd.f32 0.0, %v757
        %759 = vmatprep.mubr.bf16.mxu0 %v480
        %760 = vmatmul.mubr.bf16.gmra.mrb[0].mxu0 %v479
        %v761 = vpop.f32.mrb[0].mxu0
        %v762 = vadd.f32 0.0, %v761
        %v763 = vpop.f32.mrb[0].mxu0
        %v764 = vadd.f32 0.0, %v763
        %v765 = vpop.f32.mrb[0].mxu0
        %v766 = vadd.f32 0.0, %v765
        %v767 = vpop.f32.mrb[0].mxu0
        %v768 = vadd.f32 0.0, %v767
        %769 = vdwg.mxu0
        %v770 = vadd.f32 %v369, %v692
        %v771 = vadd.f32 %v370, %v694
        %v772 = vadd.f32 %v371, %v696
        %v773 = vadd.f32 %v372, %v698
        %v774 = vadd.f32 %v373, %v702
        %v775 = vadd.f32 %v374, %v704
        %v776 = vadd.f32 %v375, %v706
        %v777 = vadd.f32 %v376, %v708
        %v778 = vadd.f32 %v377, %v712
        %v779 = vadd.f32 %v378, %v714
        %v780 = vadd.f32 %v379, %v716
        %v781 = vadd.f32 %v380, %v718
        %v782 = vadd.f32 %v381, %v722
        %v783 = vadd.f32 %v382, %v724
        %v784 = vadd.f32 %v383, %v726
        %v785 = vadd.f32 %v384, %v728
        %v786 = vadd.f32 %v385, %v732
        %v787 = vadd.f32 %v386, %v734
        %v788 = vadd.f32 %v387, %v736
        %v789 = vadd.f32 %v388, %v738
        %v790 = vadd.f32 %v389, %v742
        %v791 = vadd.f32 %v390, %v744
        %v792 = vadd.f32 %v391, %v746
        %v793 = vadd.f32 %v392, %v748
        %v794 = vadd.f32 %v393, %v752
        %v795 = vadd.f32 %v394, %v754
        %v796 = vadd.f32 %v395, %v756
        %v797 = vadd.f32 %v396, %v758
        %v798 = vadd.f32 %v397, %v762
        %v799 = vadd.f32 %v398, %v764
        %v800 = vadd.f32 %v399, %v766
        %v801 = vadd.f32 %v400, %v768
        %802 = vst [vmem:[#allocation2] sm:$0xff] %v770
        %803 = vst [vmem:[#allocation2 + $0x8] sm:$0xff] %v771
        %804 = vst [vmem:[#allocation2 + $0x10] sm:$0xff] %v772
        %805 = vst [vmem:[#allocation2 + $0x18] sm:$0xff] %v773
        %806 = vst [vmem:[#allocation2 + $0x20] sm:$0xff] %v774
        %807 = vst [vmem:[#allocation2 + $0x28] sm:$0xff] %v775
        %808 = vst [vmem:[#allocation2 + $0x30] sm:$0xff] %v776
        %809 = vst [vmem:[#allocation2 + $0x38] sm:$0xff] %v777
        %810 = vst [vmem:[#allocation2 + $0x40] sm:$0xff] %v778
        %811 = vst [vmem:[#allocation2 + $0x48] sm:$0xff] %v779
        %812 = vst [vmem:[#allocation2 + $0x50] sm:$0xff] %v780
        %813 = vst [vmem:[#allocation2 + $0x58] sm:$0xff] %v781
        %814 = vst [vmem:[#allocation2 + $0x60] sm:$0xff] %v782
        %815 = vst [vmem:[#allocation2 + $0x68] sm:$0xff] %v783
        %816 = vst [vmem:[#allocation2 + $0x70] sm:$0xff] %v784
        %817 = vst [vmem:[#allocation2 + $0x78] sm:$0xff] %v785
        %818 = vst [vmem:[#allocation2 + $0x80] sm:$0xff] %v786
        %819 = vst [vmem:[#allocation2 + $0x88] sm:$0xff] %v787
        %820 = vst [vmem:[#allocation2 + $0x90] sm:$0xff] %v788
        %821 = vst [vmem:[#allocation2 + $0x98] sm:$0xff] %v789
        %822 = vst [vmem:[#allocation2 + $0xa0] sm:$0xff] %v790
        %823 = vst [vmem:[#allocation2 + $0xa8] sm:$0xff] %v791
        %824 = vst [vmem:[#allocation2 + $0xb0] sm:$0xff] %v792
        %825 = vst [vmem:[#allocation2 + $0xb8] sm:$0xff] %v793
        %826 = vst [vmem:[#allocation2 + $0xc0] sm:$0xff] %v794
        %827 = vst [vmem:[#allocation2 + $0xc8] sm:$0xff] %v795
        %828 = vst [vmem:[#allocation2 + $0xd0] sm:$0xff] %v796
        %829 = vst [vmem:[#allocation2 + $0xd8] sm:$0xff] %v797
        %830 = vst [vmem:[#allocation2 + $0xe0] sm:$0xff] %v798
        %831 = vst [vmem:[#allocation2 + $0xe8] sm:$0xff] %v799
        %832 = vst [vmem:[#allocation2 + $0xf0] sm:$0xff] %v800
        %833 = vst [vmem:[#allocation2 + $0xf8] sm:$0xff] %v801
        // Predicated region
        $region49: #{gcn_vae_forward.8} parent=31 // pred_check
          %p834 = pneg %p301
        $region50: #{gcn_vae_forward.8} parent=31 // pred_check_branch
          %836 = sbr.rel (%p834) target = $region52
        $region51: #{gcn_vae_forward.8} parent=31 // pred_region
          %v837 = vld [vmem:[#allocation2] sm:$0xff]
          %v838 = vld [vmem:[#allocation2 + $0x8] sm:$0xff]
          %v839 = vld [vmem:[#allocation2 + $0x10] sm:$0xff]
          %v840 = vld [vmem:[#allocation2 + $0x18] sm:$0xff]
          %v841 = vld [vmem:[#allocation2 + $0x20] sm:$0xff]
          %v842 = vld [vmem:[#allocation2 + $0x28] sm:$0xff]
          %v843 = vld [vmem:[#allocation2 + $0x30] sm:$0xff]
          %v844 = vld [vmem:[#allocation2 + $0x38] sm:$0xff]
          %v845 = vld [vmem:[#allocation2 + $0x40] sm:$0xff]
          %v846 = vld [vmem:[#allocation2 + $0x48] sm:$0xff]
          %v847 = vld [vmem:[#allocation2 + $0x50] sm:$0xff]
          %v848 = vld [vmem:[#allocation2 + $0x58] sm:$0xff]
          %v849 = vld [vmem:[#allocation2 + $0x60] sm:$0xff]
          %v850 = vld [vmem:[#allocation2 + $0x68] sm:$0xff]
          %v851 = vld [vmem:[#allocation2 + $0x70] sm:$0xff]
          %v852 = vld [vmem:[#allocation2 + $0x78] sm:$0xff]
          %v853 = vld [vmem:[#allocation2 + $0x80] sm:$0xff]
          %v854 = vld [vmem:[#allocation2 + $0x88] sm:$0xff]
          %v855 = vld [vmem:[#allocation2 + $0x90] sm:$0xff]
          %v856 = vld [vmem:[#allocation2 + $0x98] sm:$0xff]
          %v857 = vld [vmem:[#allocation2 + $0xa0] sm:$0xff]
          %v858 = vld [vmem:[#allocation2 + $0xa8] sm:$0xff]
          %v859 = vld [vmem:[#allocation2 + $0xb0] sm:$0xff]
          %v860 = vld [vmem:[#allocation2 + $0xb8] sm:$0xff]
          %v861 = vld [vmem:[#allocation2 + $0xc0] sm:$0xff]
          %v862 = vld [vmem:[#allocation2 + $0xc8] sm:$0xff]
          %v863 = vld [vmem:[#allocation2 + $0xd0] sm:$0xff]
          %v864 = vld [vmem:[#allocation2 + $0xd8] sm:$0xff]
          %v865 = vld [vmem:[#allocation2 + $0xe0] sm:$0xff]
          %v866 = vld [vmem:[#allocation2 + $0xe8] sm:$0xff]
          %v867 = vld [vmem:[#allocation2 + $0xf0] sm:$0xff]
          %v868 = vld [vmem:[#allocation2 + $0xf8] sm:$0xff]
          %v869 = vld [vmem:[%s261] sm:$0xff]
          %v870 = vld [vmem:[%s261 + $0x8] sm:$0xff]
          %v871 = vld [vmem:[%s261 + $0x10] sm:$0xff]
          %v872 = vld [vmem:[%s261 + $0x18] sm:$0xff]
          %v873 = vld [vmem:[%s261 + $0x20] sm:$0xff]
          %v874 = vld [vmem:[%s261 + $0x28] sm:$0xff]
          %v875 = vld [vmem:[%s261 + $0x30] sm:$0xff]
          %v876 = vld [vmem:[%s261 + $0x38] sm:$0xff]
          %v877 = vld [vmem:[%s261 + $0x40] sm:$0xff]
          %v878 = vld [vmem:[%s261 + $0x48] sm:$0xff]
          %v879 = vld [vmem:[%s261 + $0x50] sm:$0xff]
          %v880 = vld [vmem:[%s261 + $0x58] sm:$0xff]
          %v881 = vld [vmem:[%s261 + $0x60] sm:$0xff]
          %v882 = vld [vmem:[%s261 + $0x68] sm:$0xff]
          %v883 = vld [vmem:[%s261 + $0x70] sm:$0xff]
          %v884 = vld [vmem:[%s261 + $0x78] sm:$0xff]
          %v885 = vmul.f32 %v838, 1.442695
          %v886 = vpow.pop %v885
          %v887 = vmul.f32 %v840, 1.442695
          %v888 = vpow.pop %v887
          %v889 = vmul.f32 %v842, 1.442695
          %v890 = vpow.pop %v889
          %v891 = vmul.f32 %v844, 1.442695
          %v892 = vpow.pop %v891
          %v893 = vmul.f32 %v846, 1.442695
          %v894 = vpow.pop %v893
          %v895 = vmul.f32 %v848, 1.442695
          %v896 = vpow.pop %v895
          %v897 = vmul.f32 %v850, 1.442695
          %v898 = vpow.pop %v897
          %v899 = vmul.f32 %v852, 1.442695
          %v900 = vpow.pop %v899
          %v901 = vmul.f32 %v854, 1.442695
          %v902 = vpow.pop %v901
          %v903 = vmul.f32 %v856, 1.442695
          %v904 = vpow.pop %v903
          %v905 = vmul.f32 %v858, 1.442695
          %v906 = vpow.pop %v905
          %v907 = vmul.f32 %v860, 1.442695
          %v908 = vpow.pop %v907
          %v909 = vmul.f32 %v862, 1.442695
          %v910 = vpow.pop %v909
          %v911 = vmul.f32 %v864, 1.442695
          %v912 = vpow.pop %v911
          %v913 = vmul.f32 %v866, 1.442695
          %v914 = vpow.pop %v913
          %v915 = vmul.f32 %v868, 1.442695
          %v916 = vpow.pop %v915
          %v917 = vmul.f32 %v869, %v886
          %v918 = vmul.f32 %v870, %v888
          %v919 = vmul.f32 %v871, %v890
          %v920 = vmul.f32 %v872, %v892
          %v921 = vmul.f32 %v873, %v894
          %v922 = vmul.f32 %v874, %v896
          %v923 = vmul.f32 %v875, %v898
          %v924 = vmul.f32 %v876, %v900
          %v925 = vmul.f32 %v877, %v902
          %v926 = vmul.f32 %v878, %v904
          %v927 = vmul.f32 %v879, %v906
          %v928 = vmul.f32 %v880, %v908
          %v929 = vmul.f32 %v881, %v910
          %v930 = vmul.f32 %v882, %v912
          %v931 = vmul.f32 %v883, %v914
          %v932 = vmul.f32 %v884, %v916
          %v933 = vadd.f32 %v917, %v837
          %v934 = vadd.f32 %v918, %v839
          %v935 = vadd.f32 %v919, %v841
          %v936 = vadd.f32 %v920, %v843
          %v937 = vadd.f32 %v921, %v845
          %v938 = vadd.f32 %v922, %v847
          %v939 = vadd.f32 %v923, %v849
          %v940 = vadd.f32 %v924, %v851
          %v941 = vadd.f32 %v925, %v853
          %v942 = vadd.f32 %v926, %v855
          %v943 = vadd.f32 %v927, %v857
          %v944 = vadd.f32 %v928, %v859
          %v945 = vadd.f32 %v929, %v861
          %v946 = vadd.f32 %v930, %v863
          %v947 = vadd.f32 %v931, %v865
          %v948 = vadd.f32 %v932, %v867
          %949 = vst [vmem:[%s288] sm:$0xff] %v933
          %950 = vst [vmem:[%s288 + $0x8] sm:$0xff] %v934
          %951 = vst [vmem:[%s288 + $0x10] sm:$0xff] %v935
          %952 = vst [vmem:[%s288 + $0x18] sm:$0xff] %v936
          %953 = vst [vmem:[%s288 + $0x20] sm:$0xff] %v937
          %954 = vst [vmem:[%s288 + $0x28] sm:$0xff] %v938
          %955 = vst [vmem:[%s288 + $0x30] sm:$0xff] %v939
          %956 = vst [vmem:[%s288 + $0x38] sm:$0xff] %v940
          %957 = vst [vmem:[%s288 + $0x40] sm:$0xff] %v941
          %958 = vst [vmem:[%s288 + $0x48] sm:$0xff] %v942
          %959 = vst [vmem:[%s288 + $0x50] sm:$0xff] %v943
          %960 = vst [vmem:[%s288 + $0x58] sm:$0xff] %v944
          %961 = vst [vmem:[%s288 + $0x60] sm:$0xff] %v945
          %962 = vst [vmem:[%s288 + $0x68] sm:$0xff] %v946
          %963 = vst [vmem:[%s288 + $0x70] sm:$0xff] %v947
          %964 = vst [vmem:[%s288 + $0x78] sm:$0xff] %v948
          %v965 = vpack.c.bf16 %v934, %v933
          %v966 = vpack.c.bf16 %v936, %v935
          %v967 = vpack.c.bf16 %v938, %v937
          %v968 = vpack.c.bf16 %v940, %v939
          %v969 = vpack.c.bf16 %v942, %v941
          %v970 = vpack.c.bf16 %v944, %v943
          %v971 = vpack.c.bf16 %v946, %v945
          %v972 = vpack.c.bf16 %v948, %v947
          %v981 = vunpack.c.l.b16 %v965
          %v982 = vunpack.c.h.b16 %v965
          %v983 = vunpack.c.l.b16 %v966
          %v984 = vunpack.c.h.b16 %v966
          %v985 = vunpack.c.l.b16 %v967
          %v986 = vunpack.c.h.b16 %v967
          %v987 = vunpack.c.l.b16 %v968
          %v988 = vunpack.c.h.b16 %v968
          %v989 = vunpack.c.l.b16 %v969
          %v990 = vunpack.c.h.b16 %v969
          %v991 = vunpack.c.l.b16 %v970
          %v992 = vunpack.c.h.b16 %v970
          %v993 = vunpack.c.l.b16 %v971
          %v994 = vunpack.c.h.b16 %v971
          %v995 = vunpack.c.l.b16 %v972
          %v996 = vunpack.c.h.b16 %v972
          %v997 = vpack.c.b16 %v981, %v981
          %v998 = vpack.c.b16 %v982, %v982
          %v999 = vpack.c.b16 %v983, %v983
          %v1000 = vpack.c.b16 %v984, %v984
          %v1001 = vpack.c.b16 %v985, %v985
          %v1002 = vpack.c.b16 %v986, %v986
          %v1003 = vpack.c.b16 %v987, %v987
          %v1004 = vpack.c.b16 %v988, %v988
          %v1005 = vpack.c.b16 %v989, %v989
          %v1006 = vpack.c.b16 %v990, %v990
          %v1007 = vpack.c.b16 %v991, %v991
          %v1008 = vpack.c.b16 %v992, %v992
          %v1009 = vpack.c.b16 %v993, %v993
          %v1010 = vpack.c.b16 %v994, %v994
          %v1011 = vpack.c.b16 %v995, %v995
          %v1012 = vpack.c.b16 %v996, %v996
          %1029 = vst [vmem:[%s295] sm:$0xf] %v997
          %1030 = vst [vmem:[%s295 + $0x4] sm:$0xf] %v998
          %1031 = vst [vmem:[%s295 + $0x8] sm:$0xf] %v999
          %1032 = vst [vmem:[%s295 + $0xc] sm:$0xf] %v1000
          %1033 = vst [vmem:[%s295 + $0x10] sm:$0xf] %v1001
          %1034 = vst [vmem:[%s295 + $0x14] sm:$0xf] %v1002
          %1035 = vst [vmem:[%s295 + $0x18] sm:$0xf] %v1003
          %1036 = vst [vmem:[%s295 + $0x1c] sm:$0xf] %v1004
          %1037 = vst [vmem:[%s295 + $0x20] sm:$0xf] %v1005
          %1038 = vst [vmem:[%s295 + $0x24] sm:$0xf] %v1006
          %1039 = vst [vmem:[%s295 + $0x28] sm:$0xf] %v1007
          %1040 = vst [vmem:[%s295 + $0x2c] sm:$0xf] %v1008
          %1041 = vst [vmem:[%s295 + $0x30] sm:$0xf] %v1009
          %1042 = vst [vmem:[%s295 + $0x34] sm:$0xf] %v1010
          %1043 = vst [vmem:[%s295 + $0x38] sm:$0xf] %v1011
          %1044 = vst [vmem:[%s295 + $0x3c] sm:$0xf] %v1012
        $region52: #{gcn_vae_forward.8} parent=31 // pred_fallthru
          _
        %s1045 = sand.u32 %s121, 1
        %s1046 = scalar_lea.sflag [#allocation5], %s1045
        %s1047 = sand.u32 %s121, 1
        %s1048 = smul.addr %s1047, 128
        %s1049 = scalar_lea.vmem [#allocation9], %s1048
        %s1050 = sand.u32 %s147, 1
        %s1051 = scalar_lea.sflag [#allocation11], %s1050
        %s1052 = sand.u32 %s147, 1
        %s1053 = smul.addr %s1052, 64
        %s1054 = scalar_lea.vmem [#allocation10], %s1053
        // Predicated region
        $region53: #{gcn_vae_forward.8} parent=31 // pred_check
          %p1055 = pneg %p131
        $region54: #{gcn_vae_forward.8} parent=31 // pred_check_branch
          %1057 = sbr.rel (%p1055) target = $region56
        $region55: #{gcn_vae_forward.8} parent=31 // pred_region
          %s1058 = smul.u32 16, %s30
          %s1060 = ssub.s32 2048, 2048
          %1061 = vsyncadd %s1046, %s1060
          %s1062 = smul.addr %s1058, 128
          %s1063 = scalar_lea.hbm %s3, %s1062
          %s1064 = sshll.u32 %s1049, 4
          %s1065 = int_to_ptr.vmem [resolvable:$true] %s1064
          %1070 = dma.vmem_to_hbm [thread:$0]  %s1065, 2048, %s1063, %s1046, 128, 128, 8
        $region56: #{gcn_vae_forward.8} parent=31 // pred_fallthru
          _
        // Predicated region
        $region57: #{gcn_vae_forward.8} parent=31 // pred_check
          %p1071 = pneg %p157
        $region58: #{gcn_vae_forward.8} parent=31 // pred_check_branch
          %1073 = sbr.rel (%p1071) target = $region60
        $region59: #{gcn_vae_forward.8} parent=31 // pred_region
          %s1074 = smul.u32 16, %s30
          %s1076 = ssub.s32 1024, 1024
          %1077 = vsyncadd %s1051, %s1076
          %s1078 = smul.addr %s1074, 64
          %s1079 = scalar_lea.hbm %s4, %s1078
          %s1080 = sshll.u32 %s1054, 4
          %s1081 = int_to_ptr.vmem [resolvable:$true] %s1080
          %1086 = dma.vmem_to_hbm [thread:$0]  %s1081, 1024, %s1079, %s1051, 64, 64, 4
        $region60: #{gcn_vae_forward.8} parent=31 // pred_fallthru
          _
      $region32: #{gcn_vae_forward.8} parent=5 // pred_fallthru
        _
      %p1087 = scmp.le.s32.totalorder 2, %s21
      // Predicated region
      $region61: #{gcn_vae_forward.8} parent=5 // pred_check
        %p1088 = pneg %p1087
      $region62: #{gcn_vae_forward.8} parent=5 // pred_check_branch
        %1090 = sbr.rel (%p1088) target = $region64
      $region63: #{gcn_vae_forward.8} parent=5 // pred_region
        %s1091 = ssub.s32 %s21, 2
        // Predicated region
        $region65: #{gcn_vae_forward.8} parent=63 // pred_check
          %p1092 = pneg %p137
        $region66: #{gcn_vae_forward.8} parent=63 // pred_check_branch
          %1094 = sbr.rel (%p1092) target = $region68
        $region67: #{gcn_vae_forward.8} parent=63 // pred_region
          %s1095 = sand.u32 %s122, 1
          %s1096 = scalar_lea.sflag [#allocation5], %s1095
          %s1097 = sand.u32 %s122, 1
          %s1098 = smul.addr %s1097, 128
          %s1099 = scalar_lea.vmem [#allocation9], %s1098
          %1100 = dma.done %s1096, 2048
        $region68: #{gcn_vae_forward.8} parent=63 // pred_fallthru
          _
        // Predicated region
        $region69: #{gcn_vae_forward.8} parent=63 // pred_check
          %p1101 = pneg %p163
        $region70: #{gcn_vae_forward.8} parent=63 // pred_check_branch
          %1103 = sbr.rel (%p1101) target = $region72
        $region71: #{gcn_vae_forward.8} parent=63 // pred_region
          %s1104 = sand.u32 %s148, 1
          %s1105 = scalar_lea.sflag [#allocation11], %s1104
          %s1106 = sand.u32 %s148, 1
          %s1107 = smul.addr %s1106, 64
          %s1108 = scalar_lea.vmem [#allocation10], %s1107
          %1109 = dma.done %s1105, 1024
        $region72: #{gcn_vae_forward.8} parent=63 // pred_fallthru
          _
      $region64: #{gcn_vae_forward.8} parent=5 // pred_fallthru
        _
    $region6: #{gcn_vae_forward.8} parent=1 // loop_footer
      %s25 = sadd.s32 1, %s21
    $region7: #{gcn_vae_forward.8} parent=1 // loop_footer_branch
      %20 = sbr.rel target = $region3
    $region8: #{gcn_vae_forward.8} parent=1 // loop_exit
      _
    %1110 = vsyncpa [#allocation4], 1
    %s1111 = scalar_lea.sflag [#allocation4], 1
    %1112 = vsyncpa %s1111, 1
    %1113 = vsyncpa [#allocation7], 1
    %1114 = vsyncpa [#allocation5], 1
    %s1115 = scalar_lea.sflag [#allocation5], 1
    %1116 = vsyncpa %s1115, 1
    %1117 = vsyncpa [#allocation11], 1
    %s1118 = scalar_lea.sflag [#allocation11], 1
    %1119 = vsyncpa %s1118, 1

// kernel: gcn_vae_forward.9
$region0: #{gcn_vae_forward.9}
  #allocation0 [shape = 'u32[]', space=smem, size = 0x4, offset = 0x4, fixed_abs, tag = 'smem constant byte address 0x4 - core index']
  #allocation1 [shape = 'u32[144,128]{1,0:T(1,128)}', space=vmem, size = 0x12000, scoped, tag = 'internal scratch']
  %s0 = inlined_call_operand.hbm [shape: bf16[256,128], index: 0, kind: input, shape index: {}, may-alias: {0,1}]
  %s1 = inlined_call_operand.hbm [shape: bf16[256,128], index: 1, kind: input, shape index: {}, may-alias: {0,1}]
  %s2 = inlined_call_operand.hbm [shape: bf16[256,256], index: 2, kind: output, shape index: {}]
  %s3 = sld [smem:[#allocation0]]
  $region49: #{gcn_vae_forward.9} parent=0
    _
  %s5 = ssub.s32 1, %s3
  %s6 = scalar_select 0, %s5, %s3
  $region1: #{gcn_vae_forward.9} parent=0
    #allocation2 [shape = 'u8[65536]{0}', space=vmem, size = 0x10000, scoped, tag = 'input window, operand 0']
    #allocation3 [shape = 's32[2]{0}', space=sflag, size = 0x8, scoped, tag = 'scoped memory for gcn_vae_forward.9']
    #allocation4 [shape = 's32[2]{0}', space=sflag, size = 0x8, scoped, tag = 'scoped memory for gcn_vae_forward.9']
    #allocation5 [shape = 'u8[65536]{0}', space=vmem, size = 0x10000, scoped, tag = 'input window, operand 1']
    #allocation6 [shape = 's32[2]{0}', space=sflag, size = 0x8, scoped, tag = 'scoped memory for gcn_vae_forward.9']
    #allocation7 [shape = 'u8[65536]{0}', space=vmem, size = 0x10000, scoped, tag = 'output window, operand 0']
    %7 = vsyncpa [#allocation3], 0
    %s8 = scalar_lea.sflag [#allocation3], 1
    %9 = vsyncpa %s8, 0
    %10 = vsyncpa [#allocation6], 0
    %s11 = scalar_lea.sflag [#allocation6], 1
    %12 = vsyncpa %s11, 0
    %13 = vsyncpa [#allocation4], 0
    %s14 = scalar_lea.sflag [#allocation4], 1
    %15 = vsyncpa %s14, 0
    loop: start=0, step=1, limit=6
    $region2: #{gcn_vae_forward.9} parent=1 // loop_pre_header
      _
    $region3: #{gcn_vae_forward.9} parent=1 // loop_header
      %s17 = sphi 0, %s21
      %p18 = scmp.ge.s32.totalorder %s17, 6
      %s24 = sphi 0, %s36
      %s25 = sphi 0, %s32
      %s26 = sphi 0, %s24
      %s27 = sphi 0, %s25
      %s28 = sphi 0, %s26
      %s29 = sphi 0, %s27
      %s39 = sphi 0, %s41
      %s42 = sphi 0, %s39
      %s43 = sphi 0, %s42
      %s59 = sphi 0, %s43
      %s65 = sphi 0, %s67
      %s68 = sphi 0, %s65
      %s69 = sphi 0, %s68
      %s85 = sphi 0, %s69
      %s93 = sphi 0, %s95
      %s96 = sphi 0, %s93
      %s97 = sphi 0, %s96
      %s113 = sphi 0, %s97
    $region4: #{gcn_vae_forward.9} parent=1 // loop_header_branch
      %20 = sbr.rel (%p18) target = $region8
    $region5: #{gcn_vae_forward.9} parent=1 // loop_body
      %s22 = ssub.s32 %s17, 1
      %s23 = ssub.s32 %s17, 2
      %s30 = sadd.s32 1, %s25
      %p31 = scmp.ge.s32.totalorder %s30, 2
      %s32 = scalar_select %p31, 0, %s30
      %s33 = sadd.s32 1, %s24
      %s34 = scalar_select %p31, %s33, %s24
      %p35 = scmp.ge.s32.totalorder %s34, 2
      %s36 = scalar_select %p35, 0, %s34
      %s37 = ssub.s32 %s24, %s36
      %p38 = scmp.eq.s32.totalorder %s37, 0
      %s40 = sadd.s32 %s39, 1
      %s41 = scalar_select %p38, %s39, %s40
      %p44 = pneg %p38
      %p45 = scmp.eq.s32.totalorder %s17, 3
      %p46 = por %p44, %p45
      %p47 = scmp.ne.s32.totalorder %s39, %s42
      %p48 = scmp.eq.s32.totalorder %s17, 0
      %p49 = por %p47, %p48
      %p50 = scmp.ne.s32.totalorder %s39, %s42
      %p51 = scmp.eq.s32.totalorder %s22, 3
      %p52 = por %p50, %p51
      %p53 = scmp.ne.s32.totalorder %s42, %s43
      %p54 = scmp.eq.s32.totalorder %s22, 0
      %p55 = por %p53, %p54
      %p56 = scmp.ne.s32.totalorder %s42, %s43
      %p57 = scmp.eq.s32.totalorder %s23, 3
      %p58 = por %p56, %p57
      %p60 = scmp.ne.s32.totalorder %s43, %s59
      %p61 = scmp.eq.s32.totalorder %s23, 0
      %p62 = por %p60, %p61
      %s63 = ssub.s32 %s25, %s32
      %p64 = scmp.eq.s32.totalorder %s63, 0
      %s66 = sadd.s32 %s65, 1
      %s67 = scalar_select %p64, %s65, %s66
      %p70 = pneg %p64
      %p71 = scmp.eq.s32.totalorder %s17, 3
      %p72 = por %p70, %p71
      %p73 = scmp.ne.s32.totalorder %s65, %s68
      %p74 = scmp.eq.s32.totalorder %s17, 0
      %p75 = por %p73, %p74
      %p76 = scmp.ne.s32.totalorder %s65, %s68
      %p77 = scmp.eq.s32.totalorder %s22, 3
      %p78 = por %p76, %p77
      %p79 = scmp.ne.s32.totalorder %s68, %s69
      %p80 = scmp.eq.s32.totalorder %s22, 0
      %p81 = por %p79, %p80
      %p82 = scmp.ne.s32.totalorder %s68, %s69
      %p83 = scmp.eq.s32.totalorder %s23, 3
      %p84 = por %p82, %p83
      %p86 = scmp.ne.s32.totalorder %s69, %s85
      %p87 = scmp.eq.s32.totalorder %s23, 0
      %p88 = por %p86, %p87
      %s89 = ssub.s32 %s24, %s36
      %s90 = ssub.s32 %s25, %s32
      %s91 = sor.u32 %s89, %s90
      %p92 = scmp.eq.s32.totalorder %s91, 0
      %s94 = sadd.s32 %s93, 1
      %s95 = scalar_select %p92, %s93, %s94
      %p98 = pneg %p92
      %p99 = scmp.eq.s32.totalorder %s17, 3
      %p100 = por %p98, %p99
      %p101 = scmp.ne.s32.totalorder %s93, %s96
      %p102 = scmp.eq.s32.totalorder %s17, 0
      %p103 = por %p101, %p102
      %p104 = scmp.ne.s32.totalorder %s93, %s96
      %p105 = scmp.eq.s32.totalorder %s22, 3
      %p106 = por %p104, %p105
      %p107 = scmp.ne.s32.totalorder %s96, %s97
      %p108 = scmp.eq.s32.totalorder %s22, 0
      %p109 = por %p107, %p108
      %p110 = scmp.ne.s32.totalorder %s96, %s97
      %p111 = scmp.eq.s32.totalorder %s23, 3
      %p112 = por %p110, %p111
      %p114 = scmp.ne.s32.totalorder %s97, %s113
      %p115 = scmp.eq.s32.totalorder %s23, 0
      %p116 = por %p114, %p115
      %p117 = scmp.le.s32.totalorder 1, %s17
      %p118 = scmp.lt.s32.totalorder %s17, 5
      %p119 = pnand %p117, %p118
      %p120 = pneg %p119
      // Predicated region
      $region9: #{gcn_vae_forward.9} parent=5 // pred_check
        _
      $region10: #{gcn_vae_forward.9} parent=5 // pred_check_branch
        %122 = sbr.rel (%p119) target = $region12
      $region11: #{gcn_vae_forward.9} parent=5 // pred_region
        %s123 = ssub.s32 %s17, 1
      $region12: #{gcn_vae_forward.9} parent=5 // pred_fallthru
        _
      %p124 = scmp.lt.s32.totalorder %s17, 4
      // Predicated region
      $region13: #{gcn_vae_forward.9} parent=5 // pred_check
        %p125 = pneg %p124
      $region14: #{gcn_vae_forward.9} parent=5 // pred_check_branch
        %127 = sbr.rel (%p125) target = $region16
      $region15: #{gcn_vae_forward.9} parent=5 // pred_region
        // Predicated region
        $region17: #{gcn_vae_forward.9} parent=15 // pred_check
          %p128 = pneg %p49
        $region18: #{gcn_vae_forward.9} parent=15 // pred_check_branch
          %130 = sbr.rel (%p128) target = $region20
        $region19: #{gcn_vae_forward.9} parent=15 // pred_region
          %s131 = sand.u32 %s39, 1
          %s132 = scalar_lea.sflag [#allocation3], %s131
          %s133 = sand.u32 %s39, 1
          %s134 = smul.addr %s133, 64
          %s135 = scalar_lea.vmem [#allocation2], %s134
          %s136 = smul.u32 16, %s24
          %s138 = ssub.s32 1024, 1024
          %139 = vsyncadd %s132, %s138
          %s140 = smul.addr %s136, 64
          %s141 = scalar_lea.hbm %s0, %s140
          %s142 = sshll.u32 %s135, 4
          %s143 = int_to_ptr.vmem [resolvable:$true] %s142
          %148 = dma.hbm_to_vmem [thread:$0]  %s141, 1024, %s143, %s132, 64, 64, 4
        $region20: #{gcn_vae_forward.9} parent=15 // pred_fallthru
          _
        // Predicated region
        $region21: #{gcn_vae_forward.9} parent=15 // pred_check
          %p149 = pneg %p75
        $region22: #{gcn_vae_forward.9} parent=15 // pred_check_branch
          %151 = sbr.rel (%p149) target = $region24
        $region23: #{gcn_vae_forward.9} parent=15 // pred_region
          %s152 = sand.u32 %s65, 1
          %s153 = scalar_lea.sflag [#allocation6], %s152
          %s154 = sand.u32 %s65, 1
          %s155 = smul.addr %s154, 64
          %s156 = scalar_lea.vmem [#allocation5], %s155
          %s157 = smul.u32 16, %s25
          %s159 = ssub.s32 1024, 1024
          %160 = vsyncadd %s153, %s159
          %s161 = smul.addr %s157, 64
          %s162 = scalar_lea.hbm %s1, %s161
          %s163 = sshll.u32 %s156, 4
          %s164 = int_to_ptr.vmem [resolvable:$true] %s163
          %169 = dma.hbm_to_vmem [thread:$0]  %s162, 1024, %s164, %s153, 64, 64, 4
        $region24: #{gcn_vae_forward.9} parent=15 // pred_fallthru
          _
      $region16: #{gcn_vae_forward.9} parent=5 // pred_fallthru
        _
      %p170 = scmp.le.s32.totalorder 1, %s17
      %p171 = scmp.lt.s32.totalorder %s17, 5
      %p172 = pnand %p170, %p171
      %p173 = pneg %p172
      // Predicated region
      $region25: #{gcn_vae_forward.9} parent=5 // pred_check
        _
      $region26: #{gcn_vae_forward.9} parent=5 // pred_check_branch
        %175 = sbr.rel (%p172) target = $region28
      $region27: #{gcn_vae_forward.9} parent=5 // pred_region
        %s176 = ssub.s32 %s17, 1
        %s177 = sand.u32 %s42, 1
        %s178 = scalar_lea.sflag [#allocation3], %s177
        %s179 = sand.u32 %s42, 1
        %s180 = smul.addr %s179, 64
        %s181 = scalar_lea.vmem [#allocation2], %s180
        // Predicated region
        $region29: #{gcn_vae_forward.9} parent=27 // pred_check
          %p182 = pneg %p55
        $region30: #{gcn_vae_forward.9} parent=27 // pred_check_branch
          %184 = sbr.rel (%p182) target = $region32
        $region31: #{gcn_vae_forward.9} parent=27 // pred_region
          %185 = dma.done %s178, 1024
        $region32: #{gcn_vae_forward.9} parent=27 // pred_fallthru
          _
        %s186 = sand.u32 %s68, 1
        %s187 = scalar_lea.sflag [#allocation6], %s186
        %s188 = sand.u32 %s68, 1
        %s189 = smul.addr %s188, 64
        %s190 = scalar_lea.vmem [#allocation5], %s189
        // Predicated region
        $region33: #{gcn_vae_forward.9} parent=27 // pred_check
          %p191 = pneg %p81
        $region34: #{gcn_vae_forward.9} parent=27 // pred_check_branch
          %193 = sbr.rel (%p191) target = $region36
        $region35: #{gcn_vae_forward.9} parent=27 // pred_region
          %194 = dma.done %s187, 1024
        $region36: #{gcn_vae_forward.9} parent=27 // pred_fallthru
          _
        %s195 = sand.u32 %s42, 1
        %s196 = scalar_lea.sflag [#allocation3], %s195
        %s197 = sand.u32 %s42, 1
        %s198 = smul.addr %s197, 64
        %s199 = scalar_lea.vmem [#allocation2], %s198
        %p200 = pneg %p55
        %p201 = pneg %p52
        %s202 = sand.u32 %s68, 1
        %s203 = scalar_lea.sflag [#allocation6], %s202
        %s204 = sand.u32 %s68, 1
        %s205 = smul.addr %s204, 64
        %s206 = scalar_lea.vmem [#allocation5], %s205
        %p207 = pneg %p81
        %p208 = pneg %p78
        %p209 = pneg %p109
        %p210 = pneg %p106
        %s211 = sand.u32 %s96, 1
        %s212 = scalar_lea.sflag [#allocation4], %s211
        %s213 = sand.u32 %s96, 1
        %s214 = smul.addr %s213, 64
        %s215 = scalar_lea.vmem [#allocation7], %s214
        %s216 = smul.u32 16, %s26
        %s217 = smul.u32 16, %s27
        %s218 = smul.u32 16, %s26
        %v220 = vld [vmem:[%s181] sm:$0xf]
        %v221 = vld [vmem:[%s181 + $0x4] sm:$0xf]
        %v222 = vld [vmem:[%s181 + $0x8] sm:$0xf]
        %v223 = vld [vmem:[%s181 + $0xc] sm:$0xf]
        %v224 = vld [vmem:[%s181 + $0x10] sm:$0xf]
        %v225 = vld [vmem:[%s181 + $0x14] sm:$0xf]
        %v226 = vld [vmem:[%s181 + $0x18] sm:$0xf]
        %v227 = vld [vmem:[%s181 + $0x1c] sm:$0xf]
        %v228 = vld [vmem:[%s181 + $0x20] sm:$0xf]
        %v229 = vld [vmem:[%s181 + $0x24] sm:$0xf]
        %v230 = vld [vmem:[%s181 + $0x28] sm:$0xf]
        %v231 = vld [vmem:[%s181 + $0x2c] sm:$0xf]
        %v232 = vld [vmem:[%s181 + $0x30] sm:$0xf]
        %v233 = vld [vmem:[%s181 + $0x34] sm:$0xf]
        %v234 = vld [vmem:[%s181 + $0x38] sm:$0xf]
        %v235 = vld [vmem:[%s181 + $0x3c] sm:$0xf]
        %v236 = vld [vmem:[%s190] sm:$0xf]
        %v237 = vld [vmem:[%s190 + $0x4] sm:$0xf]
        %v238 = vld [vmem:[%s190 + $0x8] sm:$0xf]
        %v239 = vld [vmem:[%s190 + $0xc] sm:$0xf]
        %v240 = vld [vmem:[%s190 + $0x10] sm:$0xf]
        %v241 = vld [vmem:[%s190 + $0x14] sm:$0xf]
        %v242 = vld [vmem:[%s190 + $0x18] sm:$0xf]
        %v243 = vld [vmem:[%s190 + $0x1c] sm:$0xf]
        %v244 = vld [vmem:[%s190 + $0x20] sm:$0xf]
        %v245 = vld [vmem:[%s190 + $0x24] sm:$0xf]
        %v246 = vld [vmem:[%s190 + $0x28] sm:$0xf]
        %v247 = vld [vmem:[%s190 + $0x2c] sm:$0xf]
        %v248 = vld [vmem:[%s190 + $0x30] sm:$0xf]
        %v249 = vld [vmem:[%s190 + $0x34] sm:$0xf]
        %v250 = vld [vmem:[%s190 + $0x38] sm:$0xf]
        %v251 = vld [vmem:[%s190 + $0x3c] sm:$0xf]
        %v268 = vunpack.c.l.b16 %v220
        %v269 = vunpack.c.l.b16 %v221
        %v270 = vunpack.c.l.b16 %v222
        %v271 = vunpack.c.l.b16 %v223
        %v272 = vunpack.c.l.b16 %v224
        %v273 = vunpack.c.l.b16 %v225
        %v274 = vunpack.c.l.b16 %v226
        %v275 = vunpack.c.l.b16 %v227
        %v276 = vunpack.c.l.b16 %v228
        %v277 = vunpack.c.l.b16 %v229
        %v278 = vunpack.c.l.b16 %v230
        %v279 = vunpack.c.l.b16 %v231
        %v280 = vunpack.c.l.b16 %v232
        %v281 = vunpack.c.l.b16 %v233
        %v282 = vunpack.c.l.b16 %v234
        %v283 = vunpack.c.l.b16 %v235
        %v284 = vpack.c.b16 %v269, %v268
        %v285 = vpack.c.b16 %v271, %v270
        %v286 = vpack.c.b16 %v273, %v272
        %v287 = vpack.c.b16 %v275, %v274
        %v288 = vpack.c.b16 %v277, %v276
        %v289 = vpack.c.b16 %v279, %v278
        %v290 = vpack.c.b16 %v281, %v280
        %v291 = vpack.c.b16 %v283, %v282
        %v316 = vunpack.c.l.b16 %v236
        %v317 = vunpack.c.l.b16 %v237
        %v318 = vunpack.c.l.b16 %v238
        %v319 = vunpack.c.l.b16 %v239
        %v320 = vunpack.c.l.b16 %v240
        %v321 = vunpack.c.l.b16 %v241
        %v322 = vunpack.c.l.b16 %v242
        %v323 = vunpack.c.l.b16 %v243
        %v324 = vunpack.c.l.b16 %v244
        %v325 = vunpack.c.l.b16 %v245
        %v326 = vunpack.c.l.b16 %v246
        %v327 = vunpack.c.l.b16 %v247
        %v328 = vunpack.c.l.b16 %v248
        %v329 = vunpack.c.l.b16 %v249
        %v330 = vunpack.c.l.b16 %v250
        %v331 = vunpack.c.l.b16 %v251
        %v332 = vpack.c.b16 %v317, %v316
        %v333 = vpack.c.b16 %v319, %v318
        %v334 = vpack.c.b16 %v321, %v320
        %v335 = vpack.c.b16 %v323, %v322
        %v336 = vpack.c.b16 %v325, %v324
        %v337 = vpack.c.b16 %v327, %v326
        %v338 = vpack.c.b16 %v329, %v328
        %v339 = vpack.c.b16 %v331, %v330
        %348 = vmatprep.subr.bf16.mxu0 0
        %349 = vmatpush1.bf16.xpose.msra.mxu0 %v332
        %350 = vmatprep.subr.bf16.mxu0 0
        %351 = vmatpush1.bf16.xpose.msra.mxu0 %v333
        %352 = vmatprep.subr.bf16.mxu0 0
        %353 = vmatpush1.bf16.xpose.msra.mxu0 %v334
        %354 = vmatprep.subr.bf16.mxu0 0
        %355 = vmatpush1.bf16.xpose.msra.mxu0 %v335
        %356 = vmatprep.subr.bf16.mxu0 0
        %357 = vmatpush1.bf16.xpose.msra.mxu0 %v336
        %358 = vmatprep.subr.bf16.mxu0 0
        %359 = vmatpush1.bf16.xpose.msra.mxu0 %v337
        %360 = vmatprep.subr.bf16.mxu0 0
        %361 = vmatpush1.bf16.xpose.msra.mxu0 %v338
        %362 = vmatprep.subr.bf16.mxu0 0
        %363 = vmatpush1.bf16.xpose.msra.mxu0 %v339
        %364 = vmatprep.subr.bf16.mxu0 0
        %365 = vmatpush1.bf16.xpose.msra.mxu0 0
        %366 = vmatprep.subr.bf16.mxu0 0
        %367 = vmatpush1.bf16.xpose.msra.mxu0 0
        %368 = vmatprep.subr.bf16.mxu0 0
        %369 = vmatpush1.bf16.xpose.msra.mxu0 0
        %370 = vmatprep.subr.bf16.mxu0 0
        %371 = vmatpush1.bf16.xpose.msra.mxu0 0
        %372 = vmatprep.subr.bf16.mxu0 0
        %373 = vmatpush1.bf16.xpose.msra.mxu0 0
        %374 = vmatprep.subr.bf16.mxu0 0
        %375 = vmatpush1.bf16.xpose.msra.mxu0 0
        %376 = vmatprep.subr.bf16.mxu0 0
        %377 = vmatpush1.bf16.xpose.msra.mxu0 0
        %378 = vmatprep.subr.bf16.mxu0 0
        %379 = vmatpush1.bf16.xpose.msra.mxu0 0
        %380 = vmatprep.mubr.bf16.mxu0 0
        %381 = vmatmul.mubr.bf16.gmra.mrb[0].mxu0 %v284
        %v382 = vpop.f32.mrb[0].mxu0
        %v383 = vadd.f32 0.0, %v382
        %v384 = vpop.f32.mrb[0].mxu0
        %v385 = vpop.f32.mrb[0].mxu0
        %v386 = vadd.f32 0.0, %v385
        %v387 = vpop.f32.mrb[0].mxu0
        %388 = vmatprep.mubr.bf16.mxu0 0
        %389 = vmatmul.mubr.bf16.gmra.mrb[0].mxu0 %v285
        %v390 = vpop.f32.mrb[0].mxu0
        %v391 = vadd.f32 0.0, %v390
        %v392 = vpop.f32.mrb[0].mxu0
        %v393 = vpop.f32.mrb[0].mxu0
        %v394 = vadd.f32 0.0, %v393
        %v395 = vpop.f32.mrb[0].mxu0
        %396 = vmatprep.mubr.bf16.mxu0 0
        %397 = vmatmul.mubr.bf16.gmra.mrb[0].mxu0 %v286
        %v398 = vpop.f32.mrb[0].mxu0
        %v399 = vadd.f32 0.0, %v398
        %v400 = vpop.f32.mrb[0].mxu0
        %v401 = vpop.f32.mrb[0].mxu0
        %v402 = vadd.f32 0.0, %v401
        %v403 = vpop.f32.mrb[0].mxu0
        %404 = vmatprep.mubr.bf16.mxu0 0
        %405 = vmatmul.mubr.bf16.gmra.mrb[0].mxu0 %v287
        %v406 = vpop.f32.mrb[0].mxu0
        %v407 = vadd.f32 0.0, %v406
        %v408 = vpop.f32.mrb[0].mxu0
        %v409 = vpop.f32.mrb[0].mxu0
        %v410 = vadd.f32 0.0, %v409
        %v411 = vpop.f32.mrb[0].mxu0
        %412 = vmatprep.mubr.bf16.mxu0 0
        %413 = vmatmul.mubr.bf16.gmra.mrb[0].mxu0 %v288
        %v414 = vpop.f32.mrb[0].mxu0
        %v415 = vadd.f32 0.0, %v414
        %v416 = vpop.f32.mrb[0].mxu0
        %v417 = vpop.f32.mrb[0].mxu0
        %v418 = vadd.f32 0.0, %v417
        %v419 = vpop.f32.mrb[0].mxu0
        %420 = vmatprep.mubr.bf16.mxu0 0
        %421 = vmatmul.mubr.bf16.gmra.mrb[0].mxu0 %v289
        %v422 = vpop.f32.mrb[0].mxu0
        %v423 = vadd.f32 0.0, %v422
        %v424 = vpop.f32.mrb[0].mxu0
        %v425 = vpop.f32.mrb[0].mxu0
        %v426 = vadd.f32 0.0, %v425
        %v427 = vpop.f32.mrb[0].mxu0
        %428 = vmatprep.mubr.bf16.mxu0 0
        %429 = vmatmul.mubr.bf16.gmra.mrb[0].mxu0 %v290
        %v430 = vpop.f32.mrb[0].mxu0
        %v431 = vadd.f32 0.0, %v430
        %v432 = vpop.f32.mrb[0].mxu0
        %v433 = vpop.f32.mrb[0].mxu0
        %v434 = vadd.f32 0.0, %v433
        %v435 = vpop.f32.mrb[0].mxu0
        %436 = vmatprep.mubr.bf16.mxu0 0
        %437 = vmatmul.mubr.bf16.gmra.mrb[0].mxu0 %v291
        %v438 = vpop.f32.mrb[0].mxu0
        %v439 = vadd.f32 0.0, %v438
        %v440 = vpop.f32.mrb[0].mxu0
        %v441 = vpop.f32.mrb[0].mxu0
        %v442 = vadd.f32 0.0, %v441
        %v443 = vpop.f32.mrb[0].mxu0
        %444 = vdwg.mxu0
        %v445 = vpack.c.bf16 %v386, %v383
        %v446 = vpack.c.bf16 %v394, %v391
        %v447 = vpack.c.bf16 %v402, %v399
        %v448 = vpack.c.bf16 %v410, %v407
        %v449 = vpack.c.bf16 %v418, %v415
        %v450 = vpack.c.bf16 %v426, %v423
        %v451 = vpack.c.bf16 %v434, %v431
        %v452 = vpack.c.bf16 %v442, %v439
        %v461 = vunpack.c.l.b16 %v445
        %v462 = vunpack.c.h.b16 %v445
        %v463 = vunpack.c.l.b16 %v446
        %v464 = vunpack.c.h.b16 %v446
        %v465 = vunpack.c.l.b16 %v447
        %v466 = vunpack.c.h.b16 %v447
        %v467 = vunpack.c.l.b16 %v448
        %v468 = vunpack.c.h.b16 %v448
        %v469 = vunpack.c.l.b16 %v449
        %v470 = vunpack.c.h.b16 %v449
        %v471 = vunpack.c.l.b16 %v450
        %v472 = vunpack.c.h.b16 %v450
        %v473 = vunpack.c.l.b16 %v451
        %v474 = vunpack.c.h.b16 %v451
        %v475 = vunpack.c.l.b16 %v452
        %v476 = vunpack.c.h.b16 %v452
        %v477 = vpack.c.b16 %v461, %v461
        %v478 = vpack.c.b16 %v462, %v462
        %v479 = vpack.c.b16 %v463, %v463
        %v480 = vpack.c.b16 %v464, %v464
        %v481 = vpack.c.b16 %v465, %v465
        %v482 = vpack.c.b16 %v466, %v466
        %v483 = vpack.c.b16 %v467, %v467
        %v484 = vpack.c.b16 %v468, %v468
        %v485 = vpack.c.b16 %v469, %v469
        %v486 = vpack.c.b16 %v470, %v470
        %v487 = vpack.c.b16 %v471, %v471
        %v488 = vpack.c.b16 %v472, %v472
        %v489 = vpack.c.b16 %v473, %v473
        %v490 = vpack.c.b16 %v474, %v474
        %v491 = vpack.c.b16 %v475, %v475
        %v492 = vpack.c.b16 %v476, %v476
        %509 = vst [vmem:[%s215] sm:$0xf] %v477
        %510 = vst [vmem:[%s215 + $0x4] sm:$0xf] %v478
        %511 = vst [vmem:[%s215 + $0x8] sm:$0xf] %v479
        %512 = vst [vmem:[%s215 + $0xc] sm:$0xf] %v480
        %513 = vst [vmem:[%s215 + $0x10] sm:$0xf] %v481
        %514 = vst [vmem:[%s215 + $0x14] sm:$0xf] %v482
        %515 = vst [vmem:[%s215 + $0x18] sm:$0xf] %v483
        %516 = vst [vmem:[%s215 + $0x1c] sm:$0xf] %v484
        %517 = vst [vmem:[%s215 + $0x20] sm:$0xf] %v485
        %518 = vst [vmem:[%s215 + $0x24] sm:$0xf] %v486
        %519 = vst [vmem:[%s215 + $0x28] sm:$0xf] %v487
        %520 = vst [vmem:[%s215 + $0x2c] sm:$0xf] %v488
        %521 = vst [vmem:[%s215 + $0x30] sm:$0xf] %v489
        %522 = vst [vmem:[%s215 + $0x34] sm:$0xf] %v490
        %523 = vst [vmem:[%s215 + $0x38] sm:$0xf] %v491
        %524 = vst [vmem:[%s215 + $0x3c] sm:$0xf] %v492
        %s525 = sand.u32 %s96, 1
        %s526 = scalar_lea.sflag [#allocation4], %s525
        %s527 = sand.u32 %s96, 1
        %s528 = smul.addr %s527, 64
        %s529 = scalar_lea.vmem [#allocation7], %s528
        // Predicated region
        $region37: #{gcn_vae_forward.9} parent=27 // pred_check
          %p530 = pneg %p106
        $region38: #{gcn_vae_forward.9} parent=27 // pred_check_branch
          %532 = sbr.rel (%p530) target = $region40
        $region39: #{gcn_vae_forward.9} parent=27 // pred_region
          %s533 = smul.u32 16, %s26
          %s535 = ssub.s32 1024, 1024
          %536 = vsyncadd %s526, %s535
          %s537 = smul.addr %s533, 2
          %s538 = sadd.s32 %s27, %s537
          %s539 = smul.addr %s538, 64
          %s540 = scalar_lea.hbm %s2, %s539
          %s541 = sshll.u32 %s529, 4
          %s542 = int_to_ptr.vmem [resolvable:$true] %s541
          %547 = dma.vmem_to_hbm [thread:$0]  %s542, 1024, %s540, %s526, 64, 128, 4
        $region40: #{gcn_vae_forward.9} parent=27 // pred_fallthru
          _
      $region28: #{gcn_vae_forward.9} parent=5 // pred_fallthru
        _
      %p548 = scmp.le.s32.totalorder 2, %s17
      // Predicated region
      $region41: #{gcn_vae_forward.9} parent=5 // pred_check
        %p549 = pneg %p548
      $region42: #{gcn_vae_forward.9} parent=5 // pred_check_branch
        %551 = sbr.rel (%p549) target = $region44
      $region43: #{gcn_vae_forward.9} parent=5 // pred_region
        %s552 = ssub.s32 %s17, 2
        // Predicated region
        $region45: #{gcn_vae_forward.9} parent=43 // pred_check
          %p553 = pneg %p112
        $region46: #{gcn_vae_forward.9} parent=43 // pred_check_branch
          %555 = sbr.rel (%p553) target = $region48
        $region47: #{gcn_vae_forward.9} parent=43 // pred_region
          %s556 = sand.u32 %s97, 1
          %s557 = scalar_lea.sflag [#allocation4], %s556
          %s558 = sand.u32 %s97, 1
          %s559 = smul.addr %s558, 64
          %s560 = scalar_lea.vmem [#allocation7], %s559
          %561 = dma.done %s557, 1024
        $region48: #{gcn_vae_forward.9} parent=43 // pred_fallthru
          _
      $region44: #{gcn_vae_forward.9} parent=5 // pred_fallthru
        _
    $region6: #{gcn_vae_forward.9} parent=1 // loop_footer
      %s21 = sadd.s32 1, %s17
    $region7: #{gcn_vae_forward.9} parent=1 // loop_footer_branch
      %16 = sbr.rel target = $region3
    $region8: #{gcn_vae_forward.9} parent=1 // loop_exit
      _
    %562 = vsyncpa [#allocation3], 1
    %s563 = scalar_lea.sflag [#allocation3], 1
    %564 = vsyncpa %s563, 1
    %565 = vsyncpa [#allocation6], 1
    %s566 = scalar_lea.sflag [#allocation6], 1
    %567 = vsyncpa %s566, 1
    %568 = vsyncpa [#allocation4], 1
    %s569 = scalar_lea.sflag [#allocation4], 1
    %570 = vsyncpa %s569, 1

</llo_original>
